<compile_context>
chip_gen: v7x
topology: tpu7x:2x2x1
jax: 0.10.0
libtpu: 0.0.40
codegen_flags: <defaults>
</compile_context>

<pallas_src>
import functools
import math

import jax
import jax.numpy as jnp
from jax.experimental import pallas as pl
from jax.experimental.pallas import tpu as pltpu

EPS = 1e-5                       # nn.LayerNorm default eps
_INV_SQRT2 = 0.7071067811865476  # exact (erf) GELU, matches nn.GELU() default
_FF_CHUNK = 512                  # lane chunk for the FFN hidden dimension


# ----------------------------------------------------------------------------
# Per-generation tuning: VMEM limit and row-tile target
# ----------------------------------------------------------------------------
def _detect_vmem_bytes():
    try:
        return int(pltpu.get_tpu_info().vmem_capacity_bytes)
    except Exception:
        return 64 * 1024 * 1024          # conservative default (v7x-sized)


_PHYS_VMEM = _detect_vmem_bytes()
if _PHYS_VMEM >= 100 * 1024 * 1024:      # v5e / v6e: 128 MiB VMEM
    _VMEM_LIMIT = 96 * 1024 * 1024
    _ROW_TILE = 512
else:                                    # v7x: 64 MiB VMEM
    _VMEM_LIMIT = 48 * 1024 * 1024
    _ROW_TILE = 256


def _round_up(x, m):
    return ((x + m - 1) // m) * m


def _pick_row_tile(m):
    """Whole array if small (full-dim block is always legal), else tiled."""
    return m if m <= _ROW_TILE else _ROW_TILE


def _resident_spec(a):
    """Block-index-constant (weight-resident) spec for a 1-D grid.

    Requests single buffering so constant-index weights are not duplicated by
    the default double-buffering (v7x VMEM saving); falls back silently if the
    pipeline_mode API is unavailable.
    """
    zeros = (0,) * a.ndim
    idx = lambda i, _z=zeros: _z
    try:
        return pl.BlockSpec(a.shape, idx,
                            pipeline_mode=pl.Buffered(buffer_count=1))
    except (TypeError, AttributeError):
        return pl.BlockSpec(a.shape, idx)


def _cparams(sem):
    return pltpu.CompilerParams(dimension_semantics=sem,
                                vmem_limit_bytes=_VMEM_LIMIT)


# ----------------------------------------------------------------------------
# Kernel 1: tiled linear  y = x @ w + b   (patch embed, fused QKV projection)
# ----------------------------------------------------------------------------
def linear_kernel(x_ref, w_ref, b_ref, o_ref):
    o_ref[...] = (jnp.dot(x_ref[...].astype(jnp.bfloat16), w_ref[...],
                          preferred_element_type=jnp.float32)
                  + b_ref[...]).astype(o_ref.dtype)


def linear(x, w_bf16, b_f32, *, out_dtype=jnp.float32):
    M, K = x.shape
    N = w_bf16.shape[1]
    tm = _pick_row_tile(M)
    return pl.pallas_call(
        linear_kernel,
        out_shape=jax.ShapeDtypeStruct((M, N), out_dtype),
        grid=(pl.cdiv(M, tm),),
        in_specs=[pl.BlockSpec((tm, K), lambda i: (i, 0)),
                  _resident_spec(w_bf16),
                  _resident_spec(b_f32)],
        out_specs=pl.BlockSpec((tm, N), lambda i: (i, 0)),
        compiler_params=_cparams(("parallel",)),
    )(x, w_bf16, b_f32)


# ----------------------------------------------------------------------------
# Kernel 2: multi-head self-attention core
#   grid=(B,); reads the fused (S, 3E) QKV block directly (no wrapper-side
#   split-heads transposes), loops heads in-kernel, writes (S, E) lane-dense.
# ----------------------------------------------------------------------------
def attention_kernel(qkv_ref, o_ref, *, num_heads, head_dim, scale):
    E = num_heads * head_dim
    for h in range(num_heads):                     # small, unrolled
        lo = h * head_dim
        q = qkv_ref[:, lo:lo + head_dim]                       # (S, hd) bf16
        k = qkv_ref[:, E + lo:E + lo + head_dim]
        v = qkv_ref[:, 2 * E + lo:2 * E + lo + head_dim]
        # contract head_dim of q and k directly (no k.T materialization)
        s = jax.lax.dot_general(q, k, (((1,), (1,)), ((), ())),
                                preferred_element_type=jnp.float32) * scale
        s = s - jnp.max(s, axis=-1, keepdims=True)
        p = jnp.exp(s)
        denom = jnp.sum(p, axis=-1, keepdims=True)
        o = jnp.dot(p.astype(jnp.bfloat16), v,
                    preferred_element_type=jnp.float32)
        o_ref[:, lo:lo + head_dim] = (
            o * pl.reciprocal(denom, approx=True)).astype(o_ref.dtype)


def multi_head_attention(qkv, num_heads):
    """qkv: (B, S, 3E) bf16 -> attention output (B, S, E) bf16 (pre out-proj)."""
    B, S, E3 = qkv.shape
    E = E3 // 3
    hd = E // num_heads
    scale = 1.0 / math.sqrt(hd)
    kern = functools.partial(attention_kernel, num_heads=num_heads,
                             head_dim=hd, scale=scale)
    return pl.pallas_call(
        kern,
        out_shape=jax.ShapeDtypeStruct((B, S, E), jnp.bfloat16),
        grid=(B,),
        in_specs=[pl.BlockSpec((None, S, E3), lambda b: (b, 0, 0))],
        out_specs=pl.BlockSpec((None, S, E), lambda b: (b, 0, 0)),
        compiler_params=_cparams(("parallel",)),
    )(qkv)


# ----------------------------------------------------------------------------
# Kernel 3: block tail -- out-proj + residual + LN1 + FFN(GELU) + residual + LN2
# (per-token, tiled over rows with weights resident; FFN hidden dim chunked)
# ----------------------------------------------------------------------------
def block_tail_kernel(x_ref, a_ref, wo_ref, bo_ref, ln1w_ref, ln1b_ref,
                      w1_ref, b1_ref, w2_ref, b2_ref, ln2w_ref, ln2b_ref,
                      o_ref, *, ff_chunk):
    x = x_ref[...]                                        # (tm, E) f32 residual
    attn = (jnp.dot(a_ref[...], wo_ref[...],
                    preferred_element_type=jnp.float32) + bo_ref[...])

    y = x + attn                                          # residual + LayerNorm1
    mu = jnp.mean(y, axis=-1, keepdims=True)
    var = jnp.mean(jnp.square(y - mu), axis=-1, keepdims=True)
    y = (y - mu) * jax.lax.rsqrt(var + EPS) * ln1w_ref[...] + ln1b_ref[...]
    y_bf = y.astype(jnp.bfloat16)

    # FFN, hidden dim processed in lane chunks so intermediates stay small.
    ff_hid = w1_ref.shape[1]
    ff = jnp.zeros_like(y)
    for c0 in range(0, ff_hid, ff_chunk):
        c1 = min(c0 + ff_chunk, ff_hid)
        h1 = (jnp.dot(y_bf, w1_ref[:, c0:c1],
                      preferred_element_type=jnp.float32) + b1_ref[:, c0:c1])
        # exact GELU (erf) to match nn.GELU(); tanh approx would free VALU slot
        g = 0.5 * h1 * (1.0 + jax.lax.erf(h1 * _INV_SQRT2))
        ff = ff + jnp.dot(g.astype(jnp.bfloat16), w2_ref[c0:c1, :],
                          preferred_element_type=jnp.float32)
    ff = ff + b2_ref[...]

    z = y + ff                                            # residual + LayerNorm2
    mu2 = jnp.mean(z, axis=-1, keepdims=True)
    var2 = jnp.mean(jnp.square(z - mu2), axis=-1, keepdims=True)
    z = (z - mu2) * jax.lax.rsqrt(var2 + EPS) * ln2w_ref[...] + ln2b_ref[...]
    o_ref[...] = z.astype(o_ref.dtype)


def block_tail(x2, a2, weights):
    M, E = x2.shape
    tm = _pick_row_tile(M)
    ff_hid = weights[4].shape[1]                          # ff1_w is (E, ff_hid)
    ff_chunk = ff_hid if ff_hid <= _FF_CHUNK else _FF_CHUNK
    row = pl.BlockSpec((tm, E), lambda i: (i, 0))
    kern = functools.partial(block_tail_kernel, ff_chunk=ff_chunk)
    return pl.pallas_call(
        kern,
        out_shape=jax.ShapeDtypeStruct((M, E), jnp.float32),
        grid=(pl.cdiv(M, tm),),
        in_specs=[row, row] + [_resident_spec(w) for w in weights],
        out_specs=row,
        compiler_params=_cparams(("parallel",)),
    )(x2, a2, *weights)


def transformer_block_forward(h, p, num_heads):
    B, S, E = h.shape
    M = B * S
    x2 = h.reshape(M, E)                                  # f32 residual stream

    # fused QKV projection, emitted directly in bf16 (consumer is bf16 anyway)
    qkv = linear(x2, p['qkv_w'], p['qkv_b'], out_dtype=jnp.bfloat16)  # (M, 3E)
    attn = multi_head_attention(qkv.reshape(B, S, 3 * E), num_heads)  # bf16

    weights = (p['out_w'], p['out_b'], p['ln1_w'], p['ln1_b'],
               p['ff1_w'], p['ff1_b'], p['ff2_w'], p['ff2_b'],
               p['ln2_w'], p['ln2_b'])
    out2 = block_tail(x2, attn.reshape(M, E), weights)
    return out2.reshape(B, S, E)


# ----------------------------------------------------------------------------
# Kernel 4: final LayerNorm (cls token) + classification Linear (lane-padded)
# ----------------------------------------------------------------------------
def head_kernel(x_ref, nw_ref, nb_ref, fcw_ref, fcb_ref, o_ref):
    x = x_ref[...]                                        # (B, E) f32
    mu = jnp.mean(x, axis=-1, keepdims=True)
    var = jnp.mean(jnp.square(x - mu), axis=-1, keepdims=True)
    xn = (x - mu) * jax.lax.rsqrt(var + EPS) * nw_ref[...] + nb_ref[...]
    o_ref[...] = (jnp.dot(xn.astype(jnp.bfloat16), fcw_ref[...],
                          preferred_element_type=jnp.float32)
                  + fcb_ref[...]).astype(o_ref.dtype)


def head_forward(h, p, num_classes):
    cls = h[:, 0, :]                                      # LayerNorm is per-token
    B, E = cls.shape
    nc_pad = p['fc_w'].shape[1]
    out = pl.pallas_call(
        head_kernel,
        out_shape=jax.ShapeDtypeStruct((B, nc_pad), jnp.float32),
        grid=(1,),
        in_specs=[pl.BlockSpec((B, E), lambda i: (0, 0)),
                  _resident_spec(p['norm_w']), _resident_spec(p['norm_b']),
                  _resident_spec(p['fc_w']), _resident_spec(p['fc_b'])],
        out_specs=pl.BlockSpec((B, nc_pad), lambda i: (0, 0)),
        compiler_params=_cparams(("arbitrary",)),
    )(cls, p['norm_w'], p['norm_b'], p['fc_w'], p['fc_b'])
    return out[:, :num_classes]


# ----------------------------------------------------------------------------
# Patch embedding: Conv2d(kernel=stride=patch) == patch-flatten + tiled linear
# ----------------------------------------------------------------------------
def patch_embed_forward(x, p, patch_size):
    B, C, H, W = x.shape
    ps = patch_size
    Hp, Wp = H // ps, W // ps
    patches = (x.reshape(B, C, Hp, ps, Wp, ps)
                 .transpose(0, 2, 4, 1, 3, 5)
                 .reshape(B * Hp * Wp, C * ps * ps))      # (M, C*p*p)
    out = linear(patches, p['conv_w'], p['conv_b'])       # f32 (residual stream)
    return out.reshape(B, Hp * Wp, -1)


# ----------------------------------------------------------------------------
# One-time parameter preparation (hoisted out of the jitted forward)
# ----------------------------------------------------------------------------
def prepare_params(params, cfg):
    E = cfg['embed_dim']
    C, ps = cfg['in_channels'], cfg['patch_size']
    nc = cfg['num_classes']
    nc_pad = _round_up(nc, 128)                           # lane-dense classifier
    prep = dict(
        conv_w=params['conv_w'].reshape(E, C * ps * ps).T.astype(jnp.bfloat16),
        conv_b=params['conv_b'].reshape(1, E).astype(jnp.float32),
        cls_token=params['cls_token'],
        pos_embed=params['pos_embed'],
        norm_w=params['norm_w'].reshape(1, E),
        norm_b=params['norm_b'].reshape(1, E),
        fc_w=jnp.zeros((E, nc_pad), jnp.bfloat16).at[:, :nc].set(
            params['fc_w'].T.astype(jnp.bfloat16)),
        fc_b=jnp.zeros((1, nc_pad), jnp.float32).at[:, :nc].set(
            params['fc_b'].reshape(1, nc)),
        blocks=[],
    )
    for bp in params['blocks']:
        prep['blocks'].append(dict(
            qkv_w=bp['in_proj_w'].T.astype(jnp.bfloat16),          # (E, 3E)
            qkv_b=bp['in_proj_b'].reshape(1, -1).astype(jnp.float32),
            out_w=bp['out_proj_w'].T.astype(jnp.bfloat16),         # (E, E)
            out_b=bp['out_proj_b'].reshape(1, -1),
            ln1_w=bp['ln1_w'].reshape(1, -1), ln1_b=bp['ln1_b'].reshape(1, -1),
            ff1_w=bp['ff1_w'].T.astype(jnp.bfloat16),              # (E, Hf)
            ff1_b=bp['ff1_b'].reshape(1, -1),
            ff2_w=bp['ff2_w'].T.astype(jnp.bfloat16),              # (Hf, E)
            ff2_b=bp['ff2_b'].reshape(1, -1),
            ln2_w=bp['ln2_w'].reshape(1, -1), ln2_b=bp['ln2_b'].reshape(1, -1),
        ))
    return prep


# ----------------------------------------------------------------------------
# Full model (expects prepared params)
# ----------------------------------------------------------------------------
def vision_transformer_forward(x, prep, cfg):
    patches = patch_embed_forward(x, prep, cfg['patch_size'])
    B = x.shape[0]
    E = cfg['embed_dim']
    cls_tokens = jnp.broadcast_to(prep['cls_token'], (B, 1, E))
    h = jnp.concatenate([cls_tokens, patches], axis=1) + prep['pos_embed']
    for bp in prep['blocks']:
        h = transformer_block_forward(h, bp, cfg['num_heads'])
    return head_forward(h, prep, cfg['num_classes'])


# ----------------------------------------------------------------------------
# Deterministic parameter init (shapes follow the PyTorch module __init__)
# ----------------------------------------------------------------------------
def init_block_params(key, E, H):
    ks = jax.random.split(key, 4)
    std = 0.02
    return dict(
        in_proj_w=jax.random.normal(ks[0], (3 * E, E), jnp.float32) * std,
        in_proj_b=jnp.zeros((3 * E,), jnp.float32),
        out_proj_w=jax.random.normal(ks[1], (E, E), jnp.float32) * std,
        out_proj_b=jnp.zeros((E,), jnp.float32),
        ln1_w=jnp.ones((E,), jnp.float32),
        ln1_b=jnp.zeros((E,), jnp.float32),
        ff1_w=jax.random.normal(ks[2], (H, E), jnp.float32) * std,
        ff1_b=jnp.zeros((H,), jnp.float32),
        ff2_w=jax.random.normal(ks[3], (E, H), jnp.float32) * std,
        ff2_b=jnp.zeros((E,), jnp.float32),
        ln2_w=jnp.ones((E,), jnp.float32),
        ln2_b=jnp.zeros((E,), jnp.float32),
    )


def init_params(key, cfg):
    E, C, p = cfg['embed_dim'], cfg['in_channels'], cfg['patch_size']
    N = (cfg['img_size'] // p) ** 2
    keys = jax.random.split(key, 5 + cfg['num_blocks'])
    return dict(
        conv_w=jax.random.normal(keys[0], (E, C, p, p), jnp.float32) * 0.02,
        conv_b=jnp.zeros((E,), jnp.float32),
        cls_token=jax.random.normal(keys[1], (1, 1, E), jnp.float32) * 0.02,
        pos_embed=jax.random.normal(keys[2], (1, N + 1, E), jnp.float32) * 0.02,
        norm_w=jnp.ones((E,), jnp.float32),
        norm_b=jnp.zeros((E,), jnp.float32),
        fc_w=jax.random.normal(keys[3], (cfg['num_classes'], E), jnp.float32) * 0.02,
        fc_b=jnp.zeros((cfg['num_classes'],), jnp.float32),
        blocks=[init_block_params(keys[5 + i], E, cfg['ff_hid_dim'])
                for i in range(cfg['num_blocks'])],
    )


if __name__ == "__main__":
    # Small, lane-dense demo config consistent with the module (embed_dim=256
    # like the default; 2 heads so head_dim = 128; img shrunk so seq = 17).
    cfg = dict(num_classes=2, embed_dim=256, num_heads=2, num_blocks=2,
               ff_hid_dim=512, patch_size=16, img_size=64, in_channels=1)

    key = jax.random.PRNGKey(0)
    pkey, xkey = jax.random.split(key)
    params = init_params(pkey, cfg)
    prep = prepare_params(params, cfg)            # one-time weight prep (no jit)

    # NCHW input, like PyTorch Conv2d expects.
    x = jax.random.normal(
        xkey, (2, cfg['in_channels'], cfg['img_size'], cfg['img_size']),
        jnp.float32)

    fwd = jax.jit(lambda xx, pp: vision_transformer_forward(xx, pp, cfg))
    out = fwd(x, prep)
    jax.block_until_ready(out)
    assert out.shape == (2, cfg['num_classes'])
    assert bool(jnp.all(jnp.isfinite(out)))
    print("KERNEL_OK")
</pallas_src>

<mosaic_0001>
module attributes {stable_mosaic.version = 11 : i64} {
  func.func @linear_kernel(%arg0: i32, %arg1: memref<32x256xf32, #tpu.memory_space<vmem>>, %arg2: memref<256x256xbf16, #tpu.memory_space<vmem>>, %arg3: memref<1x256xf32, #tpu.memory_space<vmem>>, %arg4: memref<32x256xf32, #tpu.memory_space<vmem>>) attributes {dimension_semantics = [#tpu.dimension_semantics<parallel>], iteration_bounds = array<i64: 1>, scalar_prefetch = 0 : i64, scratch_operands = 0 : i64, tpu.core_type = #tpu.core_type<tc>, window_params = [{transform_indices = @transform_0, window_bounds = array<i64: 32, 256>}, {pipeline_mode = #tpu.pipeline_mode<synchronous>, transform_indices = @transform_1, window_bounds = array<i64: 256, 256>}, {pipeline_mode = #tpu.pipeline_mode<synchronous>, transform_indices = @transform_2, window_bounds = array<i64: 1, 256>}, {transform_indices = @transform_3, window_bounds = array<i64: 32, 256>}]} {
    %c0 = arith.constant 0 : index
    %c0_0 = arith.constant 0 : index
    %0 = vector.load %arg1[%c0, %c0_0] : memref<32x256xf32, #tpu.memory_space<vmem>>, vector<32x256xf32>
    %1 = arith.truncf %0 : vector<32x256xf32> to vector<32x256xbf16>
    %c0_1 = arith.constant 0 : index
    %c0_2 = arith.constant 0 : index
    %2 = vector.load %arg2[%c0_1, %c0_2] : memref<256x256xbf16, #tpu.memory_space<vmem>>, vector<256x256xbf16>
    %cst = arith.constant dense<0.000000e+00> : vector<32x256xf32>
    %3 = tpu.matmul %1, %2, %cst {dimension_numbers = #tpu.dot_dimension_numbers<[1], [0], [0], [1], [0, 0, 1, 1], [], []>} : vector<32x256xbf16>, vector<256x256xbf16>, vector<32x256xf32> -> vector<32x256xf32>
    %c0_3 = arith.constant 0 : index
    %c0_4 = arith.constant 0 : index
    %4 = vector.load %arg3[%c0_3, %c0_4] : memref<1x256xf32, #tpu.memory_space<vmem>>, vector<1x256xf32>
    %5 = vector.broadcast %4 : vector<1x256xf32> to vector<32x256xf32>
    %6 = arith.addf %3, %5 : vector<32x256xf32>
    %c0_5 = arith.constant 0 : index
    %c0_6 = arith.constant 0 : index
    %7 = vector.load %arg4[%c0_5, %c0_6] : memref<32x256xf32, #tpu.memory_space<vmem>>, vector<32x256xf32>
    tpu.vector_store %arg4[%c0_5, %c0_6], %6 {strides = array<i32>} : memref<32x256xf32, #tpu.memory_space<vmem>>, vector<32x256xf32>,
    return
  }
  func.func @transform_0(%arg0: i32) -> (i32, i32) {
    %c0_i32 = arith.constant 0 : i32
    %c0_i32_0 = arith.constant 0 : i32
    return %arg0, %c0_i32 : i32, i32
  }
  func.func @transform_1(%arg0: i32) -> (i32, i32) {
    %c0_i32 = arith.constant 0 : i32
    %c0_i32_0 = arith.constant 0 : i32
    %c0_i32_1 = arith.constant 0 : i32
    return %c0_i32, %c0_i32_0 : i32, i32
  }
  func.func @transform_2(%arg0: i32) -> (i32, i32) {
    %c0_i32 = arith.constant 0 : i32
    %c0_i32_0 = arith.constant 0 : i32
    %c0_i32_1 = arith.constant 0 : i32
    return %c0_i32, %c0_i32_0 : i32, i32
  }
  func.func @transform_3(%arg0: i32) -> (i32, i32) {
    %c0_i32 = arith.constant 0 : i32
    %c0_i32_0 = arith.constant 0 : i32
    return %arg0, %c0_i32 : i32, i32
  }
}

module attributes {stable_mosaic.version = 11 : i64} {
  func.func @linear_kernel(%arg0: i32, %arg1: memref<34x256xf32, #tpu.memory_space<vmem>>, %arg2: memref<256x768xbf16, #tpu.memory_space<vmem>>, %arg3: memref<1x768xf32, #tpu.memory_space<vmem>>, %arg4: memref<34x768xbf16, #tpu.memory_space<vmem>>) attributes {dimension_semantics = [#tpu.dimension_semantics<parallel>], iteration_bounds = array<i64: 1>, scalar_prefetch = 0 : i64, scratch_operands = 0 : i64, tpu.core_type = #tpu.core_type<tc>, window_params = [{transform_indices = @transform_0, window_bounds = array<i64: 34, 256>}, {pipeline_mode = #tpu.pipeline_mode<synchronous>, transform_indices = @transform_1, window_bounds = array<i64: 256, 768>}, {pipeline_mode = #tpu.pipeline_mode<synchronous>, transform_indices = @transform_2, window_bounds = array<i64: 1, 768>}, {transform_indices = @transform_3, window_bounds = array<i64: 34, 768>}]} {
    %c0 = arith.constant 0 : index
    %c0_0 = arith.constant 0 : index
    %0 = vector.load %arg1[%c0, %c0_0] : memref<34x256xf32, #tpu.memory_space<vmem>>, vector<34x256xf32>
    %1 = arith.truncf %0 : vector<34x256xf32> to vector<34x256xbf16>
    %c0_1 = arith.constant 0 : index
    %c0_2 = arith.constant 0 : index
    %2 = vector.load %arg2[%c0_1, %c0_2] : memref<256x768xbf16, #tpu.memory_space<vmem>>, vector<256x768xbf16>
    %cst = arith.constant dense<0.000000e+00> : vector<34x768xf32>
    %3 = tpu.matmul %1, %2, %cst {dimension_numbers = #tpu.dot_dimension_numbers<[1], [0], [0], [1], [0, 0, 1, 1], [], []>} : vector<34x256xbf16>, vector<256x768xbf16>, vector<34x768xf32> -> vector<34x768xf32>
    %c0_3 = arith.constant 0 : index
    %c0_4 = arith.constant 0 : index
    %4 = vector.load %arg3[%c0_3, %c0_4] : memref<1x768xf32, #tpu.memory_space<vmem>>, vector<1x768xf32>
    %5 = vector.broadcast %4 : vector<1x768xf32> to vector<34x768xf32>
    %6 = arith.addf %3, %5 : vector<34x768xf32>
    %7 = arith.truncf %6 : vector<34x768xf32> to vector<34x768xbf16>
    %c0_5 = arith.constant 0 : index
    %c0_6 = arith.constant 0 : index
    %8 = vector.load %arg4[%c0_5, %c0_6] : memref<34x768xbf16, #tpu.memory_space<vmem>>, vector<34x768xbf16>
    tpu.vector_store %arg4[%c0_5, %c0_6], %7 {strides = array<i32>} : memref<34x768xbf16, #tpu.memory_space<vmem>>, vector<34x768xbf16>,
    return
  }
  func.func @transform_0(%arg0: i32) -> (i32, i32) {
    %c0_i32 = arith.constant 0 : i32
    %c0_i32_0 = arith.constant 0 : i32
    return %arg0, %c0_i32 : i32, i32
  }
  func.func @transform_1(%arg0: i32) -> (i32, i32) {
    %c0_i32 = arith.constant 0 : i32
    %c0_i32_0 = arith.constant 0 : i32
    %c0_i32_1 = arith.constant 0 : i32
    return %c0_i32, %c0_i32_0 : i32, i32
  }
  func.func @transform_2(%arg0: i32) -> (i32, i32) {
    %c0_i32 = arith.constant 0 : i32
    %c0_i32_0 = arith.constant 0 : i32
    %c0_i32_1 = arith.constant 0 : i32
    return %c0_i32, %c0_i32_0 : i32, i32
  }
  func.func @transform_3(%arg0: i32) -> (i32, i32) {
    %c0_i32 = arith.constant 0 : i32
    %c0_i32_0 = arith.constant 0 : i32
    return %arg0, %c0_i32 : i32, i32
  }
}

module attributes {stable_mosaic.version = 11 : i64} {
  func.func @attention_kernel(%arg0: i32, %arg1: memref<1x17x768xbf16, #tpu.memory_space<vmem>>, %arg2: memref<1x17x256xbf16, #tpu.memory_space<vmem>>) attributes {dimension_semantics = [#tpu.dimension_semantics<parallel>], iteration_bounds = array<i64: 2>, scalar_prefetch = 0 : i64, scratch_operands = 0 : i64, tpu.core_type = #tpu.core_type<tc>, window_params = [{transform_indices = @transform_0, window_bounds = array<i64: 1, 17, 768>}, {transform_indices = @transform_1, window_bounds = array<i64: 1, 17, 256>}]} {
    %c0 = arith.constant 0 : index
    %c0_0 = arith.constant 0 : index
    %c0_1 = arith.constant 0 : index
    %0 = vector.load %arg1[%c0, %c0_0, %c0_1] : memref<1x17x768xbf16, #tpu.memory_space<vmem>>, vector<1x17x128xbf16>
    %1 = vector.shape_cast %0 : vector<1x17x128xbf16> to vector<17x128xbf16>
    %c0_2 = arith.constant 0 : index
    %c0_3 = arith.constant 0 : index
    %c256 = arith.constant 256 : index
    %2 = vector.load %arg1[%c0_2, %c0_3, %c256] : memref<1x17x768xbf16, #tpu.memory_space<vmem>>, vector<1x17x128xbf16>
    %3 = vector.shape_cast %2 : vector<1x17x128xbf16> to vector<17x128xbf16>
    %c0_4 = arith.constant 0 : index
    %c0_5 = arith.constant 0 : index
    %c512 = arith.constant 512 : index
    %4 = vector.load %arg1[%c0_4, %c0_5, %c512] : memref<1x17x768xbf16, #tpu.memory_space<vmem>>, vector<1x17x128xbf16>
    %5 = vector.shape_cast %4 : vector<1x17x128xbf16> to vector<17x128xbf16>
    %cst = arith.constant dense<0.000000e+00> : vector<17x17xf32>
    %6 = tpu.matmul %1, %3, %cst {dimension_numbers = #tpu.dot_dimension_numbers<[1], [1], [0], [0], [0, 0, 1, 0], [], []>} : vector<17x128xbf16>, vector<17x128xbf16>, vector<17x17xf32> -> vector<17x17xf32>
    %cst_6 = arith.constant 0.0883883461 : f32
    %7 = vector.broadcast %cst_6 : f32 to vector<17x17xf32>
    %8 = arith.mulf %6, %7 : vector<17x17xf32>
    %cst_7 = arith.constant dense<0xFF800000> : vector<17xf32>
    %9 = vector.multi_reduction <maximumf>, %8, %cst_7 [1] : vector<17x17xf32> to vector<17xf32>
    %10 = vector.shape_cast %9 : vector<17xf32> to vector<17x1xf32>
    %11 = vector.broadcast %10 : vector<17x1xf32> to vector<17x17xf32>
    %12 = arith.subf %8, %11 : vector<17x17xf32>
    %13 = math.exp %12 : vector<17x17xf32>
    %cst_8 = arith.constant dense<0.000000e+00> : vector<17xf32>
    %14 = vector.multi_reduction <add>, %13, %cst_8 [1] : vector<17x17xf32> to vector<17xf32>
    %15 = vector.shape_cast %14 : vector<17xf32> to vector<17x1xf32>
    %16 = arith.truncf %13 : vector<17x17xf32> to vector<17x17xbf16>
    %cst_9 = arith.constant dense<0.000000e+00> : vector<17x128xf32>
    %17 = tpu.matmul %16, %5, %cst_9 {dimension_numbers = #tpu.dot_dimension_numbers<[1], [0], [0], [1], [0, 0, 1, 1], [], []>} : vector<17x17xbf16>, vector<17x128xbf16>, vector<17x128xf32> -> vector<17x128xf32>
    %18 = tpu.reciprocal %15 {approx = true} : vector<17x1xf32> -> vector<17x1xf32>
    %19 = vector.broadcast %18 : vector<17x1xf32> to vector<17x128xf32>
    %20 = arith.mulf %17, %19 : vector<17x128xf32>
    %21 = arith.truncf %20 : vector<17x128xf32> to vector<17x128xbf16>
    %c0_10 = arith.constant 0 : index
    %c0_11 = arith.constant 0 : index
    %c0_12 = arith.constant 0 : index
    %22 = vector.load %arg2[%c0_10, %c0_11, %c0_12] : memref<1x17x256xbf16, #tpu.memory_space<vmem>>, vector<1x17x128xbf16>
    %23 = vector.shape_cast %22 : vector<1x17x128xbf16> to vector<17x128xbf16>
    %24 = vector.shape_cast %21 : vector<17x128xbf16> to vector<1x17x128xbf16>
    tpu.vector_store %arg2[%c0_10, %c0_11, %c0_12], %24 {strides = array<i32>} : memref<1x17x256xbf16, #tpu.memory_space<vmem>>, vector<1x17x128xbf16>,
    %c0_13 = arith.constant 0 : index
    %c0_14 = arith.constant 0 : index
    %c128 = arith.constant 128 : index
    %25 = vector.load %arg1[%c0_13, %c0_14, %c128] : memref<1x17x768xbf16, #tpu.memory_space<vmem>>, vector<1x17x128xbf16>
    %26 = vector.shape_cast %25 : vector<1x17x128xbf16> to vector<17x128xbf16>
    %c0_15 = arith.constant 0 : index
    %c0_16 = arith.constant 0 : index
    %c384 = arith.constant 384 : index
    %27 = vector.load %arg1[%c0_15, %c0_16, %c384] : memref<1x17x768xbf16, #tpu.memory_space<vmem>>, vector<1x17x128xbf16>
    %28 = vector.shape_cast %27 : vector<1x17x128xbf16> to vector<17x128xbf16>
    %c0_17 = arith.constant 0 : index
    %c0_18 = arith.constant 0 : index
    %c640 = arith.constant 640 : index
    %29 = vector.load %arg1[%c0_17, %c0_18, %c640] : memref<1x17x768xbf16, #tpu.memory_space<vmem>>, vector<1x17x128xbf16>
    %30 = vector.shape_cast %29 : vector<1x17x128xbf16> to vector<17x128xbf16>
    %cst_19 = arith.constant dense<0.000000e+00> : vector<17x17xf32>
    %31 = tpu.matmul %26, %28, %cst_19 {dimension_numbers = #tpu.dot_dimension_numbers<[1], [1], [0], [0], [0, 0, 1, 0], [], []>} : vector<17x128xbf16>, vector<17x128xbf16>, vector<17x17xf32> -> vector<17x17xf32>
    %cst_20 = arith.constant 0.0883883461 : f32
    %32 = vector.broadcast %cst_20 : f32 to vector<17x17xf32>
    %33 = arith.mulf %31, %32 : vector<17x17xf32>
    %cst_21 = arith.constant dense<0xFF800000> : vector<17xf32>
    %34 = vector.multi_reduction <maximumf>, %33, %cst_21 [1] : vector<17x17xf32> to vector<17xf32>
    %35 = vector.shape_cast %34 : vector<17xf32> to vector<17x1xf32>
    %36 = vector.broadcast %35 : vector<17x1xf32> to vector<17x17xf32>
    %37 = arith.subf %33, %36 : vector<17x17xf32>
    %38 = math.exp %37 : vector<17x17xf32>
    %cst_22 = arith.constant dense<0.000000e+00> : vector<17xf32>
    %39 = vector.multi_reduction <add>, %38, %cst_22 [1] : vector<17x17xf32> to vector<17xf32>
    %40 = vector.shape_cast %39 : vector<17xf32> to vector<17x1xf32>
    %41 = arith.truncf %38 : vector<17x17xf32> to vector<17x17xbf16>
    %cst_23 = arith.constant dense<0.000000e+00> : vector<17x128xf32>
    %42 = tpu.matmul %41, %30, %cst_23 {dimension_numbers = #tpu.dot_dimension_numbers<[1], [0], [0], [1], [0, 0, 1, 1], [], []>} : vector<17x17xbf16>, vector<17x128xbf16>, vector<17x128xf32> -> vector<17x128xf32>
    %43 = tpu.reciprocal %40 {approx = true} : vector<17x1xf32> -> vector<17x1xf32>
    %44 = vector.broadcast %43 : vector<17x1xf32> to vector<17x128xf32>
    %45 = arith.mulf %42, %44 : vector<17x128xf32>
    %46 = arith.truncf %45 : vector<17x128xf32> to vector<17x128xbf16>
    %c0_24 = arith.constant 0 : index
    %c0_25 = arith.constant 0 : index
    %c128_26 = arith.constant 128 : index
    %47 = vector.load %arg2[%c0_24, %c0_25, %c128_26] : memref<1x17x256xbf16, #tpu.memory_space<vmem>>, vector<1x17x128xbf16>
    %48 = vector.shape_cast %47 : vector<1x17x128xbf16> to vector<17x128xbf16>
    %49 = vector.shape_cast %46 : vector<17x128xbf16> to vector<1x17x128xbf16>
    tpu.vector_store %arg2[%c0_24, %c0_25, %c128_26], %49 {strides = array<i32>} : memref<1x17x256xbf16, #tpu.memory_space<vmem>>, vector<1x17x128xbf16>,
    return
  }
  func.func @transform_0(%arg0: i32) -> (i32, i32, i32) {
    %c0_i32 = arith.constant 0 : i32
    %c0_i32_0 = arith.constant 0 : i32
    %c0_i32_1 = arith.constant 0 : i32
    return %arg0, %c0_i32, %c0_i32_0 : i32, i32, i32
  }
  func.func @transform_1(%arg0: i32) -> (i32, i32, i32) {
    %c0_i32 = arith.constant 0 : i32
    %c0_i32_0 = arith.constant 0 : i32
    %c0_i32_1 = arith.constant 0 : i32
    return %arg0, %c0_i32, %c0_i32_0 : i32, i32, i32
  }
}

module attributes {stable_mosaic.version = 11 : i64} {
  func.func @block_tail_kernel(%arg0: i32, %arg1: memref<34x256xf32, #tpu.memory_space<vmem>>, %arg2: memref<34x256xbf16, #tpu.memory_space<vmem>>, %arg3: memref<256x256xbf16, #tpu.memory_space<vmem>>, %arg4: memref<1x256xf32, #tpu.memory_space<vmem>>, %arg5: memref<1x256xf32, #tpu.memory_space<vmem>>, %arg6: memref<1x256xf32, #tpu.memory_space<vmem>>, %arg7: memref<256x512xbf16, #tpu.memory_space<vmem>>, %arg8: memref<1x512xf32, #tpu.memory_space<vmem>>, %arg9: memref<512x256xbf16, #tpu.memory_space<vmem>>, %arg10: memref<1x256xf32, #tpu.memory_space<vmem>>, %arg11: memref<1x256xf32, #tpu.memory_space<vmem>>, %arg12: memref<1x256xf32, #tpu.memory_space<vmem>>, %arg13: memref<34x256xf32, #tpu.memory_space<vmem>>) attributes {dimension_semantics = [#tpu.dimension_semantics<parallel>], iteration_bounds = array<i64: 1>, scalar_prefetch = 0 : i64, scratch_operands = 0 : i64, tpu.core_type = #tpu.core_type<tc>, window_params = [{transform_indices = @transform_0, window_bounds = array<i64: 34, 256>}, {transform_indices = @transform_1, window_bounds = array<i64: 34, 256>}, {pipeline_mode = #tpu.pipeline_mode<synchronous>, transform_indices = @transform_2, window_bounds = array<i64: 256, 256>}, {pipeline_mode = #tpu.pipeline_mode<synchronous>, transform_indices = @transform_3, window_bounds = array<i64: 1, 256>}, {pipeline_mode = #tpu.pipeline_mode<synchronous>, transform_indices = @transform_4, window_bounds = array<i64: 1, 256>}, {pipeline_mode = #tpu.pipeline_mode<synchronous>, transform_indices = @transform_5, window_bounds = array<i64: 1, 256>}, {pipeline_mode = #tpu.pipeline_mode<synchronous>, transform_indices = @transform_6, window_bounds = array<i64: 256, 512>}, {pipeline_mode = #tpu.pipeline_mode<synchronous>, transform_indices = @transform_7, window_bounds = array<i64: 1, 512>}, {pipeline_mode = #tpu.pipeline_mode<synchronous>, transform_indices = @transform_8, window_bounds = array<i64: 512, 256>}, {pipeline_mode = #tpu.pipeline_mode<synchronous>, transform_indices = @transform_9, window_bounds = array<i64: 1, 256>}, {pipeline_mode = #tpu.pipeline_mode<synchronous>, transform_indices = @transform_10, window_bounds = array<i64: 1, 256>}, {pipeline_mode = #tpu.pipeline_mode<synchronous>, transform_indices = @transform_11, window_bounds = array<i64: 1, 256>}, {transform_indices = @transform_12, window_bounds = array<i64: 34, 256>}]} {
    %c0 = arith.constant 0 : index
    %c0_0 = arith.constant 0 : index
    %0 = vector.load %arg1[%c0, %c0_0] : memref<34x256xf32, #tpu.memory_space<vmem>>, vector<34x256xf32>
    %c0_1 = arith.constant 0 : index
    %c0_2 = arith.constant 0 : index
    %1 = vector.load %arg2[%c0_1, %c0_2] : memref<34x256xbf16, #tpu.memory_space<vmem>>, vector<34x256xbf16>
    %c0_3 = arith.constant 0 : index
    %c0_4 = arith.constant 0 : index
    %2 = vector.load %arg3[%c0_3, %c0_4] : memref<256x256xbf16, #tpu.memory_space<vmem>>, vector<256x256xbf16>
    %cst = arith.constant dense<0.000000e+00> : vector<34x256xf32>
    %3 = tpu.matmul %1, %2, %cst {dimension_numbers = #tpu.dot_dimension_numbers<[1], [0], [0], [1], [0, 0, 1, 1], [], []>} : vector<34x256xbf16>, vector<256x256xbf16>, vector<34x256xf32> -> vector<34x256xf32>
    %c0_5 = arith.constant 0 : index
    %c0_6 = arith.constant 0 : index
    %4 = vector.load %arg4[%c0_5, %c0_6] : memref<1x256xf32, #tpu.memory_space<vmem>>, vector<1x256xf32>
    %5 = vector.broadcast %4 : vector<1x256xf32> to vector<34x256xf32>
    %6 = arith.addf %3, %5 : vector<34x256xf32>
    %7 = arith.addf %0, %6 : vector<34x256xf32>
    %cst_7 = arith.constant dense<0.000000e+00> : vector<34xf32>
    %8 = vector.multi_reduction <add>, %7, %cst_7 [1] : vector<34x256xf32> to vector<34xf32>
    %9 = vector.shape_cast %8 : vector<34xf32> to vector<34x1xf32>
    %cst_8 = arith.constant 2.560000e+02 : f32
    %10 = vector.broadcast %cst_8 : f32 to vector<34x1xf32>
    %11 = arith.divf %9, %10 : vector<34x1xf32>
    %12 = vector.broadcast %11 : vector<34x1xf32> to vector<34x256xf32>
    %13 = arith.subf %7, %12 : vector<34x256xf32>
    %14 = arith.mulf %13, %13 : vector<34x256xf32>
    %cst_9 = arith.constant dense<0.000000e+00> : vector<34xf32>
    %15 = vector.multi_reduction <add>, %14, %cst_9 [1] : vector<34x256xf32> to vector<34xf32>
    %16 = vector.shape_cast %15 : vector<34xf32> to vector<34x1xf32>
    %cst_10 = arith.constant 2.560000e+02 : f32
    %17 = vector.broadcast %cst_10 : f32 to vector<34x1xf32>
    %18 = arith.divf %16, %17 : vector<34x1xf32>
    %19 = vector.broadcast %11 : vector<34x1xf32> to vector<34x256xf32>
    %20 = arith.subf %7, %19 : vector<34x256xf32>
    %cst_11 = arith.constant 9.99999974E-6 : f32
    %21 = vector.broadcast %cst_11 : f32 to vector<34x1xf32>
    %22 = arith.addf %18, %21 : vector<34x1xf32>
    %23 = math.rsqrt %22 : vector<34x1xf32>
    %24 = vector.broadcast %23 : vector<34x1xf32> to vector<34x256xf32>
    %25 = arith.mulf %20, %24 : vector<34x256xf32>
    %c0_12 = arith.constant 0 : index
    %c0_13 = arith.constant 0 : index
    %26 = vector.load %arg5[%c0_12, %c0_13] : memref<1x256xf32, #tpu.memory_space<vmem>>, vector<1x256xf32>
    %27 = vector.broadcast %26 : vector<1x256xf32> to vector<34x256xf32>
    %28 = arith.mulf %25, %27 : vector<34x256xf32>
    %c0_14 = arith.constant 0 : index
    %c0_15 = arith.constant 0 : index
    %29 = vector.load %arg6[%c0_14, %c0_15] : memref<1x256xf32, #tpu.memory_space<vmem>>, vector<1x256xf32>
    %30 = vector.broadcast %29 : vector<1x256xf32> to vector<34x256xf32>
    %31 = arith.addf %28, %30 : vector<34x256xf32>
    %32 = arith.truncf %31 : vector<34x256xf32> to vector<34x256xbf16>
    %cst_16 = arith.constant 0.000000e+00 : f32
    %33 = vector.broadcast %cst_16 : f32 to vector<34x256xf32>
    %c0_17 = arith.constant 0 : index
    %c0_18 = arith.constant 0 : index
    %34 = vector.load %arg7[%c0_17, %c0_18] : memref<256x512xbf16, #tpu.memory_space<vmem>>, vector<256x512xbf16>
    %cst_19 = arith.constant dense<0.000000e+00> : vector<34x512xf32>
    %35 = tpu.matmul %32, %34, %cst_19 {dimension_numbers = #tpu.dot_dimension_numbers<[1], [0], [0], [1], [0, 0, 1, 1], [], []>} : vector<34x256xbf16>, vector<256x512xbf16>, vector<34x512xf32> -> vector<34x512xf32>
    %c0_20 = arith.constant 0 : index
    %c0_21 = arith.constant 0 : index
    %36 = vector.load %arg8[%c0_20, %c0_21] : memref<1x512xf32, #tpu.memory_space<vmem>>, vector<1x512xf32>
    %37 = vector.broadcast %36 : vector<1x512xf32> to vector<34x512xf32>
    %38 = arith.addf %35, %37 : vector<34x512xf32>
    %cst_22 = arith.constant 5.000000e-01 : f32
    %39 = vector.broadcast %cst_22 : f32 to vector<34x512xf32>
    %40 = arith.mulf %39, %38 : vector<34x512xf32>
    %cst_23 = arith.constant 0.707106769 : f32
    %41 = vector.broadcast %cst_23 : f32 to vector<34x512xf32>
    %42 = arith.mulf %38, %41 : vector<34x512xf32>
    %43 = math.erf %42 : vector<34x512xf32>
    %cst_24 = arith.constant 1.000000e+00 : f32
    %44 = vector.broadcast %cst_24 : f32 to vector<34x512xf32>
    %45 = arith.addf %44, %43 : vector<34x512xf32>
    %46 = arith.mulf %40, %45 : vector<34x512xf32>
    %47 = arith.truncf %46 : vector<34x512xf32> to vector<34x512xbf16>
    %c0_25 = arith.constant 0 : index
    %c0_26 = arith.constant 0 : index
    %48 = vector.load %arg9[%c0_25, %c0_26] : memref<512x256xbf16, #tpu.memory_space<vmem>>, vector<512x256xbf16>
    %cst_27 = arith.constant dense<0.000000e+00> : vector<34x256xf32>
    %49 = tpu.matmul %47, %48, %cst_27 {dimension_numbers = #tpu.dot_dimension_numbers<[1], [0], [0], [1], [0, 0, 1, 1], [], []>} : vector<34x512xbf16>, vector<512x256xbf16>, vector<34x256xf32> -> vector<34x256xf32>
    %50 = arith.addf %33, %49 : vector<34x256xf32>
    %c0_28 = arith.constant 0 : index
    %c0_29 = arith.constant 0 : index
    %51 = vector.load %arg10[%c0_28, %c0_29] : memref<1x256xf32, #tpu.memory_space<vmem>>, vector<1x256xf32>
    %52 = vector.broadcast %51 : vector<1x256xf32> to vector<34x256xf32>
    %53 = arith.addf %50, %52 : vector<34x256xf32>
    %54 = arith.addf %31, %53 : vector<34x256xf32>
    %cst_30 = arith.constant dense<0.000000e+00> : vector<34xf32>
    %55 = vector.multi_reduction <add>, %54, %cst_30 [1] : vector<34x256xf32> to vector<34xf32>
    %56 = vector.shape_cast %55 : vector<34xf32> to vector<34x1xf32>
    %cst_31 = arith.constant 2.560000e+02 : f32
    %57 = vector.broadcast %cst_31 : f32 to vector<34x1xf32>
    %58 = arith.divf %56, %57 : vector<34x1xf32>
    %59 = vector.broadcast %58 : vector<34x1xf32> to vector<34x256xf32>
    %60 = arith.subf %54, %59 : vector<34x256xf32>
    %61 = arith.mulf %60, %60 : vector<34x256xf32>
    %cst_32 = arith.constant dense<0.000000e+00> : vector<34xf32>
    %62 = vector.multi_reduction <add>, %61, %cst_32 [1] : vector<34x256xf32> to vector<34xf32>
    %63 = vector.shape_cast %62 : vector<34xf32> to vector<34x1xf32>
    %cst_33 = arith.constant 2.560000e+02 : f32
    %64 = vector.broadcast %cst_33 : f32 to vector<34x1xf32>
    %65 = arith.divf %63, %64 : vector<34x1xf32>
    %66 = vector.broadcast %58 : vector<34x1xf32> to vector<34x256xf32>
    %67 = arith.subf %54, %66 : vector<34x256xf32>
    %cst_34 = arith.constant 9.99999974E-6 : f32
    %68 = vector.broadcast %cst_34 : f32 to vector<34x1xf32>
    %69 = arith.addf %65, %68 : vector<34x1xf32>
    %70 = math.rsqrt %69 : vector<34x1xf32>
    %71 = vector.broadcast %70 : vector<34x1xf32> to vector<34x256xf32>
    %72 = arith.mulf %67, %71 : vector<34x256xf32>
    %c0_35 = arith.constant 0 : index
    %c0_36 = arith.constant 0 : index
    %73 = vector.load %arg11[%c0_35, %c0_36] : memref<1x256xf32, #tpu.memory_space<vmem>>, vector<1x256xf32>
    %74 = vector.broadcast %73 : vector<1x256xf32> to vector<34x256xf32>
    %75 = arith.mulf %72, %74 : vector<34x256xf32>
    %c0_37 = arith.constant 0 : index
    %c0_38 = arith.constant 0 : index
    %76 = vector.load %arg12[%c0_37, %c0_38] : memref<1x256xf32, #tpu.memory_space<vmem>>, vector<1x256xf32>
    %77 = vector.broadcast %76 : vector<1x256xf32> to vector<34x256xf32>
    %78 = arith.addf %75, %77 : vector<34x256xf32>
    %c0_39 = arith.constant 0 : index
    %c0_40 = arith.constant 0 : index
    %79 = vector.load %arg13[%c0_39, %c0_40] : memref<34x256xf32, #tpu.memory_space<vmem>>, vector<34x256xf32>
    tpu.vector_store %arg13[%c0_39, %c0_40], %78 {strides = array<i32>} : memref<34x256xf32, #tpu.memory_space<vmem>>, vector<34x256xf32>,
    return
  }
  func.func @transform_0(%arg0: i32) -> (i32, i32) {
    %c0_i32 = arith.constant 0 : i32
    %c0_i32_0 = arith.constant 0 : i32
    return %arg0, %c0_i32 : i32, i32
  }
  func.func @transform_1(%arg0: i32) -> (i32, i32) {
    %c0_i32 = arith.constant 0 : i32
    %c0_i32_0 = arith.constant 0 : i32
    return %arg0, %c0_i32 : i32, i32
  }
  func.func @transform_2(%arg0: i32) -> (i32, i32) {
    %c0_i32 = arith.constant 0 : i32
    %c0_i32_0 = arith.constant 0 : i32
    %c0_i32_1 = arith.constant 0 : i32
    return %c0_i32, %c0_i32_0 : i32, i32
  }
  func.func @transform_3(%arg0: i32) -> (i32, i32) {
    %c0_i32 = arith.constant 0 : i32
    %c0_i32_0 = arith.constant 0 : i32
    %c0_i32_1 = arith.constant 0 : i32
    return %c0_i32, %c0_i32_0 : i32, i32
  }
  func.func @transform_4(%arg0: i32) -> (i32, i32) {
    %c0_i32 = arith.constant 0 : i32
    %c0_i32_0 = arith.constant 0 : i32
    %c0_i32_1 = arith.constant 0 : i32
    return %c0_i32, %c0_i32_0 : i32, i32
  }
  func.func @transform_5(%arg0: i32) -> (i32, i32) {
    %c0_i32 = arith.constant 0 : i32
    %c0_i32_0 = arith.constant 0 : i32
    %c0_i32_1 = arith.constant 0 : i32
    return %c0_i32, %c0_i32_0 : i32, i32
  }
  func.func @transform_6(%arg0: i32) -> (i32, i32) {
    %c0_i32 = arith.constant 0 : i32
    %c0_i32_0 = arith.constant 0 : i32
    %c0_i32_1 = arith.constant 0 : i32
    return %c0_i32, %c0_i32_0 : i32, i32
  }
  func.func @transform_7(%arg0: i32) -> (i32, i32) {
    %c0_i32 = arith.constant 0 : i32
    %c0_i32_0 = arith.constant 0 : i32
    %c0_i32_1 = arith.constant 0 : i32
    return %c0_i32, %c0_i32_0 : i32, i32
  }
  func.func @transform_8(%arg0: i32) -> (i32, i32) {
    %c0_i32 = arith.constant 0 : i32
    %c0_i32_0 = arith.constant 0 : i32
    %c0_i32_1 = arith.constant 0 : i32
    return %c0_i32, %c0_i32_0 : i32, i32
  }
  func.func @transform_9(%arg0: i32) -> (i32, i32) {
    %c0_i32 = arith.constant 0 : i32
    %c0_i32_0 = arith.constant 0 : i32
    %c0_i32_1 = arith.constant 0 : i32
    return %c0_i32, %c0_i32_0 : i32, i32
  }
  func.func @transform_10(%arg0: i32) -> (i32, i32) {
    %c0_i32 = arith.constant 0 : i32
    %c0_i32_0 = arith.constant 0 : i32
    %c0_i32_1 = arith.constant 0 : i32
    return %c0_i32, %c0_i32_0 : i32, i32
  }
  func.func @transform_11(%arg0: i32) -> (i32, i32) {
    %c0_i32 = arith.constant 0 : i32
    %c0_i32_0 = arith.constant 0 : i32
    %c0_i32_1 = arith.constant 0 : i32
    return %c0_i32, %c0_i32_0 : i32, i32
  }
  func.func @transform_12(%arg0: i32) -> (i32, i32) {
    %c0_i32 = arith.constant 0 : i32
    %c0_i32_0 = arith.constant 0 : i32
    return %arg0, %c0_i32 : i32, i32
  }
}

module attributes {stable_mosaic.version = 11 : i64} {
  func.func @head_kernel(%arg0: i32, %arg1: memref<2x256xf32, #tpu.memory_space<vmem>>, %arg2: memref<1x256xf32, #tpu.memory_space<vmem>>, %arg3: memref<1x256xf32, #tpu.memory_space<vmem>>, %arg4: memref<256x128xbf16, #tpu.memory_space<vmem>>, %arg5: memref<1x128xf32, #tpu.memory_space<vmem>>, %arg6: memref<2x128xf32, #tpu.memory_space<vmem>>) attributes {dimension_semantics = [#tpu.dimension_semantics<arbitrary>], iteration_bounds = array<i64: 1>, scalar_prefetch = 0 : i64, scratch_operands = 0 : i64, tpu.core_type = #tpu.core_type<tc>, window_params = [{pipeline_mode = #tpu.pipeline_mode<synchronous>, transform_indices = @transform_0, window_bounds = array<i64: 2, 256>}, {pipeline_mode = #tpu.pipeline_mode<synchronous>, transform_indices = @transform_1, window_bounds = array<i64: 1, 256>}, {pipeline_mode = #tpu.pipeline_mode<synchronous>, transform_indices = @transform_2, window_bounds = array<i64: 1, 256>}, {pipeline_mode = #tpu.pipeline_mode<synchronous>, transform_indices = @transform_3, window_bounds = array<i64: 256, 128>}, {pipeline_mode = #tpu.pipeline_mode<synchronous>, transform_indices = @transform_4, window_bounds = array<i64: 1, 128>}, {pipeline_mode = #tpu.pipeline_mode<synchronous>, transform_indices = @transform_5, window_bounds = array<i64: 2, 128>}]} {
    %c0 = arith.constant 0 : index
    %c0_0 = arith.constant 0 : index
    %0 = vector.load %arg1[%c0, %c0_0] : memref<2x256xf32, #tpu.memory_space<vmem>>, vector<2x256xf32>
    %cst = arith.constant dense<0.000000e+00> : vector<2xf32>
    %1 = vector.multi_reduction <add>, %0, %cst [1] : vector<2x256xf32> to vector<2xf32>
    %2 = vector.shape_cast %1 : vector<2xf32> to vector<2x1xf32>
    %cst_1 = arith.constant 2.560000e+02 : f32
    %3 = vector.broadcast %cst_1 : f32 to vector<2x1xf32>
    %4 = arith.divf %2, %3 : vector<2x1xf32>
    %5 = vector.broadcast %4 : vector<2x1xf32> to vector<2x256xf32>
    %6 = arith.subf %0, %5 : vector<2x256xf32>
    %7 = arith.mulf %6, %6 : vector<2x256xf32>
    %cst_2 = arith.constant dense<0.000000e+00> : vector<2xf32>
    %8 = vector.multi_reduction <add>, %7, %cst_2 [1] : vector<2x256xf32> to vector<2xf32>
    %9 = vector.shape_cast %8 : vector<2xf32> to vector<2x1xf32>
    %cst_3 = arith.constant 2.560000e+02 : f32
    %10 = vector.broadcast %cst_3 : f32 to vector<2x1xf32>
    %11 = arith.divf %9, %10 : vector<2x1xf32>
    %12 = vector.broadcast %4 : vector<2x1xf32> to vector<2x256xf32>
    %13 = arith.subf %0, %12 : vector<2x256xf32>
    %cst_4 = arith.constant 9.99999974E-6 : f32
    %14 = vector.broadcast %cst_4 : f32 to vector<2x1xf32>
    %15 = arith.addf %11, %14 : vector<2x1xf32>
    %16 = math.rsqrt %15 : vector<2x1xf32>
    %17 = vector.broadcast %16 : vector<2x1xf32> to vector<2x256xf32>
    %18 = arith.mulf %13, %17 : vector<2x256xf32>
    %c0_5 = arith.constant 0 : index
    %c0_6 = arith.constant 0 : index
    %19 = vector.load %arg2[%c0_5, %c0_6] : memref<1x256xf32, #tpu.memory_space<vmem>>, vector<1x256xf32>
    %20 = vector.broadcast %19 : vector<1x256xf32> to vector<2x256xf32>
    %21 = arith.mulf %18, %20 : vector<2x256xf32>
    %c0_7 = arith.constant 0 : index
    %c0_8 = arith.constant 0 : index
    %22 = vector.load %arg3[%c0_7, %c0_8] : memref<1x256xf32, #tpu.memory_space<vmem>>, vector<1x256xf32>
    %23 = vector.broadcast %22 : vector<1x256xf32> to vector<2x256xf32>
    %24 = arith.addf %21, %23 : vector<2x256xf32>
    %25 = arith.truncf %24 : vector<2x256xf32> to vector<2x256xbf16>
    %c0_9 = arith.constant 0 : index
    %c0_10 = arith.constant 0 : index
    %26 = vector.load %arg4[%c0_9, %c0_10] : memref<256x128xbf16, #tpu.memory_space<vmem>>, vector<256x128xbf16>
    %cst_11 = arith.constant dense<0.000000e+00> : vector<2x128xf32>
    %27 = tpu.matmul %25, %26, %cst_11 {dimension_numbers = #tpu.dot_dimension_numbers<[1], [0], [0], [1], [0, 0, 1, 1], [], []>} : vector<2x256xbf16>, vector<256x128xbf16>, vector<2x128xf32> -> vector<2x128xf32>
    %c0_12 = arith.constant 0 : index
    %c0_13 = arith.constant 0 : index
    %28 = vector.load %arg5[%c0_12, %c0_13] : memref<1x128xf32, #tpu.memory_space<vmem>>, vector<1x128xf32>
    %29 = vector.broadcast %28 : vector<1x128xf32> to vector<2x128xf32>
    %30 = arith.addf %27, %29 : vector<2x128xf32>
    %c0_14 = arith.constant 0 : index
    %c0_15 = arith.constant 0 : index
    %31 = vector.load %arg6[%c0_14, %c0_15] : memref<2x128xf32, #tpu.memory_space<vmem>>, vector<2x128xf32>
    tpu.vector_store %arg6[%c0_14, %c0_15], %30 {strides = array<i32>} : memref<2x128xf32, #tpu.memory_space<vmem>>, vector<2x128xf32>,
    return
  }
  func.func @transform_0(%arg0: i32) -> (i32, i32) {
    %c0_i32 = arith.constant 0 : i32
    %c0_i32_0 = arith.constant 0 : i32
    %c0_i32_1 = arith.constant 0 : i32
    return %c0_i32, %c0_i32_0 : i32, i32
  }
  func.func @transform_1(%arg0: i32) -> (i32, i32) {
    %c0_i32 = arith.constant 0 : i32
    %c0_i32_0 = arith.constant 0 : i32
    %c0_i32_1 = arith.constant 0 : i32
    return %c0_i32, %c0_i32_0 : i32, i32
  }
  func.func @transform_2(%arg0: i32) -> (i32, i32) {
    %c0_i32 = arith.constant 0 : i32
    %c0_i32_0 = arith.constant 0 : i32
    %c0_i32_1 = arith.constant 0 : i32
    return %c0_i32, %c0_i32_0 : i32, i32
  }
  func.func @transform_3(%arg0: i32) -> (i32, i32) {
    %c0_i32 = arith.constant 0 : i32
    %c0_i32_0 = arith.constant 0 : i32
    %c0_i32_1 = arith.constant 0 : i32
    return %c0_i32, %c0_i32_0 : i32, i32
  }
  func.func @transform_4(%arg0: i32) -> (i32, i32) {
    %c0_i32 = arith.constant 0 : i32
    %c0_i32_0 = arith.constant 0 : i32
    %c0_i32_1 = arith.constant 0 : i32
    return %c0_i32, %c0_i32_0 : i32, i32
  }
  func.func @transform_5(%arg0: i32) -> (i32, i32) {
    %c0_i32 = arith.constant 0 : i32
    %c0_i32_0 = arith.constant 0 : i32
    %c0_i32_1 = arith.constant 0 : i32
    return %c0_i32, %c0_i32_0 : i32, i32
  }
}

</mosaic_0001>

<llo_original>
// kernel: _lambda_.8
$region0: #{_lambda_.8}
  #allocation0 [shape = 'u32[]', space=smem, size = 0x4, offset = 0x4, fixed_abs, tag = 'smem constant byte address 0x4 - core index']
  #allocation1 [shape = 'u32[144,128]{1,0:T(1,128)}', space=vmem, size = 0x12000, scoped, tag = 'internal scratch']
  %s0 = inlined_call_operand.vmem [shape: f32[32,256], index: 0, kind: input, shape index: {}]
  %s1 = inlined_call_operand.vmem [shape: bf16[256,256], index: 1, kind: input, shape index: {}]
  %s2 = inlined_call_operand.vmem [shape: f32[1,256], index: 2, kind: input, shape index: {}]
  %s3 = inlined_call_operand.vmem [shape: f32[32,256], index: 3, kind: output, shape index: {}]
  %s4 = sld [smem:[#allocation0]]
  $region22: #{_lambda_.8} parent=0
    _
  %s6 = ssub.s32 1, %s4
  %s7 = scalar_select 0, %s6, %s4
  // Predicated region
  $region2: #{_lambda_.8} parent=0 // pred_check
    _
  $region3: #{_lambda_.8} parent=0 // pred_check_branch
    %9 = sbr.rel (0) target = $region5
  $region4: #{_lambda_.8} parent=0 // pred_region
    _
  $region5: #{_lambda_.8} parent=0 // pred_fallthru
    _
  // Predicated region
  $region6: #{_lambda_.8} parent=0 // pred_check
    _
  $region7: #{_lambda_.8} parent=0 // pred_check_branch
    %11 = sbr.rel (0) target = $region9
  $region8: #{_lambda_.8} parent=0 // pred_region
    _
  $region9: #{_lambda_.8} parent=0 // pred_fallthru
    _
  // Predicated region
  $region10: #{_lambda_.8} parent=0 // pred_check
    _
  $region11: #{_lambda_.8} parent=0 // pred_check_branch
    %13 = sbr.rel (0) target = $region13
  $region12: #{_lambda_.8} parent=0 // pred_region
    _
  $region13: #{_lambda_.8} parent=0 // pred_fallthru
    _
  %v14 = vld [vmem:[%s0] sm:$0xff]
  %v15 = vld [vmem:[%s0 + $0x8] sm:$0xff]
  %v16 = vld [vmem:[%s0 + $0x10] sm:$0xff]
  %v17 = vld [vmem:[%s0 + $0x18] sm:$0xff]
  %v18 = vld [vmem:[%s0 + $0x20] sm:$0xff]
  %v19 = vld [vmem:[%s0 + $0x28] sm:$0xff]
  %v20 = vld [vmem:[%s0 + $0x30] sm:$0xff]
  %v21 = vld [vmem:[%s0 + $0x38] sm:$0xff]
  %v22 = vpack.c.bf16 %v16, %v14
  %v23 = vpack.c.bf16 %v17, %v15
  %v24 = vpack.c.bf16 %v20, %v18
  %v25 = vpack.c.bf16 %v21, %v19
  %v26 = vld [vmem:[%s1] sm:$0xff]
  %v27 = vld [vmem:[%s1 + $0x8] sm:$0xff]
  %v28 = vld [vmem:[%s1 + $0x10] sm:$0xff]
  %v29 = vld [vmem:[%s1 + $0x18] sm:$0xff]
  %v30 = vld [vmem:[%s1 + $0x20] sm:$0xff]
  %v31 = vld [vmem:[%s1 + $0x28] sm:$0xff]
  %v32 = vld [vmem:[%s1 + $0x30] sm:$0xff]
  %v33 = vld [vmem:[%s1 + $0x38] sm:$0xff]
  %v34 = vld [vmem:[%s1 + $0x40] sm:$0xff]
  %v35 = vld [vmem:[%s1 + $0x48] sm:$0xff]
  %v36 = vld [vmem:[%s1 + $0x50] sm:$0xff]
  %v37 = vld [vmem:[%s1 + $0x58] sm:$0xff]
  %v38 = vld [vmem:[%s1 + $0x60] sm:$0xff]
  %v39 = vld [vmem:[%s1 + $0x68] sm:$0xff]
  %v40 = vld [vmem:[%s1 + $0x70] sm:$0xff]
  %v41 = vld [vmem:[%s1 + $0x78] sm:$0xff]
  %v42 = vld [vmem:[%s1 + $0x80] sm:$0xff]
  %v43 = vld [vmem:[%s1 + $0x88] sm:$0xff]
  %v44 = vld [vmem:[%s1 + $0x90] sm:$0xff]
  %v45 = vld [vmem:[%s1 + $0x98] sm:$0xff]
  %v46 = vld [vmem:[%s1 + $0xa0] sm:$0xff]
  %v47 = vld [vmem:[%s1 + $0xa8] sm:$0xff]
  %v48 = vld [vmem:[%s1 + $0xb0] sm:$0xff]
  %v49 = vld [vmem:[%s1 + $0xb8] sm:$0xff]
  %v50 = vld [vmem:[%s1 + $0xc0] sm:$0xff]
  %v51 = vld [vmem:[%s1 + $0xc8] sm:$0xff]
  %v52 = vld [vmem:[%s1 + $0xd0] sm:$0xff]
  %v53 = vld [vmem:[%s1 + $0xd8] sm:$0xff]
  %v54 = vld [vmem:[%s1 + $0xe0] sm:$0xff]
  %v55 = vld [vmem:[%s1 + $0xe8] sm:$0xff]
  %v56 = vld [vmem:[%s1 + $0xf0] sm:$0xff]
  %v57 = vld [vmem:[%s1 + $0xf8] sm:$0xff]
  %v58 = vld [vmem:[%s2] sm:$0x3]
  %v60 = vlaneseq
  %v61 = vshrl.u32 %v60, 7
  %v62 = vsub.s32 0, %v61
  %v63 = vrot.slane %v58, %v62
  %v64 = vlaneseq
  %v65 = vshrl.u32 %v64, 7
  %v66 = vsub.s32 1, %v65
  %v67 = vrot.slane %v58, %v66
  %v102 = vunpack.c.l.b16 %v26
  %v103 = vunpack.c.h.b16 %v26
  %v104 = vunpack.c.l.b16 %v27
  %v105 = vunpack.c.h.b16 %v27
  %v106 = vunpack.c.l.b16 %v28
  %v107 = vunpack.c.h.b16 %v28
  %v108 = vunpack.c.l.b16 %v29
  %v109 = vunpack.c.h.b16 %v29
  %v110 = vunpack.c.l.b16 %v30
  %v111 = vunpack.c.h.b16 %v30
  %v112 = vunpack.c.l.b16 %v31
  %v113 = vunpack.c.h.b16 %v31
  %v114 = vunpack.c.l.b16 %v32
  %v115 = vunpack.c.h.b16 %v32
  %v116 = vunpack.c.l.b16 %v33
  %v117 = vunpack.c.h.b16 %v33
  %v118 = vunpack.c.l.b16 %v34
  %v119 = vunpack.c.h.b16 %v34
  %v120 = vunpack.c.l.b16 %v35
  %v121 = vunpack.c.h.b16 %v35
  %v122 = vunpack.c.l.b16 %v36
  %v123 = vunpack.c.h.b16 %v36
  %v124 = vunpack.c.l.b16 %v37
  %v125 = vunpack.c.h.b16 %v37
  %v126 = vunpack.c.l.b16 %v38
  %v127 = vunpack.c.h.b16 %v38
  %v128 = vunpack.c.l.b16 %v39
  %v129 = vunpack.c.h.b16 %v39
  %v130 = vunpack.c.l.b16 %v40
  %v131 = vunpack.c.h.b16 %v40
  %v132 = vunpack.c.l.b16 %v41
  %v133 = vunpack.c.h.b16 %v41
  %v134 = vunpack.c.l.b16 %v42
  %v135 = vunpack.c.h.b16 %v42
  %v136 = vunpack.c.l.b16 %v43
  %v137 = vunpack.c.h.b16 %v43
  %v138 = vunpack.c.l.b16 %v44
  %v139 = vunpack.c.h.b16 %v44
  %v140 = vunpack.c.l.b16 %v45
  %v141 = vunpack.c.h.b16 %v45
  %v142 = vunpack.c.l.b16 %v46
  %v143 = vunpack.c.h.b16 %v46
  %v144 = vunpack.c.l.b16 %v47
  %v145 = vunpack.c.h.b16 %v47
  %v146 = vunpack.c.l.b16 %v48
  %v147 = vunpack.c.h.b16 %v48
  %v148 = vunpack.c.l.b16 %v49
  %v149 = vunpack.c.h.b16 %v49
  %v150 = vunpack.c.l.b16 %v50
  %v151 = vunpack.c.h.b16 %v50
  %v152 = vunpack.c.l.b16 %v51
  %v153 = vunpack.c.h.b16 %v51
  %v154 = vunpack.c.l.b16 %v52
  %v155 = vunpack.c.h.b16 %v52
  %v156 = vunpack.c.l.b16 %v53
  %v157 = vunpack.c.h.b16 %v53
  %v158 = vunpack.c.l.b16 %v54
  %v159 = vunpack.c.h.b16 %v54
  %v160 = vunpack.c.l.b16 %v55
  %v161 = vunpack.c.h.b16 %v55
  %v162 = vunpack.c.l.b16 %v56
  %v163 = vunpack.c.h.b16 %v56
  %v164 = vunpack.c.l.b16 %v57
  %v165 = vunpack.c.h.b16 %v57
  %v166 = vpack.c.b16 %v104, %v102
  %v167 = vpack.c.b16 %v105, %v103
  %v168 = vpack.c.b16 %v108, %v106
  %v169 = vpack.c.b16 %v109, %v107
  %v170 = vpack.c.b16 %v112, %v110
  %v171 = vpack.c.b16 %v113, %v111
  %v172 = vpack.c.b16 %v116, %v114
  %v173 = vpack.c.b16 %v117, %v115
  %v174 = vpack.c.b16 %v120, %v118
  %v175 = vpack.c.b16 %v121, %v119
  %v176 = vpack.c.b16 %v124, %v122
  %v177 = vpack.c.b16 %v125, %v123
  %v178 = vpack.c.b16 %v128, %v126
  %v179 = vpack.c.b16 %v129, %v127
  %v180 = vpack.c.b16 %v132, %v130
  %v181 = vpack.c.b16 %v133, %v131
  %v182 = vpack.c.b16 %v136, %v134
  %v183 = vpack.c.b16 %v137, %v135
  %v184 = vpack.c.b16 %v140, %v138
  %v185 = vpack.c.b16 %v141, %v139
  %v186 = vpack.c.b16 %v144, %v142
  %v187 = vpack.c.b16 %v145, %v143
  %v188 = vpack.c.b16 %v148, %v146
  %v189 = vpack.c.b16 %v149, %v147
  %v190 = vpack.c.b16 %v152, %v150
  %v191 = vpack.c.b16 %v153, %v151
  %v192 = vpack.c.b16 %v156, %v154
  %v193 = vpack.c.b16 %v157, %v155
  %v194 = vpack.c.b16 %v160, %v158
  %v195 = vpack.c.b16 %v161, %v159
  %v196 = vpack.c.b16 %v164, %v162
  %v197 = vpack.c.b16 %v165, %v163
  %230 = vmatprep.subr.bf16.mxu0 %v167
  %231 = vmatpush1.bf16.msra.mxu0 %v166
  %232 = vmatprep.subr.bf16.mxu0 %v169
  %233 = vmatpush1.bf16.msra.mxu0 %v168
  %234 = vmatprep.subr.bf16.mxu0 %v171
  %235 = vmatpush1.bf16.msra.mxu0 %v170
  %236 = vmatprep.subr.bf16.mxu0 %v173
  %237 = vmatpush1.bf16.msra.mxu0 %v172
  %238 = vmatprep.subr.bf16.mxu0 %v175
  %239 = vmatpush1.bf16.msra.mxu0 %v174
  %240 = vmatprep.subr.bf16.mxu0 %v177
  %241 = vmatpush1.bf16.msra.mxu0 %v176
  %242 = vmatprep.subr.bf16.mxu0 %v179
  %243 = vmatpush1.bf16.msra.mxu0 %v178
  %244 = vmatprep.subr.bf16.mxu0 %v181
  %245 = vmatpush1.bf16.msra.mxu0 %v180
  %246 = vmatprep.subr.bf16.mxu0 %v183
  %247 = vmatpush1.bf16.msra.mxu0 %v182
  %248 = vmatprep.subr.bf16.mxu0 %v185
  %249 = vmatpush1.bf16.msra.mxu0 %v184
  %250 = vmatprep.subr.bf16.mxu0 %v187
  %251 = vmatpush1.bf16.msra.mxu0 %v186
  %252 = vmatprep.subr.bf16.mxu0 %v189
  %253 = vmatpush1.bf16.msra.mxu0 %v188
  %254 = vmatprep.subr.bf16.mxu0 %v191
  %255 = vmatpush1.bf16.msra.mxu0 %v190
  %256 = vmatprep.subr.bf16.mxu0 %v193
  %257 = vmatpush1.bf16.msra.mxu0 %v192
  %258 = vmatprep.subr.bf16.mxu0 %v195
  %259 = vmatpush1.bf16.msra.mxu0 %v194
  %260 = vmatprep.subr.bf16.mxu0 %v197
  %261 = vmatpush1.bf16.msra.mxu0 %v196
  %262 = vmatprep.mubr.bf16.mxu0 %v23
  %263 = vmatmul.mubr.bf16.gmra.mrb[0].mxu0 %v22
  %v264 = vpop.f32.mrb[0].mxu0
  %v265 = vadd.f32 %v63, %v264
  %v266 = vpop.f32.mrb[0].mxu0
  %v267 = vadd.f32 %v67, %v266
  %v268 = vpop.f32.mrb[0].mxu0
  %v269 = vadd.f32 %v63, %v268
  %v270 = vpop.f32.mrb[0].mxu0
  %v271 = vadd.f32 %v67, %v270
  %272 = vmatprep.mubr.bf16.mxu0 %v25
  %273 = vmatmul.mubr.bf16.gmra.mrb[0].mxu0 %v24
  %v274 = vpop.f32.mrb[0].mxu0
  %v275 = vadd.f32 %v63, %v274
  %v276 = vpop.f32.mrb[0].mxu0
  %v277 = vadd.f32 %v67, %v276
  %v278 = vpop.f32.mrb[0].mxu0
  %v279 = vadd.f32 %v63, %v278
  %v280 = vpop.f32.mrb[0].mxu0
  %v281 = vadd.f32 %v67, %v280
  %282 = vdwg.mxu0
  %283 = vst [vmem:[%s3] sm:$0xff] %v265
  %284 = vst [vmem:[%s3 + $0x8] sm:$0xff] %v267
  %285 = vst [vmem:[%s3 + $0x10] sm:$0xff] %v269
  %286 = vst [vmem:[%s3 + $0x18] sm:$0xff] %v271
  %287 = vst [vmem:[%s3 + $0x20] sm:$0xff] %v275
  %288 = vst [vmem:[%s3 + $0x28] sm:$0xff] %v277
  %289 = vst [vmem:[%s3 + $0x30] sm:$0xff] %v279
  %290 = vst [vmem:[%s3 + $0x38] sm:$0xff] %v281
  // Predicated region
  $region14: #{_lambda_.8} parent=0 // pred_check
    _
  $region15: #{_lambda_.8} parent=0 // pred_check_branch
    %292 = sbr.rel (0) target = $region17
  $region16: #{_lambda_.8} parent=0 // pred_region
    _
  $region17: #{_lambda_.8} parent=0 // pred_fallthru
    _
  // Predicated region
  $region18: #{_lambda_.8} parent=0 // pred_check
    _
  $region19: #{_lambda_.8} parent=0 // pred_check_branch
    %294 = sbr.rel (0) target = $region21
  $region20: #{_lambda_.8} parent=0 // pred_region
    _
  $region21: #{_lambda_.8} parent=0 // pred_fallthru
    _

// kernel: _lambda_.9
$region0: #{_lambda_.9}
  #allocation0 [shape = 'u32[]', space=smem, size = 0x4, offset = 0x4, fixed_abs, tag = 'smem constant byte address 0x4 - core index']
  #allocation1 [shape = 'u32[144,128]{1,0:T(1,128)}', space=vmem, size = 0x12000, scoped, tag = 'internal scratch']
  %s0 = inlined_call_operand.vmem [shape: f32[34,256], index: 0, kind: input, shape index: {}]
  %s1 = inlined_call_operand.vmem [shape: bf16[256,768], index: 1, kind: input, shape index: {}]
  %s2 = inlined_call_operand.vmem [shape: f32[1,768], index: 2, kind: input, shape index: {}]
  %s3 = inlined_call_operand.vmem [shape: bf16[34,768], index: 3, kind: output, shape index: {}]
  %s4 = sld [smem:[#allocation0]]
  $region22: #{_lambda_.9} parent=0
    _
  %s6 = ssub.s32 1, %s4
  %s7 = scalar_select 0, %s6, %s4
  // Predicated region
  $region2: #{_lambda_.9} parent=0 // pred_check
    _
  $region3: #{_lambda_.9} parent=0 // pred_check_branch
    %9 = sbr.rel (0) target = $region5
  $region4: #{_lambda_.9} parent=0 // pred_region
    _
  $region5: #{_lambda_.9} parent=0 // pred_fallthru
    _
  // Predicated region
  $region6: #{_lambda_.9} parent=0 // pred_check
    _
  $region7: #{_lambda_.9} parent=0 // pred_check_branch
    %11 = sbr.rel (0) target = $region9
  $region8: #{_lambda_.9} parent=0 // pred_region
    _
  $region9: #{_lambda_.9} parent=0 // pred_fallthru
    _
  // Predicated region
  $region10: #{_lambda_.9} parent=0 // pred_check
    _
  $region11: #{_lambda_.9} parent=0 // pred_check_branch
    %13 = sbr.rel (0) target = $region13
  $region12: #{_lambda_.9} parent=0 // pred_region
    _
  $region13: #{_lambda_.9} parent=0 // pred_fallthru
    _
  %v14 = vld [vmem:[%s0] sm:$0xff]
  %v15 = vld [vmem:[%s0 + $0x8] sm:$0xff]
  %v16 = vld [vmem:[%s0 + $0x10] sm:$0xff]
  %v17 = vld [vmem:[%s0 + $0x18] sm:$0xff]
  %v18 = vld [vmem:[%s0 + $0x20] sm:$0xff]
  %v19 = vld [vmem:[%s0 + $0x28] sm:$0xff]
  %v20 = vld [vmem:[%s0 + $0x30] sm:$0xff]
  %v21 = vld [vmem:[%s0 + $0x38] sm:$0xff]
  %v22 = vld [vmem:[%s0 + $0x40] sm:$0x3]
  %v23 = vld [vmem:[%s0 + $0x48] sm:$0x3]
  %v24 = vpack.c.bf16 %v16, %v14
  %v25 = vpack.c.bf16 %v17, %v15
  %v26 = vpack.c.bf16 %v20, %v18
  %v27 = vpack.c.bf16 %v21, %v19
  %v28 = vpack.c.bf16 %v22, %v22
  %v29 = vpack.c.bf16 %v23, %v23
  %v30 = vld [vmem:[%s1] sm:$0xff]
  %v31 = vld [vmem:[%s1 + $0x8] sm:$0xff]
  %v32 = vld [vmem:[%s1 + $0x10] sm:$0xff]
  %v33 = vld [vmem:[%s1 + $0x18] sm:$0xff]
  %v34 = vld [vmem:[%s1 + $0x20] sm:$0xff]
  %v35 = vld [vmem:[%s1 + $0x28] sm:$0xff]
  %v36 = vld [vmem:[%s1 + $0x30] sm:$0xff]
  %v37 = vld [vmem:[%s1 + $0x38] sm:$0xff]
  %v38 = vld [vmem:[%s1 + $0x40] sm:$0xff]
  %v39 = vld [vmem:[%s1 + $0x48] sm:$0xff]
  %v40 = vld [vmem:[%s1 + $0x50] sm:$0xff]
  %v41 = vld [vmem:[%s1 + $0x58] sm:$0xff]
  %v42 = vld [vmem:[%s1 + $0x60] sm:$0xff]
  %v43 = vld [vmem:[%s1 + $0x68] sm:$0xff]
  %v44 = vld [vmem:[%s1 + $0x70] sm:$0xff]
  %v45 = vld [vmem:[%s1 + $0x78] sm:$0xff]
  %v46 = vld [vmem:[%s1 + $0x80] sm:$0xff]
  %v47 = vld [vmem:[%s1 + $0x88] sm:$0xff]
  %v48 = vld [vmem:[%s1 + $0x90] sm:$0xff]
  %v49 = vld [vmem:[%s1 + $0x98] sm:$0xff]
  %v50 = vld [vmem:[%s1 + $0xa0] sm:$0xff]
  %v51 = vld [vmem:[%s1 + $0xa8] sm:$0xff]
  %v52 = vld [vmem:[%s1 + $0xb0] sm:$0xff]
  %v53 = vld [vmem:[%s1 + $0xb8] sm:$0xff]
  %v54 = vld [vmem:[%s1 + $0xc0] sm:$0xff]
  %v55 = vld [vmem:[%s1 + $0xc8] sm:$0xff]
  %v56 = vld [vmem:[%s1 + $0xd0] sm:$0xff]
  %v57 = vld [vmem:[%s1 + $0xd8] sm:$0xff]
  %v58 = vld [vmem:[%s1 + $0xe0] sm:$0xff]
  %v59 = vld [vmem:[%s1 + $0xe8] sm:$0xff]
  %v60 = vld [vmem:[%s1 + $0xf0] sm:$0xff]
  %v61 = vld [vmem:[%s1 + $0xf8] sm:$0xff]
  %v62 = vld [vmem:[%s1 + $0x100] sm:$0xff]
  %v63 = vld [vmem:[%s1 + $0x108] sm:$0xff]
  %v64 = vld [vmem:[%s1 + $0x110] sm:$0xff]
  %v65 = vld [vmem:[%s1 + $0x118] sm:$0xff]
  %v66 = vld [vmem:[%s1 + $0x120] sm:$0xff]
  %v67 = vld [vmem:[%s1 + $0x128] sm:$0xff]
  %v68 = vld [vmem:[%s1 + $0x130] sm:$0xff]
  %v69 = vld [vmem:[%s1 + $0x138] sm:$0xff]
  %v70 = vld [vmem:[%s1 + $0x140] sm:$0xff]
  %v71 = vld [vmem:[%s1 + $0x148] sm:$0xff]
  %v72 = vld [vmem:[%s1 + $0x150] sm:$0xff]
  %v73 = vld [vmem:[%s1 + $0x158] sm:$0xff]
  %v74 = vld [vmem:[%s1 + $0x160] sm:$0xff]
  %v75 = vld [vmem:[%s1 + $0x168] sm:$0xff]
  %v76 = vld [vmem:[%s1 + $0x170] sm:$0xff]
  %v77 = vld [vmem:[%s1 + $0x178] sm:$0xff]
  %v78 = vld [vmem:[%s1 + $0x180] sm:$0xff]
  %v79 = vld [vmem:[%s1 + $0x188] sm:$0xff]
  %v80 = vld [vmem:[%s1 + $0x190] sm:$0xff]
  %v81 = vld [vmem:[%s1 + $0x198] sm:$0xff]
  %v82 = vld [vmem:[%s1 + $0x1a0] sm:$0xff]
  %v83 = vld [vmem:[%s1 + $0x1a8] sm:$0xff]
  %v84 = vld [vmem:[%s1 + $0x1b0] sm:$0xff]
  %v85 = vld [vmem:[%s1 + $0x1b8] sm:$0xff]
  %v86 = vld [vmem:[%s1 + $0x1c0] sm:$0xff]
  %v87 = vld [vmem:[%s1 + $0x1c8] sm:$0xff]
  %v88 = vld [vmem:[%s1 + $0x1d0] sm:$0xff]
  %v89 = vld [vmem:[%s1 + $0x1d8] sm:$0xff]
  %v90 = vld [vmem:[%s1 + $0x1e0] sm:$0xff]
  %v91 = vld [vmem:[%s1 + $0x1e8] sm:$0xff]
  %v92 = vld [vmem:[%s1 + $0x1f0] sm:$0xff]
  %v93 = vld [vmem:[%s1 + $0x1f8] sm:$0xff]
  %v94 = vld [vmem:[%s1 + $0x200] sm:$0xff]
  %v95 = vld [vmem:[%s1 + $0x208] sm:$0xff]
  %v96 = vld [vmem:[%s1 + $0x210] sm:$0xff]
  %v97 = vld [vmem:[%s1 + $0x218] sm:$0xff]
  %v98 = vld [vmem:[%s1 + $0x220] sm:$0xff]
  %v99 = vld [vmem:[%s1 + $0x228] sm:$0xff]
  %v100 = vld [vmem:[%s1 + $0x230] sm:$0xff]
  %v101 = vld [vmem:[%s1 + $0x238] sm:$0xff]
  %v102 = vld [vmem:[%s1 + $0x240] sm:$0xff]
  %v103 = vld [vmem:[%s1 + $0x248] sm:$0xff]
  %v104 = vld [vmem:[%s1 + $0x250] sm:$0xff]
  %v105 = vld [vmem:[%s1 + $0x258] sm:$0xff]
  %v106 = vld [vmem:[%s1 + $0x260] sm:$0xff]
  %v107 = vld [vmem:[%s1 + $0x268] sm:$0xff]
  %v108 = vld [vmem:[%s1 + $0x270] sm:$0xff]
  %v109 = vld [vmem:[%s1 + $0x278] sm:$0xff]
  %v110 = vld [vmem:[%s1 + $0x280] sm:$0xff]
  %v111 = vld [vmem:[%s1 + $0x288] sm:$0xff]
  %v112 = vld [vmem:[%s1 + $0x290] sm:$0xff]
  %v113 = vld [vmem:[%s1 + $0x298] sm:$0xff]
  %v114 = vld [vmem:[%s1 + $0x2a0] sm:$0xff]
  %v115 = vld [vmem:[%s1 + $0x2a8] sm:$0xff]
  %v116 = vld [vmem:[%s1 + $0x2b0] sm:$0xff]
  %v117 = vld [vmem:[%s1 + $0x2b8] sm:$0xff]
  %v118 = vld [vmem:[%s1 + $0x2c0] sm:$0xff]
  %v119 = vld [vmem:[%s1 + $0x2c8] sm:$0xff]
  %v120 = vld [vmem:[%s1 + $0x2d0] sm:$0xff]
  %v121 = vld [vmem:[%s1 + $0x2d8] sm:$0xff]
  %v122 = vld [vmem:[%s1 + $0x2e0] sm:$0xff]
  %v123 = vld [vmem:[%s1 + $0x2e8] sm:$0xff]
  %v124 = vld [vmem:[%s1 + $0x2f0] sm:$0xff]
  %v125 = vld [vmem:[%s1 + $0x2f8] sm:$0xff]
  %v126 = vld [vmem:[%s2] sm:$0x3f]
  %v128 = vlaneseq
  %v129 = vshrl.u32 %v128, 7
  %v130 = vsub.s32 0, %v129
  %v131 = vrot.slane %v126, %v130
  %v132 = vlaneseq
  %v133 = vshrl.u32 %v132, 7
  %v134 = vsub.s32 1, %v133
  %v135 = vrot.slane %v126, %v134
  %v136 = vlaneseq
  %v137 = vshrl.u32 %v136, 7
  %v138 = vsub.s32 2, %v137
  %v139 = vrot.slane %v126, %v138
  %v140 = vlaneseq
  %v141 = vshrl.u32 %v140, 7
  %v142 = vsub.s32 3, %v141
  %v143 = vrot.slane %v126, %v142
  %v144 = vlaneseq
  %v145 = vshrl.u32 %v144, 7
  %v146 = vsub.s32 4, %v145
  %v147 = vrot.slane %v126, %v146
  %v148 = vlaneseq
  %v149 = vshrl.u32 %v148, 7
  %v150 = vsub.s32 5, %v149
  %v151 = vrot.slane %v126, %v150
  %v254 = vunpack.c.l.b16 %v30
  %v255 = vunpack.c.h.b16 %v30
  %v256 = vunpack.c.l.b16 %v31
  %v257 = vunpack.c.h.b16 %v31
  %v258 = vunpack.c.l.b16 %v32
  %v259 = vunpack.c.h.b16 %v32
  %v260 = vunpack.c.l.b16 %v33
  %v261 = vunpack.c.h.b16 %v33
  %v262 = vunpack.c.l.b16 %v34
  %v263 = vunpack.c.h.b16 %v34
  %v264 = vunpack.c.l.b16 %v35
  %v265 = vunpack.c.h.b16 %v35
  %v266 = vunpack.c.l.b16 %v36
  %v267 = vunpack.c.h.b16 %v36
  %v268 = vunpack.c.l.b16 %v37
  %v269 = vunpack.c.h.b16 %v37
  %v270 = vunpack.c.l.b16 %v38
  %v271 = vunpack.c.h.b16 %v38
  %v272 = vunpack.c.l.b16 %v39
  %v273 = vunpack.c.h.b16 %v39
  %v274 = vunpack.c.l.b16 %v40
  %v275 = vunpack.c.h.b16 %v40
  %v276 = vunpack.c.l.b16 %v41
  %v277 = vunpack.c.h.b16 %v41
  %v278 = vunpack.c.l.b16 %v42
  %v279 = vunpack.c.h.b16 %v42
  %v280 = vunpack.c.l.b16 %v43
  %v281 = vunpack.c.h.b16 %v43
  %v282 = vunpack.c.l.b16 %v44
  %v283 = vunpack.c.h.b16 %v44
  %v284 = vunpack.c.l.b16 %v45
  %v285 = vunpack.c.h.b16 %v45
  %v286 = vunpack.c.l.b16 %v46
  %v287 = vunpack.c.h.b16 %v46
  %v288 = vunpack.c.l.b16 %v47
  %v289 = vunpack.c.h.b16 %v47
  %v290 = vunpack.c.l.b16 %v48
  %v291 = vunpack.c.h.b16 %v48
  %v292 = vunpack.c.l.b16 %v49
  %v293 = vunpack.c.h.b16 %v49
  %v294 = vunpack.c.l.b16 %v50
  %v295 = vunpack.c.h.b16 %v50
  %v296 = vunpack.c.l.b16 %v51
  %v297 = vunpack.c.h.b16 %v51
  %v298 = vunpack.c.l.b16 %v52
  %v299 = vunpack.c.h.b16 %v52
  %v300 = vunpack.c.l.b16 %v53
  %v301 = vunpack.c.h.b16 %v53
  %v302 = vunpack.c.l.b16 %v54
  %v303 = vunpack.c.h.b16 %v54
  %v304 = vunpack.c.l.b16 %v55
  %v305 = vunpack.c.h.b16 %v55
  %v306 = vunpack.c.l.b16 %v56
  %v307 = vunpack.c.h.b16 %v56
  %v308 = vunpack.c.l.b16 %v57
  %v309 = vunpack.c.h.b16 %v57
  %v310 = vunpack.c.l.b16 %v58
  %v311 = vunpack.c.h.b16 %v58
  %v312 = vunpack.c.l.b16 %v59
  %v313 = vunpack.c.h.b16 %v59
  %v314 = vunpack.c.l.b16 %v60
  %v315 = vunpack.c.h.b16 %v60
  %v316 = vunpack.c.l.b16 %v61
  %v317 = vunpack.c.h.b16 %v61
  %v318 = vunpack.c.l.b16 %v62
  %v319 = vunpack.c.h.b16 %v62
  %v320 = vunpack.c.l.b16 %v63
  %v321 = vunpack.c.h.b16 %v63
  %v322 = vunpack.c.l.b16 %v64
  %v323 = vunpack.c.h.b16 %v64
  %v324 = vunpack.c.l.b16 %v65
  %v325 = vunpack.c.h.b16 %v65
  %v326 = vunpack.c.l.b16 %v66
  %v327 = vunpack.c.h.b16 %v66
  %v328 = vunpack.c.l.b16 %v67
  %v329 = vunpack.c.h.b16 %v67
  %v330 = vunpack.c.l.b16 %v68
  %v331 = vunpack.c.h.b16 %v68
  %v332 = vunpack.c.l.b16 %v69
  %v333 = vunpack.c.h.b16 %v69
  %v334 = vunpack.c.l.b16 %v70
  %v335 = vunpack.c.h.b16 %v70
  %v336 = vunpack.c.l.b16 %v71
  %v337 = vunpack.c.h.b16 %v71
  %v338 = vunpack.c.l.b16 %v72
  %v339 = vunpack.c.h.b16 %v72
  %v340 = vunpack.c.l.b16 %v73
  %v341 = vunpack.c.h.b16 %v73
  %v342 = vunpack.c.l.b16 %v74
  %v343 = vunpack.c.h.b16 %v74
  %v344 = vunpack.c.l.b16 %v75
  %v345 = vunpack.c.h.b16 %v75
  %v346 = vunpack.c.l.b16 %v76
  %v347 = vunpack.c.h.b16 %v76
  %v348 = vunpack.c.l.b16 %v77
  %v349 = vunpack.c.h.b16 %v77
  %v350 = vunpack.c.l.b16 %v78
  %v351 = vunpack.c.h.b16 %v78
  %v352 = vunpack.c.l.b16 %v79
  %v353 = vunpack.c.h.b16 %v79
  %v354 = vunpack.c.l.b16 %v80
  %v355 = vunpack.c.h.b16 %v80
  %v356 = vunpack.c.l.b16 %v81
  %v357 = vunpack.c.h.b16 %v81
  %v358 = vunpack.c.l.b16 %v82
  %v359 = vunpack.c.h.b16 %v82
  %v360 = vunpack.c.l.b16 %v83
  %v361 = vunpack.c.h.b16 %v83
  %v362 = vunpack.c.l.b16 %v84
  %v363 = vunpack.c.h.b16 %v84
  %v364 = vunpack.c.l.b16 %v85
  %v365 = vunpack.c.h.b16 %v85
  %v366 = vunpack.c.l.b16 %v86
  %v367 = vunpack.c.h.b16 %v86
  %v368 = vunpack.c.l.b16 %v87
  %v369 = vunpack.c.h.b16 %v87
  %v370 = vunpack.c.l.b16 %v88
  %v371 = vunpack.c.h.b16 %v88
  %v372 = vunpack.c.l.b16 %v89
  %v373 = vunpack.c.h.b16 %v89
  %v374 = vunpack.c.l.b16 %v90
  %v375 = vunpack.c.h.b16 %v90
  %v376 = vunpack.c.l.b16 %v91
  %v377 = vunpack.c.h.b16 %v91
  %v378 = vunpack.c.l.b16 %v92
  %v379 = vunpack.c.h.b16 %v92
  %v380 = vunpack.c.l.b16 %v93
  %v381 = vunpack.c.h.b16 %v93
  %v382 = vunpack.c.l.b16 %v94
  %v383 = vunpack.c.h.b16 %v94
  %v384 = vunpack.c.l.b16 %v95
  %v385 = vunpack.c.h.b16 %v95
  %v386 = vunpack.c.l.b16 %v96
  %v387 = vunpack.c.h.b16 %v96
  %v388 = vunpack.c.l.b16 %v97
  %v389 = vunpack.c.h.b16 %v97
  %v390 = vunpack.c.l.b16 %v98
  %v391 = vunpack.c.h.b16 %v98
  %v392 = vunpack.c.l.b16 %v99
  %v393 = vunpack.c.h.b16 %v99
  %v394 = vunpack.c.l.b16 %v100
  %v395 = vunpack.c.h.b16 %v100
  %v396 = vunpack.c.l.b16 %v101
  %v397 = vunpack.c.h.b16 %v101
  %v398 = vunpack.c.l.b16 %v102
  %v399 = vunpack.c.h.b16 %v102
  %v400 = vunpack.c.l.b16 %v103
  %v401 = vunpack.c.h.b16 %v103
  %v402 = vunpack.c.l.b16 %v104
  %v403 = vunpack.c.h.b16 %v104
  %v404 = vunpack.c.l.b16 %v105
  %v405 = vunpack.c.h.b16 %v105
  %v406 = vunpack.c.l.b16 %v106
  %v407 = vunpack.c.h.b16 %v106
  %v408 = vunpack.c.l.b16 %v107
  %v409 = vunpack.c.h.b16 %v107
  %v410 = vunpack.c.l.b16 %v108
  %v411 = vunpack.c.h.b16 %v108
  %v412 = vunpack.c.l.b16 %v109
  %v413 = vunpack.c.h.b16 %v109
  %v414 = vunpack.c.l.b16 %v110
  %v415 = vunpack.c.h.b16 %v110
  %v416 = vunpack.c.l.b16 %v111
  %v417 = vunpack.c.h.b16 %v111
  %v418 = vunpack.c.l.b16 %v112
  %v419 = vunpack.c.h.b16 %v112
  %v420 = vunpack.c.l.b16 %v113
  %v421 = vunpack.c.h.b16 %v113
  %v422 = vunpack.c.l.b16 %v114
  %v423 = vunpack.c.h.b16 %v114
  %v424 = vunpack.c.l.b16 %v115
  %v425 = vunpack.c.h.b16 %v115
  %v426 = vunpack.c.l.b16 %v116
  %v427 = vunpack.c.h.b16 %v116
  %v428 = vunpack.c.l.b16 %v117
  %v429 = vunpack.c.h.b16 %v117
  %v430 = vunpack.c.l.b16 %v118
  %v431 = vunpack.c.h.b16 %v118
  %v432 = vunpack.c.l.b16 %v119
  %v433 = vunpack.c.h.b16 %v119
  %v434 = vunpack.c.l.b16 %v120
  %v435 = vunpack.c.h.b16 %v120
  %v436 = vunpack.c.l.b16 %v121
  %v437 = vunpack.c.h.b16 %v121
  %v438 = vunpack.c.l.b16 %v122
  %v439 = vunpack.c.h.b16 %v122
  %v440 = vunpack.c.l.b16 %v123
  %v441 = vunpack.c.h.b16 %v123
  %v442 = vunpack.c.l.b16 %v124
  %v443 = vunpack.c.h.b16 %v124
  %v444 = vunpack.c.l.b16 %v125
  %v445 = vunpack.c.h.b16 %v125
  %v446 = vpack.c.b16 %v260, %v254
  %v447 = vpack.c.b16 %v261, %v255
  %v448 = vpack.c.b16 %v262, %v256
  %v449 = vpack.c.b16 %v263, %v257
  %v450 = vpack.c.b16 %v264, %v258
  %v451 = vpack.c.b16 %v265, %v259
  %v452 = vpack.c.b16 %v272, %v266
  %v453 = vpack.c.b16 %v273, %v267
  %v454 = vpack.c.b16 %v274, %v268
  %v455 = vpack.c.b16 %v275, %v269
  %v456 = vpack.c.b16 %v276, %v270
  %v457 = vpack.c.b16 %v277, %v271
  %v458 = vpack.c.b16 %v284, %v278
  %v459 = vpack.c.b16 %v285, %v279
  %v460 = vpack.c.b16 %v286, %v280
  %v461 = vpack.c.b16 %v287, %v281
  %v462 = vpack.c.b16 %v288, %v282
  %v463 = vpack.c.b16 %v289, %v283
  %v464 = vpack.c.b16 %v296, %v290
  %v465 = vpack.c.b16 %v297, %v291
  %v466 = vpack.c.b16 %v298, %v292
  %v467 = vpack.c.b16 %v299, %v293
  %v468 = vpack.c.b16 %v300, %v294
  %v469 = vpack.c.b16 %v301, %v295
  %v470 = vpack.c.b16 %v308, %v302
  %v471 = vpack.c.b16 %v309, %v303
  %v472 = vpack.c.b16 %v310, %v304
  %v473 = vpack.c.b16 %v311, %v305
  %v474 = vpack.c.b16 %v312, %v306
  %v475 = vpack.c.b16 %v313, %v307
  %v476 = vpack.c.b16 %v320, %v314
  %v477 = vpack.c.b16 %v321, %v315
  %v478 = vpack.c.b16 %v322, %v316
  %v479 = vpack.c.b16 %v323, %v317
  %v480 = vpack.c.b16 %v324, %v318
  %v481 = vpack.c.b16 %v325, %v319
  %v482 = vpack.c.b16 %v332, %v326
  %v483 = vpack.c.b16 %v333, %v327
  %v484 = vpack.c.b16 %v334, %v328
  %v485 = vpack.c.b16 %v335, %v329
  %v486 = vpack.c.b16 %v336, %v330
  %v487 = vpack.c.b16 %v337, %v331
  %v488 = vpack.c.b16 %v344, %v338
  %v489 = vpack.c.b16 %v345, %v339
  %v490 = vpack.c.b16 %v346, %v340
  %v491 = vpack.c.b16 %v347, %v341
  %v492 = vpack.c.b16 %v348, %v342
  %v493 = vpack.c.b16 %v349, %v343
  %v494 = vpack.c.b16 %v356, %v350
  %v495 = vpack.c.b16 %v357, %v351
  %v496 = vpack.c.b16 %v358, %v352
  %v497 = vpack.c.b16 %v359, %v353
  %v498 = vpack.c.b16 %v360, %v354
  %v499 = vpack.c.b16 %v361, %v355
  %v500 = vpack.c.b16 %v368, %v362
  %v501 = vpack.c.b16 %v369, %v363
  %v502 = vpack.c.b16 %v370, %v364
  %v503 = vpack.c.b16 %v371, %v365
  %v504 = vpack.c.b16 %v372, %v366
  %v505 = vpack.c.b16 %v373, %v367
  %v506 = vpack.c.b16 %v380, %v374
  %v507 = vpack.c.b16 %v381, %v375
  %v508 = vpack.c.b16 %v382, %v376
  %v509 = vpack.c.b16 %v383, %v377
  %v510 = vpack.c.b16 %v384, %v378
  %v511 = vpack.c.b16 %v385, %v379
  %v512 = vpack.c.b16 %v392, %v386
  %v513 = vpack.c.b16 %v393, %v387
  %v514 = vpack.c.b16 %v394, %v388
  %v515 = vpack.c.b16 %v395, %v389
  %v516 = vpack.c.b16 %v396, %v390
  %v517 = vpack.c.b16 %v397, %v391
  %v518 = vpack.c.b16 %v404, %v398
  %v519 = vpack.c.b16 %v405, %v399
  %v520 = vpack.c.b16 %v406, %v400
  %v521 = vpack.c.b16 %v407, %v401
  %v522 = vpack.c.b16 %v408, %v402
  %v523 = vpack.c.b16 %v409, %v403
  %v524 = vpack.c.b16 %v416, %v410
  %v525 = vpack.c.b16 %v417, %v411
  %v526 = vpack.c.b16 %v418, %v412
  %v527 = vpack.c.b16 %v419, %v413
  %v528 = vpack.c.b16 %v420, %v414
  %v529 = vpack.c.b16 %v421, %v415
  %v530 = vpack.c.b16 %v428, %v422
  %v531 = vpack.c.b16 %v429, %v423
  %v532 = vpack.c.b16 %v430, %v424
  %v533 = vpack.c.b16 %v431, %v425
  %v534 = vpack.c.b16 %v432, %v426
  %v535 = vpack.c.b16 %v433, %v427
  %v536 = vpack.c.b16 %v440, %v434
  %v537 = vpack.c.b16 %v441, %v435
  %v538 = vpack.c.b16 %v442, %v436
  %v539 = vpack.c.b16 %v443, %v437
  %v540 = vpack.c.b16 %v444, %v438
  %v541 = vpack.c.b16 %v445, %v439
  %638 = vmatprep.subr.bf16.mxu0 %v447
  %639 = vmatpush1.bf16.msra.mxu0 %v446
  %640 = vmatprep.subr.bf16.mxu0 %v453
  %641 = vmatpush1.bf16.msra.mxu0 %v452
  %642 = vmatprep.subr.bf16.mxu0 %v459
  %643 = vmatpush1.bf16.msra.mxu0 %v458
  %644 = vmatprep.subr.bf16.mxu0 %v465
  %645 = vmatpush1.bf16.msra.mxu0 %v464
  %646 = vmatprep.subr.bf16.mxu0 %v471
  %647 = vmatpush1.bf16.msra.mxu0 %v470
  %648 = vmatprep.subr.bf16.mxu0 %v477
  %649 = vmatpush1.bf16.msra.mxu0 %v476
  %650 = vmatprep.subr.bf16.mxu0 %v483
  %651 = vmatpush1.bf16.msra.mxu0 %v482
  %652 = vmatprep.subr.bf16.mxu0 %v489
  %653 = vmatpush1.bf16.msra.mxu0 %v488
  %654 = vmatprep.subr.bf16.mxu0 %v495
  %655 = vmatpush1.bf16.msra.mxu0 %v494
  %656 = vmatprep.subr.bf16.mxu0 %v501
  %657 = vmatpush1.bf16.msra.mxu0 %v500
  %658 = vmatprep.subr.bf16.mxu0 %v507
  %659 = vmatpush1.bf16.msra.mxu0 %v506
  %660 = vmatprep.subr.bf16.mxu0 %v513
  %661 = vmatpush1.bf16.msra.mxu0 %v512
  %662 = vmatprep.subr.bf16.mxu0 %v519
  %663 = vmatpush1.bf16.msra.mxu0 %v518
  %664 = vmatprep.subr.bf16.mxu0 %v525
  %665 = vmatpush1.bf16.msra.mxu0 %v524
  %666 = vmatprep.subr.bf16.mxu0 %v531
  %667 = vmatpush1.bf16.msra.mxu0 %v530
  %668 = vmatprep.subr.bf16.mxu0 %v537
  %669 = vmatpush1.bf16.msra.mxu0 %v536
  %670 = vmatprep.mubr.bf16.mxu0 %v25
  %671 = vmatmul.mubr.bf16.gmra.mrb[0].mxu0 %v24
  %v672 = vpop.f32.mrb[0].mxu0
  %v673 = vadd.f32 %v131, %v672
  %v674 = vpop.f32.mrb[0].mxu0
  %v675 = vadd.f32 %v135, %v674
  %v676 = vpop.f32.mrb[0].mxu0
  %v677 = vadd.f32 %v131, %v676
  %v678 = vpop.f32.mrb[0].mxu0
  %v679 = vadd.f32 %v135, %v678
  %680 = vmatprep.mubr.bf16.mxu0 %v27
  %681 = vmatmul.mubr.bf16.gmra.mrb[0].mxu0 %v26
  %v682 = vpop.f32.mrb[0].mxu0
  %v683 = vadd.f32 %v131, %v682
  %v684 = vpop.f32.mrb[0].mxu0
  %v685 = vadd.f32 %v135, %v684
  %v686 = vpop.f32.mrb[0].mxu0
  %v687 = vadd.f32 %v131, %v686
  %v688 = vpop.f32.mrb[0].mxu0
  %v689 = vadd.f32 %v135, %v688
  %690 = vmatprep.mubr.bf16.mxu0 %v29
  %691 = vmatmul.mubr.bf16.gmra.mrb[0].mxu0 %v28
  %v692 = vpop.f32.mrb[0].mxu0
  %v693 = vadd.f32 %v131, %v692
  %v694 = vpop.f32.mrb[0].mxu0
  %v695 = vadd.f32 %v135, %v694
  %v696 = vpop.f32.mrb[0].mxu0
  %v697 = vpop.f32.mrb[0].mxu0
  %698 = vdwg.mxu0
  %699 = vmatprep.subr.bf16.mxu0 %v449
  %700 = vmatpush1.bf16.msra.mxu0 %v448
  %701 = vmatprep.subr.bf16.mxu0 %v455
  %702 = vmatpush1.bf16.msra.mxu0 %v454
  %703 = vmatprep.subr.bf16.mxu0 %v461
  %704 = vmatpush1.bf16.msra.mxu0 %v460
  %705 = vmatprep.subr.bf16.mxu0 %v467
  %706 = vmatpush1.bf16.msra.mxu0 %v466
  %707 = vmatprep.subr.bf16.mxu0 %v473
  %708 = vmatpush1.bf16.msra.mxu0 %v472
  %709 = vmatprep.subr.bf16.mxu0 %v479
  %710 = vmatpush1.bf16.msra.mxu0 %v478
  %711 = vmatprep.subr.bf16.mxu0 %v485
  %712 = vmatpush1.bf16.msra.mxu0 %v484
  %713 = vmatprep.subr.bf16.mxu0 %v491
  %714 = vmatpush1.bf16.msra.mxu0 %v490
  %715 = vmatprep.subr.bf16.mxu0 %v497
  %716 = vmatpush1.bf16.msra.mxu0 %v496
  %717 = vmatprep.subr.bf16.mxu0 %v503
  %718 = vmatpush1.bf16.msra.mxu0 %v502
  %719 = vmatprep.subr.bf16.mxu0 %v509
  %720 = vmatpush1.bf16.msra.mxu0 %v508
  %721 = vmatprep.subr.bf16.mxu0 %v515
  %722 = vmatpush1.bf16.msra.mxu0 %v514
  %723 = vmatprep.subr.bf16.mxu0 %v521
  %724 = vmatpush1.bf16.msra.mxu0 %v520
  %725 = vmatprep.subr.bf16.mxu0 %v527
  %726 = vmatpush1.bf16.msra.mxu0 %v526
  %727 = vmatprep.subr.bf16.mxu0 %v533
  %728 = vmatpush1.bf16.msra.mxu0 %v532
  %729 = vmatprep.subr.bf16.mxu0 %v539
  %730 = vmatpush1.bf16.msra.mxu0 %v538
  %731 = vmatprep.mubr.bf16.mxu0 %v25
  %732 = vmatmul.mubr.bf16.gmra.mrb[0].mxu0 %v24
  %v733 = vpop.f32.mrb[0].mxu0
  %v734 = vadd.f32 %v139, %v733
  %v735 = vpop.f32.mrb[0].mxu0
  %v736 = vadd.f32 %v143, %v735
  %v737 = vpop.f32.mrb[0].mxu0
  %v738 = vadd.f32 %v139, %v737
  %v739 = vpop.f32.mrb[0].mxu0
  %v740 = vadd.f32 %v143, %v739
  %741 = vmatprep.mubr.bf16.mxu0 %v27
  %742 = vmatmul.mubr.bf16.gmra.mrb[0].mxu0 %v26
  %v743 = vpop.f32.mrb[0].mxu0
  %v744 = vadd.f32 %v139, %v743
  %v745 = vpop.f32.mrb[0].mxu0
  %v746 = vadd.f32 %v143, %v745
  %v747 = vpop.f32.mrb[0].mxu0
  %v748 = vadd.f32 %v139, %v747
  %v749 = vpop.f32.mrb[0].mxu0
  %v750 = vadd.f32 %v143, %v749
  %751 = vmatprep.mubr.bf16.mxu0 %v29
  %752 = vmatmul.mubr.bf16.gmra.mrb[0].mxu0 %v28
  %v753 = vpop.f32.mrb[0].mxu0
  %v754 = vadd.f32 %v139, %v753
  %v755 = vpop.f32.mrb[0].mxu0
  %v756 = vadd.f32 %v143, %v755
  %v757 = vpop.f32.mrb[0].mxu0
  %v758 = vpop.f32.mrb[0].mxu0
  %759 = vdwg.mxu0
  %760 = vmatprep.subr.bf16.mxu0 %v451
  %761 = vmatpush1.bf16.msra.mxu0 %v450
  %762 = vmatprep.subr.bf16.mxu0 %v457
  %763 = vmatpush1.bf16.msra.mxu0 %v456
  %764 = vmatprep.subr.bf16.mxu0 %v463
  %765 = vmatpush1.bf16.msra.mxu0 %v462
  %766 = vmatprep.subr.bf16.mxu0 %v469
  %767 = vmatpush1.bf16.msra.mxu0 %v468
  %768 = vmatprep.subr.bf16.mxu0 %v475
  %769 = vmatpush1.bf16.msra.mxu0 %v474
  %770 = vmatprep.subr.bf16.mxu0 %v481
  %771 = vmatpush1.bf16.msra.mxu0 %v480
  %772 = vmatprep.subr.bf16.mxu0 %v487
  %773 = vmatpush1.bf16.msra.mxu0 %v486
  %774 = vmatprep.subr.bf16.mxu0 %v493
  %775 = vmatpush1.bf16.msra.mxu0 %v492
  %776 = vmatprep.subr.bf16.mxu0 %v499
  %777 = vmatpush1.bf16.msra.mxu0 %v498
  %778 = vmatprep.subr.bf16.mxu0 %v505
  %779 = vmatpush1.bf16.msra.mxu0 %v504
  %780 = vmatprep.subr.bf16.mxu0 %v511
  %781 = vmatpush1.bf16.msra.mxu0 %v510
  %782 = vmatprep.subr.bf16.mxu0 %v517
  %783 = vmatpush1.bf16.msra.mxu0 %v516
  %784 = vmatprep.subr.bf16.mxu0 %v523
  %785 = vmatpush1.bf16.msra.mxu0 %v522
  %786 = vmatprep.subr.bf16.mxu0 %v529
  %787 = vmatpush1.bf16.msra.mxu0 %v528
  %788 = vmatprep.subr.bf16.mxu0 %v535
  %789 = vmatpush1.bf16.msra.mxu0 %v534
  %790 = vmatprep.subr.bf16.mxu0 %v541
  %791 = vmatpush1.bf16.msra.mxu0 %v540
  %792 = vmatprep.mubr.bf16.mxu0 %v25
  %793 = vmatmul.mubr.bf16.gmra.mrb[0].mxu0 %v24
  %v794 = vpop.f32.mrb[0].mxu0
  %v795 = vadd.f32 %v147, %v794
  %v796 = vpop.f32.mrb[0].mxu0
  %v797 = vadd.f32 %v151, %v796
  %v798 = vpop.f32.mrb[0].mxu0
  %v799 = vadd.f32 %v147, %v798
  %v800 = vpop.f32.mrb[0].mxu0
  %v801 = vadd.f32 %v151, %v800
  %802 = vmatprep.mubr.bf16.mxu0 %v27
  %803 = vmatmul.mubr.bf16.gmra.mrb[0].mxu0 %v26
  %v804 = vpop.f32.mrb[0].mxu0
  %v805 = vadd.f32 %v147, %v804
  %v806 = vpop.f32.mrb[0].mxu0
  %v807 = vadd.f32 %v151, %v806
  %v808 = vpop.f32.mrb[0].mxu0
  %v809 = vadd.f32 %v147, %v808
  %v810 = vpop.f32.mrb[0].mxu0
  %v811 = vadd.f32 %v151, %v810
  %812 = vmatprep.mubr.bf16.mxu0 %v29
  %813 = vmatmul.mubr.bf16.gmra.mrb[0].mxu0 %v28
  %v814 = vpop.f32.mrb[0].mxu0
  %v815 = vadd.f32 %v147, %v814
  %v816 = vpop.f32.mrb[0].mxu0
  %v817 = vadd.f32 %v151, %v816
  %v818 = vpop.f32.mrb[0].mxu0
  %v819 = vpop.f32.mrb[0].mxu0
  %820 = vdwg.mxu0
  %v821 = vpack.c.bf16 %v677, %v673
  %v822 = vpack.c.bf16 %v679, %v675
  %v823 = vpack.c.bf16 %v738, %v734
  %v824 = vpack.c.bf16 %v740, %v736
  %v825 = vpack.c.bf16 %v799, %v795
  %v826 = vpack.c.bf16 %v801, %v797
  %v827 = vpack.c.bf16 %v687, %v683
  %v828 = vpack.c.bf16 %v689, %v685
  %v829 = vpack.c.bf16 %v748, %v744
  %v830 = vpack.c.bf16 %v750, %v746
  %v831 = vpack.c.bf16 %v809, %v805
  %v832 = vpack.c.bf16 %v811, %v807
  %v833 = vpack.c.bf16 %v693, %v693
  %v834 = vpack.c.bf16 %v695, %v695
  %v835 = vpack.c.bf16 %v754, %v754
  %v836 = vpack.c.bf16 %v756, %v756
  %v837 = vpack.c.bf16 %v815, %v815
  %v838 = vpack.c.bf16 %v817, %v817
  %v857 = vunpack.c.l.b16 %v821
  %v858 = vunpack.c.l.b16 %v822
  %v859 = vunpack.c.l.b16 %v823
  %v860 = vunpack.c.l.b16 %v824
  %v861 = vunpack.c.l.b16 %v825
  %v862 = vunpack.c.l.b16 %v826
  %v863 = vunpack.c.h.b16 %v821
  %v864 = vunpack.c.h.b16 %v822
  %v865 = vunpack.c.h.b16 %v823
  %v866 = vunpack.c.h.b16 %v824
  %v867 = vunpack.c.h.b16 %v825
  %v868 = vunpack.c.h.b16 %v826
  %v869 = vunpack.c.l.b16 %v827
  %v870 = vunpack.c.l.b16 %v828
  %v871 = vunpack.c.l.b16 %v829
  %v872 = vunpack.c.l.b16 %v830
  %v873 = vunpack.c.l.b16 %v831
  %v874 = vunpack.c.l.b16 %v832
  %v875 = vunpack.c.h.b16 %v827
  %v876 = vunpack.c.h.b16 %v828
  %v877 = vunpack.c.h.b16 %v829
  %v878 = vunpack.c.h.b16 %v830
  %v879 = vunpack.c.h.b16 %v831
  %v880 = vunpack.c.h.b16 %v832
  %v881 = vunpack.c.l.b16 %v833
  %v882 = vunpack.c.l.b16 %v834
  %v883 = vunpack.c.l.b16 %v835
  %v884 = vunpack.c.l.b16 %v836
  %v885 = vunpack.c.l.b16 %v837
  %v886 = vunpack.c.l.b16 %v838
  %v887 = vpack.c.b16 %v858, %v857
  %v888 = vpack.c.b16 %v860, %v859
  %v889 = vpack.c.b16 %v862, %v861
  %v890 = vpack.c.b16 %v864, %v863
  %v891 = vpack.c.b16 %v866, %v865
  %v892 = vpack.c.b16 %v868, %v867
  %v893 = vpack.c.b16 %v870, %v869
  %v894 = vpack.c.b16 %v872, %v871
  %v895 = vpack.c.b16 %v874, %v873
  %v896 = vpack.c.b16 %v876, %v875
  %v897 = vpack.c.b16 %v878, %v877
  %v898 = vpack.c.b16 %v880, %v879
  %v899 = vpack.c.b16 %v882, %v881
  %v900 = vpack.c.b16 %v884, %v883
  %v901 = vpack.c.b16 %v886, %v885
  %917 = vst [vmem:[%s3] sm:$0xff] %v887
  %918 = vst [vmem:[%s3 + $0x8] sm:$0xff] %v888
  %919 = vst [vmem:[%s3 + $0x10] sm:$0xff] %v889
  %920 = vst [vmem:[%s3 + $0x18] sm:$0xff] %v890
  %921 = vst [vmem:[%s3 + $0x20] sm:$0xff] %v891
  %922 = vst [vmem:[%s3 + $0x28] sm:$0xff] %v892
  %923 = vst [vmem:[%s3 + $0x30] sm:$0xff] %v893
  %924 = vst [vmem:[%s3 + $0x38] sm:$0xff] %v894
  %925 = vst [vmem:[%s3 + $0x40] sm:$0xff] %v895
  %926 = vst [vmem:[%s3 + $0x48] sm:$0xff] %v896
  %927 = vst [vmem:[%s3 + $0x50] sm:$0xff] %v897
  %928 = vst [vmem:[%s3 + $0x58] sm:$0xff] %v898
  %929 = vst [vmem:[%s3 + $0x60] sm:$0x11] %v899
  %930 = vst [vmem:[%s3 + $0x68] sm:$0x11] %v900
  %931 = vst [vmem:[%s3 + $0x70] sm:$0x11] %v901
  // Predicated region
  $region14: #{_lambda_.9} parent=0 // pred_check
    _
  $region15: #{_lambda_.9} parent=0 // pred_check_branch
    %933 = sbr.rel (0) target = $region17
  $region16: #{_lambda_.9} parent=0 // pred_region
    _
  $region17: #{_lambda_.9} parent=0 // pred_fallthru
    _
  // Predicated region
  $region18: #{_lambda_.9} parent=0 // pred_check
    _
  $region19: #{_lambda_.9} parent=0 // pred_check_branch
    %935 = sbr.rel (0) target = $region21
  $region20: #{_lambda_.9} parent=0 // pred_region
    _
  $region21: #{_lambda_.9} parent=0 // pred_fallthru
    _

// kernel: _lambda_.10
$region0: #{_lambda_.10}
  #allocation0 [shape = 'u32[]', space=smem, size = 0x4, offset = 0x4, fixed_abs, tag = 'smem constant byte address 0x4 - core index']
  #allocation1 [shape = 'u32[144,128]{1,0:T(1,128)}', space=vmem, size = 0x12000, scoped, tag = 'internal scratch']
  %s0 = inlined_call_operand.vmem [shape: bf16[2,17,768], index: 0, kind: input, shape index: {}]
  %s1 = inlined_call_operand.vmem [shape: bf16[2,17,256], index: 1, kind: output, shape index: {}]
  %s2 = sld [smem:[#allocation0]]
  $region37: #{_lambda_.10} parent=0
    _
  %s4 = ssub.s32 1, %s2
  %s5 = scalar_select 0, %s4, %s2
  loop: start=0, step=1, limit=4
  $region2: #{_lambda_.10} parent=0 // loop_pre_header
    _
  $region3: #{_lambda_.10} parent=0 // loop_header
    %s7 = sphi 0, %s11
    %p8 = scmp.ge.s32.totalorder %s7, 4
    %s17 = sphi 0, %s19
    %s20 = sphi 0, %s17
    %s21 = sphi 0, %s20
    %s37 = sphi 0, %s21
    %s43 = sphi 0, %s45
    %s46 = sphi 0, %s43
    %s47 = sphi 0, %s46
    %s63 = sphi 0, %s47
  $region4: #{_lambda_.10} parent=0 // loop_header_branch
    %10 = sbr.rel (%p8) target = $region8
  $region5: #{_lambda_.10} parent=0 // loop_body
    %s12 = ssub.s32 %s7, 1
    %s13 = ssub.s32 %s7, 2
    %s14 = sadd.s32 %s7, 1
    %s15 = ssub.s32 %s7, %s14
    %p16 = scmp.eq.s32.totalorder %s15, 0
    %s18 = sadd.s32 %s17, 1
    %s19 = scalar_select %p16, %s17, %s18
    %p22 = pneg %p16
    %p23 = scmp.eq.s32.totalorder %s7, 1
    %p24 = por %p22, %p23
    %p25 = scmp.ne.s32.totalorder %s17, %s20
    %p26 = scmp.eq.s32.totalorder %s7, 0
    %p27 = por %p25, %p26
    %p28 = scmp.ne.s32.totalorder %s17, %s20
    %p29 = scmp.eq.s32.totalorder %s12, 1
    %p30 = por %p28, %p29
    %p31 = scmp.ne.s32.totalorder %s20, %s21
    %p32 = scmp.eq.s32.totalorder %s12, 0
    %p33 = por %p31, %p32
    %p34 = scmp.ne.s32.totalorder %s20, %s21
    %p35 = scmp.eq.s32.totalorder %s13, 1
    %p36 = por %p34, %p35
    %p38 = scmp.ne.s32.totalorder %s21, %s37
    %p39 = scmp.eq.s32.totalorder %s13, 0
    %p40 = por %p38, %p39
    %s41 = ssub.s32 %s7, %s14
    %p42 = scmp.eq.s32.totalorder %s41, 0
    %s44 = sadd.s32 %s43, 1
    %s45 = scalar_select %p42, %s43, %s44
    %p48 = pneg %p42
    %p49 = scmp.eq.s32.totalorder %s7, 1
    %p50 = por %p48, %p49
    %p51 = scmp.ne.s32.totalorder %s43, %s46
    %p52 = scmp.eq.s32.totalorder %s7, 0
    %p53 = por %p51, %p52
    %p54 = scmp.ne.s32.totalorder %s43, %s46
    %p55 = scmp.eq.s32.totalorder %s12, 1
    %p56 = por %p54, %p55
    %p57 = scmp.ne.s32.totalorder %s46, %s47
    %p58 = scmp.eq.s32.totalorder %s12, 0
    %p59 = por %p57, %p58
    %p60 = scmp.ne.s32.totalorder %s46, %s47
    %p61 = scmp.eq.s32.totalorder %s13, 1
    %p62 = por %p60, %p61
    %p64 = scmp.ne.s32.totalorder %s47, %s63
    %p65 = scmp.eq.s32.totalorder %s13, 0
    %p66 = por %p64, %p65
    %p67 = scmp.le.s32.totalorder 1, %s7
    %p68 = scmp.lt.s32.totalorder %s7, 3
    %p69 = pnand %p67, %p68
    %p70 = pneg %p69
    // Predicated region
    $region9: #{_lambda_.10} parent=5 // pred_check
      _
    $region10: #{_lambda_.10} parent=5 // pred_check_branch
      %72 = sbr.rel (%p69) target = $region12
    $region11: #{_lambda_.10} parent=5 // pred_region
      %s73 = ssub.s32 %s7, 1
    $region12: #{_lambda_.10} parent=5 // pred_fallthru
      _
    %p74 = scmp.lt.s32.totalorder %s7, 2
    // Predicated region
    $region13: #{_lambda_.10} parent=5 // pred_check
      %p75 = pneg %p74
    $region14: #{_lambda_.10} parent=5 // pred_check_branch
      %77 = sbr.rel (%p75) target = $region16
    $region15: #{_lambda_.10} parent=5 // pred_region
      // Predicated region
      $region17: #{_lambda_.10} parent=15 // pred_check
        %p78 = pneg %p27
      $region18: #{_lambda_.10} parent=15 // pred_check_branch
        %80 = sbr.rel (%p78) target = $region20
      $region19: #{_lambda_.10} parent=15 // pred_region
        %p81 = scmp.lt.s32.totalorder %s7, 1
        %s82 = scalar_select %p81, %s7, 1
        %s83 = smul.addr %s82, 18
        %s84 = smul.addr %s83, 4
        %s85 = scalar_lea.vmem %s0, %s84
      $region20: #{_lambda_.10} parent=15 // pred_fallthru
        _
    $region16: #{_lambda_.10} parent=5 // pred_fallthru
      _
    %p86 = scmp.le.s32.totalorder 1, %s7
    %p87 = scmp.lt.s32.totalorder %s7, 3
    %p88 = pnand %p86, %p87
    %p89 = pneg %p88
    // Predicated region
    $region21: #{_lambda_.10} parent=5 // pred_check
      _
    $region22: #{_lambda_.10} parent=5 // pred_check_branch
      %91 = sbr.rel (%p88) target = $region24
    $region23: #{_lambda_.10} parent=5 // pred_region
      %s92 = ssub.s32 %s7, 1
      %p93 = scmp.lt.s32.totalorder %s12, 1
      %s94 = scalar_select %p93, %s12, 1
      %s95 = smul.addr %s94, 18
      %s96 = smul.addr %s95, 4
      %s97 = scalar_lea.vmem %s0, %s96
      %p98 = pneg %p33
      %p99 = pneg %p30
      %p100 = pneg %p59
      %p101 = pneg %p56
      %p102 = scmp.lt.s32.totalorder %s12, 1
      %s103 = scalar_select %p102, %s12, 1
      %s104 = smul.addr %s103, 6
      %s105 = smul.addr %s104, 4
      %s106 = scalar_lea.vmem %s1, %s105
      %p107 = scmp.lt.s32.totalorder %s12, 1
      %s108 = scalar_select %p107, %s12, 1
      %s109 = smul.addr %s108, 18
      %s110 = smul.addr %s109, 4
      %s111 = scalar_lea.vmem %s0, %s110
      %p112 = scmp.lt.s32.totalorder %s12, 1
      %s113 = scalar_select %p112, %s12, 1
      %s114 = smul.addr %s113, 6
      %s115 = smul.addr %s114, 4
      %s116 = scalar_lea.vmem %s1, %s115
      %v118 = vld [vmem:[%s111] sm:$0xf]
      %v119 = vld [vmem:[%s111 + $0x18] sm:$0xf]
      %v120 = vld [vmem:[%s111 + $0x30] sm:$0x1]
      %v121 = vld [vmem:[%s111 + $0x8] sm:$0xf]
      %v122 = vld [vmem:[%s111 + $0x20] sm:$0xf]
      %v123 = vld [vmem:[%s111 + $0x38] sm:$0x1]
      %v124 = vld [vmem:[%s111 + $0x10] sm:$0xf]
      %v125 = vld [vmem:[%s111 + $0x28] sm:$0xf]
      %v126 = vld [vmem:[%s111 + $0x40] sm:$0x1]
      %v130 = vunpack.c.l.b16 %v118
      %v131 = vunpack.c.l.b16 %v119
      %v132 = vunpack.c.l.b16 %v120
      %v133 = vpack.c.b16 %v131, %v130
      %v134 = vpack.c.b16 %v132, %v132
      %v140 = vunpack.c.l.b16 %v121
      %v141 = vunpack.c.l.b16 %v122
      %v142 = vunpack.c.l.b16 %v123
      %v143 = vpack.c.b16 %v141, %v140
      %v144 = vpack.c.b16 %v142, %v142
      %147 = vmatprep.subr.bf16.mxu0 0
      %148 = vmatpush1.bf16.xpose.msra.mxu0 %v143
      %149 = vmatprep.subr.bf16.mxu0 0
      %150 = vmatpush1.bf16.xpose.msra.mxu0 %v144
      %151 = vmatprep.subr.bf16.mxu0 0
      %152 = vmatpush1.bf16.xpose.msra.mxu0 0
      %153 = vmatprep.subr.bf16.mxu0 0
      %154 = vmatpush1.bf16.xpose.msra.mxu0 0
      %155 = vmatprep.subr.bf16.mxu0 0
      %156 = vmatpush1.bf16.xpose.msra.mxu0 0
      %157 = vmatprep.subr.bf16.mxu0 0
      %158 = vmatpush1.bf16.xpose.msra.mxu0 0
      %159 = vmatprep.subr.bf16.mxu0 0
      %160 = vmatpush1.bf16.xpose.msra.mxu0 0
      %161 = vmatprep.subr.bf16.mxu0 0
      %162 = vmatpush1.bf16.xpose.msra.mxu0 0
      %163 = vmatprep.subr.bf16.mxu0 0
      %164 = vmatpush1.bf16.xpose.msra.mxu0 0
      %165 = vmatprep.subr.bf16.mxu0 0
      %166 = vmatpush1.bf16.xpose.msra.mxu0 0
      %167 = vmatprep.subr.bf16.mxu0 0
      %168 = vmatpush1.bf16.xpose.msra.mxu0 0
      %169 = vmatprep.subr.bf16.mxu0 0
      %170 = vmatpush1.bf16.xpose.msra.mxu0 0
      %171 = vmatprep.subr.bf16.mxu0 0
      %172 = vmatpush1.bf16.xpose.msra.mxu0 0
      %173 = vmatprep.subr.bf16.mxu0 0
      %174 = vmatpush1.bf16.xpose.msra.mxu0 0
      %175 = vmatprep.subr.bf16.mxu0 0
      %176 = vmatpush1.bf16.xpose.msra.mxu0 0
      %177 = vmatprep.subr.bf16.mxu0 0
      %178 = vmatpush1.bf16.xpose.msra.mxu0 0
      %179 = vmatprep.mubr.bf16.mxu0 0
      %180 = vmatmul.mubr.bf16.gmra.mrb[0].mxu0 %v133
      %v181 = vpop.f32.mrb[0].mxu0
      %v182 = vadd.f32 0.0, %v181
      %v183 = vpop.f32.mrb[0].mxu0
      %v184 = vpop.f32.mrb[0].mxu0
      %v185 = vadd.f32 0.0, %v184
      %v186 = vpop.f32.mrb[0].mxu0
      %187 = vmatprep.mubr.bf16.mxu0 0
      %188 = vmatmul.mubr.bf16.gmra.mrb[0].mxu0 %v134
      %v189 = vpop.f32.mrb[0].mxu0
      %v190 = vadd.f32 0.0, %v189
      %v191 = vpop.f32.mrb[0].mxu0
      %v192 = vpop.f32.mrb[0].mxu0
      %v193 = vpop.f32.mrb[0].mxu0
      %194 = vdwg.mxu0
      %v195 = vmul.f32 %v182, 0.088388346
      %v196 = vmul.f32 %v185, 0.088388346
      %v197 = vmul.f32 %v190, 0.088388346
      %vm198 = vcmask 138240
      %v199 = vsel %vm198, %v195, -inf
      %200 = vmax.xlane.f32.xlu0 %v199
      %v201 = vpop.xlane.xlu0 %200
      %v202 = vsel %vm198, %v196, -inf
      %203 = vmax.xlane.f32.xlu0 %v202
      %v204 = vpop.xlane.xlu0 %203
      %vm205 = vcmask 131072
      %v206 = vsel %vm205, %v197, -inf
      %207 = vmax.xlane.f32.xlu0 %v206
      %v208 = vpop.xlane.xlu0 %207
      %v209 = vsub.f32 %v195, %v201
      %v210 = vsub.f32 %v196, %v204
      %v211 = vsub.f32 %v197, %v208
      %v212 = vmul.f32 %v209, 1.442695
      %v213 = vpow.pop %v212
      %v214 = vmul.f32 %v210, 1.442695
      %v215 = vpow.pop %v214
      %v216 = vmul.f32 %v211, 1.442695
      %v217 = vpow.pop %v216
      %v218 = vsel %vm198, %v213, 0.0
      %219 = vadd.xlane.f32.xlu0 %v218
      %v220 = vpop.xlane.xlu0 %219
      %v221 = vsel %vm198, %v215, 0.0
      %222 = vadd.xlane.f32.xlu0 %v221
      %v223 = vpop.xlane.xlu0 %222
      %v224 = vsel %vm205, %v217, 0.0
      %225 = vadd.xlane.f32.xlu0 %v224
      %v226 = vpop.xlane.xlu0 %225
      %v227 = vpack.c.bf16 %v215, %v213
      %v228 = vpack.c.bf16 %v217, %v217
      %v232 = vunpack.c.l.b16 %v124
      %v233 = vunpack.c.l.b16 %v125
      %v234 = vunpack.c.l.b16 %v126
      %v235 = vpack.c.b16 %v233, %v232
      %v236 = vpack.c.b16 %v234, %v234
      %v239 = vsel %vm198, %v227, 0
      %v242 = vsel %vm198, %v228, 0
      %vm244 = vcmask 1040384
      %v245 = vsel 0, 4294967295, 65535
      %v246 = vsel %vm244, %v245, 0
      %v248 = vand.u32 %v236, %v246
      %250 = vmatprep.subr.bf16.mxu0 0
      %251 = vmatpush1.bf16.msra.mxu0 %v235
      %252 = vmatprep.subr.bf16.mxu0 0
      %253 = vmatpush1.bf16.msra.mxu0 %v248
      %254 = vmatprep.subr.bf16.mxu0 0
      %255 = vmatpush1.bf16.msra.mxu0 0
      %256 = vmatprep.subr.bf16.mxu0 0
      %257 = vmatpush1.bf16.msra.mxu0 0
      %258 = vmatprep.subr.bf16.mxu0 0
      %259 = vmatpush1.bf16.msra.mxu0 0
      %260 = vmatprep.subr.bf16.mxu0 0
      %261 = vmatpush1.bf16.msra.mxu0 0
      %262 = vmatprep.subr.bf16.mxu0 0
      %263 = vmatpush1.bf16.msra.mxu0 0
      %264 = vmatprep.subr.bf16.mxu0 0
      %265 = vmatpush1.bf16.msra.mxu0 0
      %266 = vmatprep.subr.bf16.mxu0 0
      %267 = vmatpush1.bf16.msra.mxu0 0
      %268 = vmatprep.subr.bf16.mxu0 0
      %269 = vmatpush1.bf16.msra.mxu0 0
      %270 = vmatprep.subr.bf16.mxu0 0
      %271 = vmatpush1.bf16.msra.mxu0 0
      %272 = vmatprep.subr.bf16.mxu0 0
      %273 = vmatpush1.bf16.msra.mxu0 0
      %274 = vmatprep.subr.bf16.mxu0 0
      %275 = vmatpush1.bf16.msra.mxu0 0
      %276 = vmatprep.subr.bf16.mxu0 0
      %277 = vmatpush1.bf16.msra.mxu0 0
      %278 = vmatprep.subr.bf16.mxu0 0
      %279 = vmatpush1.bf16.msra.mxu0 0
      %280 = vmatprep.subr.bf16.mxu0 0
      %281 = vmatpush1.bf16.msra.mxu0 0
      %282 = vmatprep.mubr.bf16.mxu0 0
      %283 = vmatmul.mubr.bf16.gmra.mrb[0].mxu0 %v239
      %v284 = vpop.f32.mrb[0].mxu0
      %v285 = vadd.f32 0.0, %v284
      %v286 = vpop.f32.mrb[0].mxu0
      %v287 = vpop.f32.mrb[0].mxu0
      %v288 = vadd.f32 0.0, %v287
      %v289 = vpop.f32.mrb[0].mxu0
      %290 = vmatprep.mubr.bf16.mxu0 0
      %291 = vmatmul.mubr.bf16.gmra.mrb[0].mxu0 %v242
      %v292 = vpop.f32.mrb[0].mxu0
      %v293 = vadd.f32 0.0, %v292
      %v294 = vpop.f32.mrb[0].mxu0
      %v295 = vpop.f32.mrb[0].mxu0
      %v296 = vpop.f32.mrb[0].mxu0
      %297 = vdwg.mxu0
      %v298 = vrcp.pop %v220
      %v299 = vrcp.pop %v223
      %v300 = vrcp.pop %v226
      %v301 = vmul.f32 %v285, %v298
      %v302 = vmul.f32 %v288, %v299
      %v303 = vmul.f32 %v293, %v300
      %v304 = vpack.c.bf16 %v302, %v301
      %v305 = vpack.c.bf16 %v303, %v303
      %v308 = vunpack.c.l.b16 %v304
      %v309 = vunpack.c.h.b16 %v304
      %v310 = vunpack.c.l.b16 %v305
      %v311 = vpack.c.b16 %v308, %v308
      %v312 = vpack.c.b16 %v309, %v309
      %v313 = vpack.c.b16 %v310, %v310
      %317 = vst [vmem:[%s116] sm:$0xf] %v311
      %318 = vst [vmem:[%s116 + $0x8] sm:$0xf] %v312
      %vm319 = vcmask 1040384
      %vm320 = vsmask.f32 256
      %vm321 = vmand %vm319, %vm320
      %v322 = vld [vmem:[%s116 + $0x10] sm:$0x1]
      %v323 = vsel %vm321, %v313, %v322
      %324 = vst [vmem:[%s116 + $0x10] sm:$0x1] %v323
      %v325 = vld [vmem:[%s111 + $0x4] sm:$0xf]
      %v326 = vld [vmem:[%s111 + $0x1c] sm:$0xf]
      %v327 = vld [vmem:[%s111 + $0x34] sm:$0x1]
      %v328 = vld [vmem:[%s111 + $0xc] sm:$0xf]
      %v329 = vld [vmem:[%s111 + $0x24] sm:$0xf]
      %v330 = vld [vmem:[%s111 + $0x3c] sm:$0x1]
      %v331 = vld [vmem:[%s111 + $0x14] sm:$0xf]
      %v332 = vld [vmem:[%s111 + $0x2c] sm:$0xf]
      %v333 = vld [vmem:[%s111 + $0x44] sm:$0x1]
      %v337 = vunpack.c.l.b16 %v325
      %v338 = vunpack.c.l.b16 %v326
      %v339 = vunpack.c.l.b16 %v327
      %v340 = vpack.c.b16 %v338, %v337
      %v341 = vpack.c.b16 %v339, %v339
      %v347 = vunpack.c.l.b16 %v328
      %v348 = vunpack.c.l.b16 %v329
      %v349 = vunpack.c.l.b16 %v330
      %v350 = vpack.c.b16 %v348, %v347
      %v351 = vpack.c.b16 %v349, %v349
      %354 = vmatprep.subr.bf16.mxu0 0
      %355 = vmatpush1.bf16.xpose.msra.mxu0 %v350
      %356 = vmatprep.subr.bf16.mxu0 0
      %357 = vmatpush1.bf16.xpose.msra.mxu0 %v351
      %358 = vmatprep.subr.bf16.mxu0 0
      %359 = vmatpush1.bf16.xpose.msra.mxu0 0
      %360 = vmatprep.subr.bf16.mxu0 0
      %361 = vmatpush1.bf16.xpose.msra.mxu0 0
      %362 = vmatprep.subr.bf16.mxu0 0
      %363 = vmatpush1.bf16.xpose.msra.mxu0 0
      %364 = vmatprep.subr.bf16.mxu0 0
      %365 = vmatpush1.bf16.xpose.msra.mxu0 0
      %366 = vmatprep.subr.bf16.mxu0 0
      %367 = vmatpush1.bf16.xpose.msra.mxu0 0
      %368 = vmatprep.subr.bf16.mxu0 0
      %369 = vmatpush1.bf16.xpose.msra.mxu0 0
      %370 = vmatprep.subr.bf16.mxu0 0
      %371 = vmatpush1.bf16.xpose.msra.mxu0 0
      %372 = vmatprep.subr.bf16.mxu0 0
      %373 = vmatpush1.bf16.xpose.msra.mxu0 0
      %374 = vmatprep.subr.bf16.mxu0 0
      %375 = vmatpush1.bf16.xpose.msra.mxu0 0
      %376 = vmatprep.subr.bf16.mxu0 0
      %377 = vmatpush1.bf16.xpose.msra.mxu0 0
      %378 = vmatprep.subr.bf16.mxu0 0
      %379 = vmatpush1.bf16.xpose.msra.mxu0 0
      %380 = vmatprep.subr.bf16.mxu0 0
      %381 = vmatpush1.bf16.xpose.msra.mxu0 0
      %382 = vmatprep.subr.bf16.mxu0 0
      %383 = vmatpush1.bf16.xpose.msra.mxu0 0
      %384 = vmatprep.subr.bf16.mxu0 0
      %385 = vmatpush1.bf16.xpose.msra.mxu0 0
      %386 = vmatprep.mubr.bf16.mxu0 0
      %387 = vmatmul.mubr.bf16.gmra.mrb[0].mxu0 %v340
      %v388 = vpop.f32.mrb[0].mxu0
      %v389 = vadd.f32 0.0, %v388
      %v390 = vpop.f32.mrb[0].mxu0
      %v391 = vpop.f32.mrb[0].mxu0
      %v392 = vadd.f32 0.0, %v391
      %v393 = vpop.f32.mrb[0].mxu0
      %394 = vmatprep.mubr.bf16.mxu0 0
      %395 = vmatmul.mubr.bf16.gmra.mrb[0].mxu0 %v341
      %v396 = vpop.f32.mrb[0].mxu0
      %v397 = vadd.f32 0.0, %v396
      %v398 = vpop.f32.mrb[0].mxu0
      %v399 = vpop.f32.mrb[0].mxu0
      %v400 = vpop.f32.mrb[0].mxu0
      %401 = vdwg.mxu0
      %v402 = vmul.f32 %v389, 0.088388346
      %v403 = vmul.f32 %v392, 0.088388346
      %v404 = vmul.f32 %v397, 0.088388346
      %v405 = vsel %vm198, %v402, -inf
      %406 = vmax.xlane.f32.xlu0 %v405
      %v407 = vpop.xlane.xlu0 %406
      %v408 = vsel %vm198, %v403, -inf
      %409 = vmax.xlane.f32.xlu0 %v408
      %v410 = vpop.xlane.xlu0 %409
      %v411 = vsel %vm205, %v404, -inf
      %412 = vmax.xlane.f32.xlu0 %v411
      %v413 = vpop.xlane.xlu0 %412
      %v414 = vsub.f32 %v402, %v407
      %v415 = vsub.f32 %v403, %v410
      %v416 = vsub.f32 %v404, %v413
      %v417 = vmul.f32 %v414, 1.442695
      %v418 = vpow.pop %v417
      %v419 = vmul.f32 %v415, 1.442695
      %v420 = vpow.pop %v419
      %v421 = vmul.f32 %v416, 1.442695
      %v422 = vpow.pop %v421
      %v423 = vsel %vm198, %v418, 0.0
      %424 = vadd.xlane.f32.xlu0 %v423
      %v425 = vpop.xlane.xlu0 %424
      %v426 = vsel %vm198, %v420, 0.0
      %427 = vadd.xlane.f32.xlu0 %v426
      %v428 = vpop.xlane.xlu0 %427
      %v429 = vsel %vm205, %v422, 0.0
      %430 = vadd.xlane.f32.xlu0 %v429
      %v431 = vpop.xlane.xlu0 %430
      %v432 = vpack.c.bf16 %v420, %v418
      %v433 = vpack.c.bf16 %v422, %v422
      %v437 = vunpack.c.l.b16 %v331
      %v438 = vunpack.c.l.b16 %v332
      %v439 = vunpack.c.l.b16 %v333
      %v440 = vpack.c.b16 %v438, %v437
      %v441 = vpack.c.b16 %v439, %v439
      %v444 = vsel %vm198, %v432, 0
      %v447 = vsel %vm198, %v433, 0
      %v450 = vand.u32 %v441, %v246
      %452 = vmatprep.subr.bf16.mxu0 0
      %453 = vmatpush1.bf16.msra.mxu0 %v440
      %454 = vmatprep.subr.bf16.mxu0 0
      %455 = vmatpush1.bf16.msra.mxu0 %v450
      %456 = vmatprep.subr.bf16.mxu0 0
      %457 = vmatpush1.bf16.msra.mxu0 0
      %458 = vmatprep.subr.bf16.mxu0 0
      %459 = vmatpush1.bf16.msra.mxu0 0
      %460 = vmatprep.subr.bf16.mxu0 0
      %461 = vmatpush1.bf16.msra.mxu0 0
      %462 = vmatprep.subr.bf16.mxu0 0
      %463 = vmatpush1.bf16.msra.mxu0 0
      %464 = vmatprep.subr.bf16.mxu0 0
      %465 = vmatpush1.bf16.msra.mxu0 0
      %466 = vmatprep.subr.bf16.mxu0 0
      %467 = vmatpush1.bf16.msra.mxu0 0
      %468 = vmatprep.subr.bf16.mxu0 0
      %469 = vmatpush1.bf16.msra.mxu0 0
      %470 = vmatprep.subr.bf16.mxu0 0
      %471 = vmatpush1.bf16.msra.mxu0 0
      %472 = vmatprep.subr.bf16.mxu0 0
      %473 = vmatpush1.bf16.msra.mxu0 0
      %474 = vmatprep.subr.bf16.mxu0 0
      %475 = vmatpush1.bf16.msra.mxu0 0
      %476 = vmatprep.subr.bf16.mxu0 0
      %477 = vmatpush1.bf16.msra.mxu0 0
      %478 = vmatprep.subr.bf16.mxu0 0
      %479 = vmatpush1.bf16.msra.mxu0 0
      %480 = vmatprep.subr.bf16.mxu0 0
      %481 = vmatpush1.bf16.msra.mxu0 0
      %482 = vmatprep.subr.bf16.mxu0 0
      %483 = vmatpush1.bf16.msra.mxu0 0
      %484 = vmatprep.mubr.bf16.mxu0 0
      %485 = vmatmul.mubr.bf16.gmra.mrb[0].mxu0 %v444
      %v486 = vpop.f32.mrb[0].mxu0
      %v487 = vadd.f32 0.0, %v486
      %v488 = vpop.f32.mrb[0].mxu0
      %v489 = vpop.f32.mrb[0].mxu0
      %v490 = vadd.f32 0.0, %v489
      %v491 = vpop.f32.mrb[0].mxu0
      %492 = vmatprep.mubr.bf16.mxu0 0
      %493 = vmatmul.mubr.bf16.gmra.mrb[0].mxu0 %v447
      %v494 = vpop.f32.mrb[0].mxu0
      %v495 = vadd.f32 0.0, %v494
      %v496 = vpop.f32.mrb[0].mxu0
      %v497 = vpop.f32.mrb[0].mxu0
      %v498 = vpop.f32.mrb[0].mxu0
      %499 = vdwg.mxu0
      %v500 = vrcp.pop %v425
      %v501 = vrcp.pop %v428
      %v502 = vrcp.pop %v431
      %v503 = vmul.f32 %v487, %v500
      %v504 = vmul.f32 %v490, %v501
      %v505 = vmul.f32 %v495, %v502
      %v506 = vpack.c.bf16 %v504, %v503
      %v507 = vpack.c.bf16 %v505, %v505
      %v510 = vunpack.c.l.b16 %v506
      %v511 = vunpack.c.h.b16 %v506
      %v512 = vunpack.c.l.b16 %v507
      %v513 = vpack.c.b16 %v510, %v510
      %v514 = vpack.c.b16 %v511, %v511
      %v515 = vpack.c.b16 %v512, %v512
      %519 = vst [vmem:[%s116 + $0x4] sm:$0xf] %v513
      %520 = vst [vmem:[%s116 + $0xc] sm:$0xf] %v514
      %v521 = vld [vmem:[%s116 + $0x14] sm:$0x1]
      %v522 = vsel %vm321, %v515, %v521
      %523 = vst [vmem:[%s116 + $0x14] sm:$0x1] %v522
      %p524 = scmp.lt.s32.totalorder %s12, 1
      %s525 = scalar_select %p524, %s12, 1
      %s526 = smul.addr %s525, 6
      %s527 = smul.addr %s526, 4
      %s528 = scalar_lea.vmem %s1, %s527
      // Predicated region
      $region25: #{_lambda_.10} parent=23 // pred_check
        %p529 = pneg %p56
      $region26: #{_lambda_.10} parent=23 // pred_check_branch
        %531 = sbr.rel (%p529) target = $region28
      $region27: #{_lambda_.10} parent=23 // pred_region
        _
      $region28: #{_lambda_.10} parent=23 // pred_fallthru
        _
    $region24: #{_lambda_.10} parent=5 // pred_fallthru
      _
    %p532 = scmp.le.s32.totalorder 2, %s7
    // Predicated region
    $region29: #{_lambda_.10} parent=5 // pred_check
      %p533 = pneg %p532
    $region30: #{_lambda_.10} parent=5 // pred_check_branch
      %535 = sbr.rel (%p533) target = $region32
    $region31: #{_lambda_.10} parent=5 // pred_region
      %s536 = ssub.s32 %s7, 2
      // Predicated region
      $region33: #{_lambda_.10} parent=31 // pred_check
        %p537 = pneg %p62
      $region34: #{_lambda_.10} parent=31 // pred_check_branch
        %539 = sbr.rel (%p537) target = $region36
      $region35: #{_lambda_.10} parent=31 // pred_region
        %p540 = scmp.lt.s32.totalorder %s13, 1
        %s541 = scalar_select %p540, %s13, 1
        %s542 = smul.addr %s541, 6
        %s543 = smul.addr %s542, 4
        %s544 = scalar_lea.vmem %s1, %s543
      $region36: #{_lambda_.10} parent=31 // pred_fallthru
        _
    $region32: #{_lambda_.10} parent=5 // pred_fallthru
      _
  $region6: #{_lambda_.10} parent=0 // loop_footer
    %s11 = sadd.s32 1, %s7
  $region7: #{_lambda_.10} parent=0 // loop_footer_branch
    %6 = sbr.rel target = $region3
  $region8: #{_lambda_.10} parent=0 // loop_exit
    _

// kernel: _lambda_.15
$region0: #{_lambda_.15}
  #allocation0 [shape = 'u32[]', space=smem, size = 0x4, offset = 0x4, fixed_abs, tag = 'smem constant byte address 0x4 - core index']
  #allocation1 [shape = 'u32[144,128]{1,0:T(1,128)}', space=vmem, size = 0x12000, scoped, tag = 'internal scratch']
  %s0 = inlined_call_operand.vmem [shape: f32[2,256], index: 0, kind: input, shape index: {}]
  %s1 = inlined_call_operand.vmem [shape: f32[1,256], index: 1, kind: input, shape index: {}]
  %s2 = inlined_call_operand.vmem [shape: f32[1,256], index: 2, kind: input, shape index: {}]
  %s3 = inlined_call_operand.vmem [shape: bf16[256,128], index: 3, kind: input, shape index: {}]
  %s4 = inlined_call_operand.vmem [shape: f32[1,128], index: 4, kind: input, shape index: {}]
  %s5 = inlined_call_operand.hbm [shape: f32[2,128], index: 5, kind: output, shape index: {}]
  %s6 = sld [smem:[#allocation0]]
  $region30: #{_lambda_.15} parent=0
    _
  %s8 = ssub.s32 1, %s6
  %s9 = scalar_select 0, %s8, %s6
  $region1: #{_lambda_.15} parent=0
    #allocation2 [shape = 'u8[1024]{0}', space=vmem, size = 0x400, scoped, tag = 'output window, operand 0, single buffered']
    #allocation3 [shape = 's32[1]{0}', space=sflag, size = 0x4, scoped, tag = 'scoped memory for _lambda_.15']
    %10 = vsyncpa [#allocation3], 0
    // Predicated region
    $region2: #{_lambda_.15} parent=1 // pred_check
      _
    $region3: #{_lambda_.15} parent=1 // pred_check_branch
      %12 = sbr.rel (0) target = $region5
    $region4: #{_lambda_.15} parent=1 // pred_region
      _
    $region5: #{_lambda_.15} parent=1 // pred_fallthru
      _
    // Predicated region
    $region6: #{_lambda_.15} parent=1 // pred_check
      _
    $region7: #{_lambda_.15} parent=1 // pred_check_branch
      %14 = sbr.rel (0) target = $region9
    $region8: #{_lambda_.15} parent=1 // pred_region
      _
    $region9: #{_lambda_.15} parent=1 // pred_fallthru
      _
    // Predicated region
    $region10: #{_lambda_.15} parent=1 // pred_check
      _
    $region11: #{_lambda_.15} parent=1 // pred_check_branch
      %16 = sbr.rel (0) target = $region13
    $region12: #{_lambda_.15} parent=1 // pred_region
      _
    $region13: #{_lambda_.15} parent=1 // pred_fallthru
      _
    // Predicated region
    $region14: #{_lambda_.15} parent=1 // pred_check
      _
    $region15: #{_lambda_.15} parent=1 // pred_check_branch
      %18 = sbr.rel (0) target = $region17
    $region16: #{_lambda_.15} parent=1 // pred_region
      _
    $region17: #{_lambda_.15} parent=1 // pred_fallthru
      _
    // Predicated region
    $region18: #{_lambda_.15} parent=1 // pred_check
      _
    $region19: #{_lambda_.15} parent=1 // pred_check_branch
      %20 = sbr.rel (0) target = $region21
    $region20: #{_lambda_.15} parent=1 // pred_region
      _
    $region21: #{_lambda_.15} parent=1 // pred_fallthru
      _
    %v22 = vld [vmem:[%s0] sm:$0xf]
    %v25 = vunpack.c.l.s4 1983009808
    %v26 = vunpack.c.0.s8 %v25
    %v27 = vlaneseq
    %v28 = vshrl.u32 %v27, 7
    %v29 = vsub.s32 %v26, %v28
    %v30 = vrot.slane %v22, %v29
    %v31 = vcombine.high %v30, %v30
    %vm34 = vcmask 1041408
    %v35 = vsel %vm34, %v30, 0.0
    %v36 = vsel %vm34, %v31, 0.0
    %v37 = vadd.f32 %v35, %v36
    %38 = vadd.xlane.f32.xlu0 %v37
    %v39 = vpop.xlane.xlu0 %38
    %v40 = vrcp.pop 256.0
    %v41 = vmul.f32 %v39, %v40
    %v44 = vunpack.c.l.s4 269488144
    %v45 = vunpack.c.0.s8 %v44
    %v46 = vlaneseq
    %v47 = vshrl.u32 %v46, 7
    %v48 = vsub.s32 %v45, %v47
    %v49 = vrot.slane %v41, %v48
    %v51 = vsub.f32 %v22, %v49
    %v52 = vmul.f32 %v51, %v51
    %v55 = vunpack.c.l.s4 1983009808
    %v56 = vunpack.c.0.s8 %v55
    %v57 = vlaneseq
    %v58 = vshrl.u32 %v57, 7
    %v59 = vsub.s32 %v56, %v58
    %v60 = vrot.slane %v52, %v59
    %v61 = vcombine.high %v60, %v60
    %v64 = vsel %vm34, %v60, 0.0
    %v65 = vsel %vm34, %v61, 0.0
    %v66 = vadd.f32 %v64, %v65
    %67 = vadd.xlane.f32.xlu0 %v66
    %v68 = vpop.xlane.xlu0 %67
    %v69 = vmul.f32 %v68, %v40
    %v70 = vadd.f32 %v69, 1e-05
    %v71 = vrsqrt.pop %v70
    %v74 = vunpack.c.l.s4 269488144
    %v75 = vunpack.c.0.s8 %v74
    %v76 = vlaneseq
    %v77 = vshrl.u32 %v76, 7
    %v78 = vsub.s32 %v75, %v77
    %v79 = vrot.slane %v71, %v78
    %v81 = vmul.f32 %v51, %v79
    %v82 = vld [vmem:[%s1] sm:$0x3]
    %v84 = vlaneseq
    %v85 = vshrl.u32 %v84, 7
    %v86 = vsub.s32 0, %v85
    %v87 = vrot.slane %v82, %v86
    %v88 = vlaneseq
    %v89 = vshrl.u32 %v88, 7
    %v90 = vsub.s32 1, %v89
    %v91 = vrot.slane %v82, %v90
    %v92 = vcombine.low %v87, %v91
    %v94 = vunpack.c.l.s4 1983009808
    %v95 = vunpack.c.0.s8 %v94
    %v96 = vlaneseq
    %v97 = vshrl.u32 %v96, 7
    %v98 = vsub.s32 %v95, %v97
    %v99 = vrot.slane %v92, %v98
    %v101 = vmul.f32 %v81, %v99
    %v102 = vld [vmem:[%s2] sm:$0x3]
    %v104 = vlaneseq
    %v105 = vshrl.u32 %v104, 7
    %v106 = vsub.s32 0, %v105
    %v107 = vrot.slane %v102, %v106
    %v108 = vlaneseq
    %v109 = vshrl.u32 %v108, 7
    %v110 = vsub.s32 1, %v109
    %v111 = vrot.slane %v102, %v110
    %v112 = vcombine.low %v107, %v111
    %v114 = vunpack.c.l.s4 1983009808
    %v115 = vunpack.c.0.s8 %v114
    %v116 = vlaneseq
    %v117 = vshrl.u32 %v116, 7
    %v118 = vsub.s32 %v115, %v117
    %v119 = vrot.slane %v112, %v118
    %v121 = vadd.f32 %v101, %v119
    %v124 = vunpack.c.l.s4 1983009808
    %v125 = vunpack.c.0.s8 %v124
    %v126 = vlaneseq
    %v127 = vshrl.u32 %v126, 7
    %v128 = vsub.s32 %v125, %v127
    %v129 = vrot.slane %v121, %v128
    %v130 = vcombine.high %v129, %v129
    %v133 = vpack.c.bf16 %v129, %v129
    %v134 = vpack.c.bf16 %v130, %v130
    %v135 = vld [vmem:[%s3] sm:$0xf]
    %v136 = vld [vmem:[%s3 + $0x4] sm:$0xf]
    %v137 = vld [vmem:[%s3 + $0x8] sm:$0xf]
    %v138 = vld [vmem:[%s3 + $0xc] sm:$0xf]
    %v139 = vld [vmem:[%s3 + $0x10] sm:$0xf]
    %v140 = vld [vmem:[%s3 + $0x14] sm:$0xf]
    %v141 = vld [vmem:[%s3 + $0x18] sm:$0xf]
    %v142 = vld [vmem:[%s3 + $0x1c] sm:$0xf]
    %v143 = vld [vmem:[%s3 + $0x20] sm:$0xf]
    %v144 = vld [vmem:[%s3 + $0x24] sm:$0xf]
    %v145 = vld [vmem:[%s3 + $0x28] sm:$0xf]
    %v146 = vld [vmem:[%s3 + $0x2c] sm:$0xf]
    %v147 = vld [vmem:[%s3 + $0x30] sm:$0xf]
    %v148 = vld [vmem:[%s3 + $0x34] sm:$0xf]
    %v149 = vld [vmem:[%s3 + $0x38] sm:$0xf]
    %v150 = vld [vmem:[%s3 + $0x3c] sm:$0xf]
    %v151 = vld [vmem:[%s3 + $0x40] sm:$0xf]
    %v152 = vld [vmem:[%s3 + $0x44] sm:$0xf]
    %v153 = vld [vmem:[%s3 + $0x48] sm:$0xf]
    %v154 = vld [vmem:[%s3 + $0x4c] sm:$0xf]
    %v155 = vld [vmem:[%s3 + $0x50] sm:$0xf]
    %v156 = vld [vmem:[%s3 + $0x54] sm:$0xf]
    %v157 = vld [vmem:[%s3 + $0x58] sm:$0xf]
    %v158 = vld [vmem:[%s3 + $0x5c] sm:$0xf]
    %v159 = vld [vmem:[%s3 + $0x60] sm:$0xf]
    %v160 = vld [vmem:[%s3 + $0x64] sm:$0xf]
    %v161 = vld [vmem:[%s3 + $0x68] sm:$0xf]
    %v162 = vld [vmem:[%s3 + $0x6c] sm:$0xf]
    %v163 = vld [vmem:[%s3 + $0x70] sm:$0xf]
    %v164 = vld [vmem:[%s3 + $0x74] sm:$0xf]
    %v165 = vld [vmem:[%s3 + $0x78] sm:$0xf]
    %v166 = vld [vmem:[%s3 + $0x7c] sm:$0xf]
    %v167 = vld [vmem:[%s4] sm:$0x1]
    %v169 = vlaneseq
    %v170 = vshrl.u32 %v169, 7
    %v171 = vsub.s32 0, %v170
    %v172 = vrot.slane %v167, %v171
    %v206 = vunpack.c.l.b16 %v135
    %v207 = vunpack.c.l.b16 %v136
    %v208 = vunpack.c.l.b16 %v137
    %v209 = vunpack.c.l.b16 %v138
    %v210 = vunpack.c.l.b16 %v139
    %v211 = vunpack.c.l.b16 %v140
    %v212 = vunpack.c.l.b16 %v141
    %v213 = vunpack.c.l.b16 %v142
    %v214 = vunpack.c.l.b16 %v143
    %v215 = vunpack.c.l.b16 %v144
    %v216 = vunpack.c.l.b16 %v145
    %v217 = vunpack.c.l.b16 %v146
    %v218 = vunpack.c.l.b16 %v147
    %v219 = vunpack.c.l.b16 %v148
    %v220 = vunpack.c.l.b16 %v149
    %v221 = vunpack.c.l.b16 %v150
    %v222 = vunpack.c.l.b16 %v151
    %v223 = vunpack.c.l.b16 %v152
    %v224 = vunpack.c.l.b16 %v153
    %v225 = vunpack.c.l.b16 %v154
    %v226 = vunpack.c.l.b16 %v155
    %v227 = vunpack.c.l.b16 %v156
    %v228 = vunpack.c.l.b16 %v157
    %v229 = vunpack.c.l.b16 %v158
    %v230 = vunpack.c.l.b16 %v159
    %v231 = vunpack.c.l.b16 %v160
    %v232 = vunpack.c.l.b16 %v161
    %v233 = vunpack.c.l.b16 %v162
    %v234 = vunpack.c.l.b16 %v163
    %v235 = vunpack.c.l.b16 %v164
    %v236 = vunpack.c.l.b16 %v165
    %v237 = vunpack.c.l.b16 %v166
    %v238 = vpack.c.b16 %v207, %v206
    %v239 = vpack.c.b16 %v209, %v208
    %v240 = vpack.c.b16 %v211, %v210
    %v241 = vpack.c.b16 %v213, %v212
    %v242 = vpack.c.b16 %v215, %v214
    %v243 = vpack.c.b16 %v217, %v216
    %v244 = vpack.c.b16 %v219, %v218
    %v245 = vpack.c.b16 %v221, %v220
    %v246 = vpack.c.b16 %v223, %v222
    %v247 = vpack.c.b16 %v225, %v224
    %v248 = vpack.c.b16 %v227, %v226
    %v249 = vpack.c.b16 %v229, %v228
    %v250 = vpack.c.b16 %v231, %v230
    %v251 = vpack.c.b16 %v233, %v232
    %v252 = vpack.c.b16 %v235, %v234
    %v253 = vpack.c.b16 %v237, %v236
    %270 = vmatprep.subr.bf16.mxu0 0
    %271 = vmatpush1.bf16.msra.mxu0 %v238
    %272 = vmatprep.subr.bf16.mxu0 0
    %273 = vmatpush1.bf16.msra.mxu0 %v239
    %274 = vmatprep.subr.bf16.mxu0 0
    %275 = vmatpush1.bf16.msra.mxu0 %v240
    %276 = vmatprep.subr.bf16.mxu0 0
    %277 = vmatpush1.bf16.msra.mxu0 %v241
    %278 = vmatprep.subr.bf16.mxu0 0
    %279 = vmatpush1.bf16.msra.mxu0 %v242
    %280 = vmatprep.subr.bf16.mxu0 0
    %281 = vmatpush1.bf16.msra.mxu0 %v243
    %282 = vmatprep.subr.bf16.mxu0 0
    %283 = vmatpush1.bf16.msra.mxu0 %v244
    %284 = vmatprep.subr.bf16.mxu0 0
    %285 = vmatpush1.bf16.msra.mxu0 %v245
    %286 = vmatprep.subr.bf16.mxu0 0
    %287 = vmatpush1.bf16.msra.mxu0 %v246
    %288 = vmatprep.subr.bf16.mxu0 0
    %289 = vmatpush1.bf16.msra.mxu0 %v247
    %290 = vmatprep.subr.bf16.mxu0 0
    %291 = vmatpush1.bf16.msra.mxu0 %v248
    %292 = vmatprep.subr.bf16.mxu0 0
    %293 = vmatpush1.bf16.msra.mxu0 %v249
    %294 = vmatprep.subr.bf16.mxu0 0
    %295 = vmatpush1.bf16.msra.mxu0 %v250
    %296 = vmatprep.subr.bf16.mxu0 0
    %297 = vmatpush1.bf16.msra.mxu0 %v251
    %298 = vmatprep.subr.bf16.mxu0 0
    %299 = vmatpush1.bf16.msra.mxu0 %v252
    %300 = vmatprep.subr.bf16.mxu0 0
    %301 = vmatpush1.bf16.msra.mxu0 %v253
    %302 = vmatprep.mubr.bf16.mxu0 %v134
    %303 = vmatmul.mubr.bf16.gmra.mrb[0].mxu0 %v133
    %v304 = vpop.f32.mrb[0].mxu0
    %v305 = vadd.f32 %v172, %v304
    %v306 = vpop.f32.mrb[0].mxu0
    %v307 = vpop.f32.mrb[0].mxu0
    %v308 = vpop.f32.mrb[0].mxu0
    %309 = vdwg.mxu0
    %310 = vst [vmem:[#allocation2] sm:$0x3] %v305
    // Predicated region
    $region22: #{_lambda_.15} parent=1 // pred_check
      _
    $region23: #{_lambda_.15} parent=1 // pred_check_branch
      %312 = sbr.rel (0) target = $region25
    $region24: #{_lambda_.15} parent=1 // pred_region
      %s314 = ssub.s32 32, 32
      %315 = vsyncadd [#allocation3], %s314
      %s317 = sshll.u32 [#allocation2], 4
      %s318 = int_to_ptr.vmem [resolvable:$true] %s317
      %320 = dma.vmem_to_hbm [thread:$0]  %s318, 32, %s5, [#allocation3]
    $region25: #{_lambda_.15} parent=1 // pred_fallthru
      _
    // Predicated region
    $region26: #{_lambda_.15} parent=1 // pred_check
      _
    $region27: #{_lambda_.15} parent=1 // pred_check_branch
      %322 = sbr.rel (0) target = $region29
    $region28: #{_lambda_.15} parent=1 // pred_region
      %323 = dma.done [#allocation3], 32
    $region29: #{_lambda_.15} parent=1 // pred_fallthru
      _
    %324 = vsyncpa [#allocation3], 1

// kernel: _lambda_.11
$region0: #{_lambda_.11}
  #allocation0 [shape = 'u32[]', space=smem, size = 0x4, offset = 0x4, fixed_abs, tag = 'smem constant byte address 0x4 - core index']
  #allocation1 [shape = 'u32[144,128]{1,0:T(1,128)}', space=vmem, size = 0x12000, scoped, tag = 'internal scratch']
  %s0 = inlined_call_operand.vmem [shape: f32[34,256], index: 0, kind: input, shape index: {}]
  %s1 = inlined_call_operand.vmem [shape: bf16[34,256], index: 1, kind: input, shape index: {}]
  %s2 = inlined_call_operand.vmem [shape: bf16[256,256], index: 2, kind: input, shape index: {}]
  %s3 = inlined_call_operand.vmem [shape: f32[1,256], index: 3, kind: input, shape index: {}]
  %s4 = inlined_call_operand.vmem [shape: f32[1,256], index: 4, kind: input, shape index: {}]
  %s5 = inlined_call_operand.vmem [shape: f32[1,256], index: 5, kind: input, shape index: {}]
  %s6 = inlined_call_operand.vmem [shape: bf16[256,512], index: 6, kind: input, shape index: {}]
  %s7 = inlined_call_operand.vmem [shape: f32[1,512], index: 7, kind: input, shape index: {}]
  %s8 = inlined_call_operand.vmem [shape: bf16[512,256], index: 8, kind: input, shape index: {}]
  %s9 = inlined_call_operand.vmem [shape: f32[1,256], index: 9, kind: input, shape index: {}]
  %s10 = inlined_call_operand.vmem [shape: f32[1,256], index: 10, kind: input, shape index: {}]
  %s11 = inlined_call_operand.vmem [shape: f32[1,256], index: 11, kind: input, shape index: {}]
  %s12 = inlined_call_operand.vmem [shape: f32[34,256], index: 12, kind: output, shape index: {}]
  %s13 = sld [smem:[#allocation0]]
  $region58: #{_lambda_.11} parent=0
    _
  %s15 = ssub.s32 1, %s13
  %s16 = scalar_select 0, %s15, %s13
  // Predicated region
  $region2: #{_lambda_.11} parent=0 // pred_check
    _
  $region3: #{_lambda_.11} parent=0 // pred_check_branch
    %18 = sbr.rel (0) target = $region5
  $region4: #{_lambda_.11} parent=0 // pred_region
    _
  $region5: #{_lambda_.11} parent=0 // pred_fallthru
    _
  // Predicated region
  $region6: #{_lambda_.11} parent=0 // pred_check
    _
  $region7: #{_lambda_.11} parent=0 // pred_check_branch
    %20 = sbr.rel (0) target = $region9
  $region8: #{_lambda_.11} parent=0 // pred_region
    _
  $region9: #{_lambda_.11} parent=0 // pred_fallthru
    _
  // Predicated region
  $region10: #{_lambda_.11} parent=0 // pred_check
    _
  $region11: #{_lambda_.11} parent=0 // pred_check_branch
    %22 = sbr.rel (0) target = $region13
  $region12: #{_lambda_.11} parent=0 // pred_region
    _
  $region13: #{_lambda_.11} parent=0 // pred_fallthru
    _
  // Predicated region
  $region14: #{_lambda_.11} parent=0 // pred_check
    _
  $region15: #{_lambda_.11} parent=0 // pred_check_branch
    %24 = sbr.rel (0) target = $region17
  $region16: #{_lambda_.11} parent=0 // pred_region
    _
  $region17: #{_lambda_.11} parent=0 // pred_fallthru
    _
  // Predicated region
  $region18: #{_lambda_.11} parent=0 // pred_check
    _
  $region19: #{_lambda_.11} parent=0 // pred_check_branch
    %26 = sbr.rel (0) target = $region21
  $region20: #{_lambda_.11} parent=0 // pred_region
    _
  $region21: #{_lambda_.11} parent=0 // pred_fallthru
    _
  // Predicated region
  $region22: #{_lambda_.11} parent=0 // pred_check
    _
  $region23: #{_lambda_.11} parent=0 // pred_check_branch
    %28 = sbr.rel (0) target = $region25
  $region24: #{_lambda_.11} parent=0 // pred_region
    _
  $region25: #{_lambda_.11} parent=0 // pred_fallthru
    _
  // Predicated region
  $region26: #{_lambda_.11} parent=0 // pred_check
    _
  $region27: #{_lambda_.11} parent=0 // pred_check_branch
    %30 = sbr.rel (0) target = $region29
  $region28: #{_lambda_.11} parent=0 // pred_region
    _
  $region29: #{_lambda_.11} parent=0 // pred_fallthru
    _
  // Predicated region
  $region30: #{_lambda_.11} parent=0 // pred_check
    _
  $region31: #{_lambda_.11} parent=0 // pred_check_branch
    %32 = sbr.rel (0) target = $region33
  $region32: #{_lambda_.11} parent=0 // pred_region
    _
  $region33: #{_lambda_.11} parent=0 // pred_fallthru
    _
  // Predicated region
  $region34: #{_lambda_.11} parent=0 // pred_check
    _
  $region35: #{_lambda_.11} parent=0 // pred_check_branch
    %34 = sbr.rel (0) target = $region37
  $region36: #{_lambda_.11} parent=0 // pred_region
    _
  $region37: #{_lambda_.11} parent=0 // pred_fallthru
    _
  // Predicated region
  $region38: #{_lambda_.11} parent=0 // pred_check
    _
  $region39: #{_lambda_.11} parent=0 // pred_check_branch
    %36 = sbr.rel (0) target = $region41
  $region40: #{_lambda_.11} parent=0 // pred_region
    _
  $region41: #{_lambda_.11} parent=0 // pred_fallthru
    _
  // Predicated region
  $region42: #{_lambda_.11} parent=0 // pred_check
    _
  $region43: #{_lambda_.11} parent=0 // pred_check_branch
    %38 = sbr.rel (0) target = $region45
  $region44: #{_lambda_.11} parent=0 // pred_region
    _
  $region45: #{_lambda_.11} parent=0 // pred_fallthru
    _
  // Predicated region
  $region46: #{_lambda_.11} parent=0 // pred_check
    _
  $region47: #{_lambda_.11} parent=0 // pred_check_branch
    %40 = sbr.rel (0) target = $region49
  $region48: #{_lambda_.11} parent=0 // pred_region
    _
  $region49: #{_lambda_.11} parent=0 // pred_fallthru
    _
  %v41 = vld [vmem:[%s0] sm:$0xff]
  %v42 = vld [vmem:[%s0 + $0x8] sm:$0xff]
  %v43 = vld [vmem:[%s0 + $0x10] sm:$0xff]
  %v44 = vld [vmem:[%s0 + $0x18] sm:$0xff]
  %v45 = vld [vmem:[%s0 + $0x20] sm:$0xff]
  %v46 = vld [vmem:[%s0 + $0x28] sm:$0xff]
  %v47 = vld [vmem:[%s0 + $0x30] sm:$0xff]
  %v48 = vld [vmem:[%s0 + $0x38] sm:$0xff]
  %v49 = vld [vmem:[%s0 + $0x40] sm:$0x3]
  %v50 = vld [vmem:[%s0 + $0x48] sm:$0x3]
  %v51 = vld [vmem:[%s1] sm:$0xff]
  %v52 = vld [vmem:[%s1 + $0x8] sm:$0xff]
  %v53 = vld [vmem:[%s1 + $0x10] sm:$0xff]
  %v54 = vld [vmem:[%s1 + $0x18] sm:$0xff]
  %v55 = vld [vmem:[%s1 + $0x20] sm:$0x11]
  %v56 = vld [vmem:[%s2] sm:$0xff]
  %v57 = vld [vmem:[%s2 + $0x8] sm:$0xff]
  %v58 = vld [vmem:[%s2 + $0x10] sm:$0xff]
  %v59 = vld [vmem:[%s2 + $0x18] sm:$0xff]
  %v60 = vld [vmem:[%s2 + $0x20] sm:$0xff]
  %v61 = vld [vmem:[%s2 + $0x28] sm:$0xff]
  %v62 = vld [vmem:[%s2 + $0x30] sm:$0xff]
  %v63 = vld [vmem:[%s2 + $0x38] sm:$0xff]
  %v64 = vld [vmem:[%s2 + $0x40] sm:$0xff]
  %v65 = vld [vmem:[%s2 + $0x48] sm:$0xff]
  %v66 = vld [vmem:[%s2 + $0x50] sm:$0xff]
  %v67 = vld [vmem:[%s2 + $0x58] sm:$0xff]
  %v68 = vld [vmem:[%s2 + $0x60] sm:$0xff]
  %v69 = vld [vmem:[%s2 + $0x68] sm:$0xff]
  %v70 = vld [vmem:[%s2 + $0x70] sm:$0xff]
  %v71 = vld [vmem:[%s2 + $0x78] sm:$0xff]
  %v72 = vld [vmem:[%s2 + $0x80] sm:$0xff]
  %v73 = vld [vmem:[%s2 + $0x88] sm:$0xff]
  %v74 = vld [vmem:[%s2 + $0x90] sm:$0xff]
  %v75 = vld [vmem:[%s2 + $0x98] sm:$0xff]
  %v76 = vld [vmem:[%s2 + $0xa0] sm:$0xff]
  %v77 = vld [vmem:[%s2 + $0xa8] sm:$0xff]
  %v78 = vld [vmem:[%s2 + $0xb0] sm:$0xff]
  %v79 = vld [vmem:[%s2 + $0xb8] sm:$0xff]
  %v80 = vld [vmem:[%s2 + $0xc0] sm:$0xff]
  %v81 = vld [vmem:[%s2 + $0xc8] sm:$0xff]
  %v82 = vld [vmem:[%s2 + $0xd0] sm:$0xff]
  %v83 = vld [vmem:[%s2 + $0xd8] sm:$0xff]
  %v84 = vld [vmem:[%s2 + $0xe0] sm:$0xff]
  %v85 = vld [vmem:[%s2 + $0xe8] sm:$0xff]
  %v86 = vld [vmem:[%s2 + $0xf0] sm:$0xff]
  %v87 = vld [vmem:[%s2 + $0xf8] sm:$0xff]
  %v88 = vld [vmem:[%s3] sm:$0x3]
  %v90 = vlaneseq
  %v91 = vshrl.u32 %v90, 7
  %v92 = vsub.s32 0, %v91
  %v93 = vrot.slane %v88, %v92
  %v94 = vlaneseq
  %v95 = vshrl.u32 %v94, 7
  %v96 = vsub.s32 1, %v95
  %v97 = vrot.slane %v88, %v96
  %v105 = vunpack.c.l.b16 %v51
  %v106 = vunpack.c.h.b16 %v51
  %v107 = vunpack.c.l.b16 %v52
  %v108 = vunpack.c.h.b16 %v52
  %v109 = vunpack.c.l.b16 %v53
  %v110 = vunpack.c.h.b16 %v53
  %v111 = vunpack.c.l.b16 %v54
  %v112 = vunpack.c.h.b16 %v54
  %v113 = vunpack.c.l.b16 %v55
  %v114 = vunpack.c.h.b16 %v55
  %v115 = vpack.c.b16 %v107, %v105
  %v116 = vpack.c.b16 %v108, %v106
  %v117 = vpack.c.b16 %v111, %v109
  %v118 = vpack.c.b16 %v112, %v110
  %v119 = vpack.c.b16 %v113, %v113
  %v120 = vpack.c.b16 %v114, %v114
  %v159 = vunpack.c.l.b16 %v56
  %v160 = vunpack.c.h.b16 %v56
  %v161 = vunpack.c.l.b16 %v57
  %v162 = vunpack.c.h.b16 %v57
  %v163 = vunpack.c.l.b16 %v58
  %v164 = vunpack.c.h.b16 %v58
  %v165 = vunpack.c.l.b16 %v59
  %v166 = vunpack.c.h.b16 %v59
  %v167 = vunpack.c.l.b16 %v60
  %v168 = vunpack.c.h.b16 %v60
  %v169 = vunpack.c.l.b16 %v61
  %v170 = vunpack.c.h.b16 %v61
  %v171 = vunpack.c.l.b16 %v62
  %v172 = vunpack.c.h.b16 %v62
  %v173 = vunpack.c.l.b16 %v63
  %v174 = vunpack.c.h.b16 %v63
  %v175 = vunpack.c.l.b16 %v64
  %v176 = vunpack.c.h.b16 %v64
  %v177 = vunpack.c.l.b16 %v65
  %v178 = vunpack.c.h.b16 %v65
  %v179 = vunpack.c.l.b16 %v66
  %v180 = vunpack.c.h.b16 %v66
  %v181 = vunpack.c.l.b16 %v67
  %v182 = vunpack.c.h.b16 %v67
  %v183 = vunpack.c.l.b16 %v68
  %v184 = vunpack.c.h.b16 %v68
  %v185 = vunpack.c.l.b16 %v69
  %v186 = vunpack.c.h.b16 %v69
  %v187 = vunpack.c.l.b16 %v70
  %v188 = vunpack.c.h.b16 %v70
  %v189 = vunpack.c.l.b16 %v71
  %v190 = vunpack.c.h.b16 %v71
  %v191 = vunpack.c.l.b16 %v72
  %v192 = vunpack.c.h.b16 %v72
  %v193 = vunpack.c.l.b16 %v73
  %v194 = vunpack.c.h.b16 %v73
  %v195 = vunpack.c.l.b16 %v74
  %v196 = vunpack.c.h.b16 %v74
  %v197 = vunpack.c.l.b16 %v75
  %v198 = vunpack.c.h.b16 %v75
  %v199 = vunpack.c.l.b16 %v76
  %v200 = vunpack.c.h.b16 %v76
  %v201 = vunpack.c.l.b16 %v77
  %v202 = vunpack.c.h.b16 %v77
  %v203 = vunpack.c.l.b16 %v78
  %v204 = vunpack.c.h.b16 %v78
  %v205 = vunpack.c.l.b16 %v79
  %v206 = vunpack.c.h.b16 %v79
  %v207 = vunpack.c.l.b16 %v80
  %v208 = vunpack.c.h.b16 %v80
  %v209 = vunpack.c.l.b16 %v81
  %v210 = vunpack.c.h.b16 %v81
  %v211 = vunpack.c.l.b16 %v82
  %v212 = vunpack.c.h.b16 %v82
  %v213 = vunpack.c.l.b16 %v83
  %v214 = vunpack.c.h.b16 %v83
  %v215 = vunpack.c.l.b16 %v84
  %v216 = vunpack.c.h.b16 %v84
  %v217 = vunpack.c.l.b16 %v85
  %v218 = vunpack.c.h.b16 %v85
  %v219 = vunpack.c.l.b16 %v86
  %v220 = vunpack.c.h.b16 %v86
  %v221 = vunpack.c.l.b16 %v87
  %v222 = vunpack.c.h.b16 %v87
  %v223 = vpack.c.b16 %v161, %v159
  %v224 = vpack.c.b16 %v162, %v160
  %v225 = vpack.c.b16 %v165, %v163
  %v226 = vpack.c.b16 %v166, %v164
  %v227 = vpack.c.b16 %v169, %v167
  %v228 = vpack.c.b16 %v170, %v168
  %v229 = vpack.c.b16 %v173, %v171
  %v230 = vpack.c.b16 %v174, %v172
  %v231 = vpack.c.b16 %v177, %v175
  %v232 = vpack.c.b16 %v178, %v176
  %v233 = vpack.c.b16 %v181, %v179
  %v234 = vpack.c.b16 %v182, %v180
  %v235 = vpack.c.b16 %v185, %v183
  %v236 = vpack.c.b16 %v186, %v184
  %v237 = vpack.c.b16 %v189, %v187
  %v238 = vpack.c.b16 %v190, %v188
  %v239 = vpack.c.b16 %v193, %v191
  %v240 = vpack.c.b16 %v194, %v192
  %v241 = vpack.c.b16 %v197, %v195
  %v242 = vpack.c.b16 %v198, %v196
  %v243 = vpack.c.b16 %v201, %v199
  %v244 = vpack.c.b16 %v202, %v200
  %v245 = vpack.c.b16 %v205, %v203
  %v246 = vpack.c.b16 %v206, %v204
  %v247 = vpack.c.b16 %v209, %v207
  %v248 = vpack.c.b16 %v210, %v208
  %v249 = vpack.c.b16 %v213, %v211
  %v250 = vpack.c.b16 %v214, %v212
  %v251 = vpack.c.b16 %v217, %v215
  %v252 = vpack.c.b16 %v218, %v216
  %v253 = vpack.c.b16 %v221, %v219
  %v254 = vpack.c.b16 %v222, %v220
  %287 = vmatprep.subr.bf16.mxu0 %v224
  %288 = vmatpush1.bf16.msra.mxu0 %v223
  %289 = vmatprep.subr.bf16.mxu0 %v226
  %290 = vmatpush1.bf16.msra.mxu0 %v225
  %291 = vmatprep.subr.bf16.mxu0 %v228
  %292 = vmatpush1.bf16.msra.mxu0 %v227
  %293 = vmatprep.subr.bf16.mxu0 %v230
  %294 = vmatpush1.bf16.msra.mxu0 %v229
  %295 = vmatprep.subr.bf16.mxu0 %v232
  %296 = vmatpush1.bf16.msra.mxu0 %v231
  %297 = vmatprep.subr.bf16.mxu0 %v234
  %298 = vmatpush1.bf16.msra.mxu0 %v233
  %299 = vmatprep.subr.bf16.mxu0 %v236
  %300 = vmatpush1.bf16.msra.mxu0 %v235
  %301 = vmatprep.subr.bf16.mxu0 %v238
  %302 = vmatpush1.bf16.msra.mxu0 %v237
  %303 = vmatprep.subr.bf16.mxu0 %v240
  %304 = vmatpush1.bf16.msra.mxu0 %v239
  %305 = vmatprep.subr.bf16.mxu0 %v242
  %306 = vmatpush1.bf16.msra.mxu0 %v241
  %307 = vmatprep.subr.bf16.mxu0 %v244
  %308 = vmatpush1.bf16.msra.mxu0 %v243
  %309 = vmatprep.subr.bf16.mxu0 %v246
  %310 = vmatpush1.bf16.msra.mxu0 %v245
  %311 = vmatprep.subr.bf16.mxu0 %v248
  %312 = vmatpush1.bf16.msra.mxu0 %v247
  %313 = vmatprep.subr.bf16.mxu0 %v250
  %314 = vmatpush1.bf16.msra.mxu0 %v249
  %315 = vmatprep.subr.bf16.mxu0 %v252
  %316 = vmatpush1.bf16.msra.mxu0 %v251
  %317 = vmatprep.subr.bf16.mxu0 %v254
  %318 = vmatpush1.bf16.msra.mxu0 %v253
  %319 = vmatprep.mubr.bf16.mxu0 %v116
  %320 = vmatmul.mubr.bf16.gmra.mrb[0].mxu0 %v115
  %v321 = vpop.f32.mrb[0].mxu0
  %v322 = vadd.f32 %v93, %v321
  %v323 = vpop.f32.mrb[0].mxu0
  %v324 = vadd.f32 %v97, %v323
  %v325 = vpop.f32.mrb[0].mxu0
  %v326 = vadd.f32 %v93, %v325
  %v327 = vpop.f32.mrb[0].mxu0
  %v328 = vadd.f32 %v97, %v327
  %329 = vmatprep.mubr.bf16.mxu0 %v118
  %330 = vmatmul.mubr.bf16.gmra.mrb[0].mxu0 %v117
  %v331 = vpop.f32.mrb[0].mxu0
  %v332 = vadd.f32 %v93, %v331
  %v333 = vpop.f32.mrb[0].mxu0
  %v334 = vadd.f32 %v97, %v333
  %v335 = vpop.f32.mrb[0].mxu0
  %v336 = vadd.f32 %v93, %v335
  %v337 = vpop.f32.mrb[0].mxu0
  %v338 = vadd.f32 %v97, %v337
  %339 = vmatprep.mubr.bf16.mxu0 %v120
  %340 = vmatmul.mubr.bf16.gmra.mrb[0].mxu0 %v119
  %v341 = vpop.f32.mrb[0].mxu0
  %v342 = vadd.f32 %v93, %v341
  %v343 = vpop.f32.mrb[0].mxu0
  %v344 = vadd.f32 %v97, %v343
  %v345 = vpop.f32.mrb[0].mxu0
  %v346 = vpop.f32.mrb[0].mxu0
  %347 = vdwg.mxu0
  %v348 = vadd.f32 %v41, %v322
  %v349 = vadd.f32 %v42, %v324
  %v350 = vadd.f32 %v43, %v326
  %v351 = vadd.f32 %v44, %v328
  %v352 = vadd.f32 %v45, %v332
  %v353 = vadd.f32 %v46, %v334
  %v354 = vadd.f32 %v47, %v336
  %v355 = vadd.f32 %v48, %v338
  %v356 = vadd.f32 %v49, %v342
  %v357 = vadd.f32 %v50, %v344
  %v358 = vadd.f32 %v348, %v349
  %359 = vadd.xlane.f32.xlu0 %v358
  %v360 = vpop.xlane.xlu0 %359
  %v361 = vadd.f32 %v350, %v351
  %362 = vadd.xlane.f32.xlu0 %v361
  %v363 = vpop.xlane.xlu0 %362
  %v364 = vadd.f32 %v352, %v353
  %365 = vadd.xlane.f32.xlu0 %v364
  %v366 = vpop.xlane.xlu0 %365
  %v367 = vadd.f32 %v354, %v355
  %368 = vadd.xlane.f32.xlu0 %v367
  %v369 = vpop.xlane.xlu0 %368
  %vm370 = vcmask 1041408
  %v371 = vsel %vm370, %v356, 0.0
  %v372 = vsel %vm370, %v357, 0.0
  %v373 = vadd.f32 %v371, %v372
  %374 = vadd.xlane.f32.xlu0 %v373
  %v375 = vpop.xlane.xlu0 %374
  %v376 = vrcp.pop 256.0
  %v377 = vmul.f32 %v360, %v376
  %v378 = vmul.f32 %v363, %v376
  %v379 = vmul.f32 %v366, %v376
  %v380 = vmul.f32 %v369, %v376
  %v381 = vmul.f32 %v375, %v376
  %v382 = vsub.f32 %v348, %v377
  %v383 = vsub.f32 %v349, %v377
  %v384 = vsub.f32 %v350, %v378
  %v385 = vsub.f32 %v351, %v378
  %v386 = vsub.f32 %v352, %v379
  %v387 = vsub.f32 %v353, %v379
  %v388 = vsub.f32 %v354, %v380
  %v389 = vsub.f32 %v355, %v380
  %v390 = vsub.f32 %v356, %v381
  %v391 = vsub.f32 %v357, %v381
  %v392 = vmul.f32 %v382, %v382
  %v393 = vmul.f32 %v383, %v383
  %v394 = vmul.f32 %v384, %v384
  %v395 = vmul.f32 %v385, %v385
  %v396 = vmul.f32 %v386, %v386
  %v397 = vmul.f32 %v387, %v387
  %v398 = vmul.f32 %v388, %v388
  %v399 = vmul.f32 %v389, %v389
  %v400 = vmul.f32 %v390, %v390
  %v401 = vmul.f32 %v391, %v391
  %v402 = vadd.f32 %v392, %v393
  %403 = vadd.xlane.f32.xlu0 %v402
  %v404 = vpop.xlane.xlu0 %403
  %v405 = vadd.f32 %v394, %v395
  %406 = vadd.xlane.f32.xlu0 %v405
  %v407 = vpop.xlane.xlu0 %406
  %v408 = vadd.f32 %v396, %v397
  %409 = vadd.xlane.f32.xlu0 %v408
  %v410 = vpop.xlane.xlu0 %409
  %v411 = vadd.f32 %v398, %v399
  %412 = vadd.xlane.f32.xlu0 %v411
  %v413 = vpop.xlane.xlu0 %412
  %v414 = vsel %vm370, %v400, 0.0
  %v415 = vsel %vm370, %v401, 0.0
  %v416 = vadd.f32 %v414, %v415
  %417 = vadd.xlane.f32.xlu0 %v416
  %v418 = vpop.xlane.xlu0 %417
  %v419 = vmul.f32 %v404, %v376
  %v420 = vmul.f32 %v407, %v376
  %v421 = vmul.f32 %v410, %v376
  %v422 = vmul.f32 %v413, %v376
  %v423 = vmul.f32 %v418, %v376
  %v424 = vadd.f32 %v419, 1e-05
  %v425 = vadd.f32 %v420, 1e-05
  %v426 = vadd.f32 %v421, 1e-05
  %v427 = vadd.f32 %v422, 1e-05
  %v428 = vadd.f32 %v423, 1e-05
  %v429 = vrsqrt.pop %v424
  %v430 = vrsqrt.pop %v425
  %v431 = vrsqrt.pop %v426
  %v432 = vrsqrt.pop %v427
  %v433 = vrsqrt.pop %v428
  %v434 = vmul.f32 %v382, %v429
  %v435 = vmul.f32 %v383, %v429
  %v436 = vmul.f32 %v384, %v430
  %v437 = vmul.f32 %v385, %v430
  %v438 = vmul.f32 %v386, %v431
  %v439 = vmul.f32 %v387, %v431
  %v440 = vmul.f32 %v388, %v432
  %v441 = vmul.f32 %v389, %v432
  %v442 = vmul.f32 %v390, %v433
  %v443 = vmul.f32 %v391, %v433
  %v444 = vld [vmem:[%s4] sm:$0x3]
  %v446 = vlaneseq
  %v447 = vshrl.u32 %v446, 7
  %v448 = vsub.s32 0, %v447
  %v449 = vrot.slane %v444, %v448
  %v450 = vlaneseq
  %v451 = vshrl.u32 %v450, 7
  %v452 = vsub.s32 1, %v451
  %v453 = vrot.slane %v444, %v452
  %v456 = vmul.f32 %v434, %v449
  %v457 = vmul.f32 %v435, %v453
  %v458 = vmul.f32 %v436, %v449
  %v459 = vmul.f32 %v437, %v453
  %v460 = vmul.f32 %v438, %v449
  %v461 = vmul.f32 %v439, %v453
  %v462 = vmul.f32 %v440, %v449
  %v463 = vmul.f32 %v441, %v453
  %v464 = vmul.f32 %v442, %v449
  %v465 = vmul.f32 %v443, %v453
  %v466 = vld [vmem:[%s5] sm:$0x3]
  %v468 = vlaneseq
  %v469 = vshrl.u32 %v468, 7
  %v470 = vsub.s32 0, %v469
  %v471 = vrot.slane %v466, %v470
  %v472 = vlaneseq
  %v473 = vshrl.u32 %v472, 7
  %v474 = vsub.s32 1, %v473
  %v475 = vrot.slane %v466, %v474
  %v478 = vadd.f32 %v456, %v471
  %v479 = vadd.f32 %v457, %v475
  %v480 = vadd.f32 %v458, %v471
  %v481 = vadd.f32 %v459, %v475
  %v482 = vadd.f32 %v460, %v471
  %v483 = vadd.f32 %v461, %v475
  %v484 = vadd.f32 %v462, %v471
  %v485 = vadd.f32 %v463, %v475
  %v486 = vadd.f32 %v464, %v471
  %v487 = vadd.f32 %v465, %v475
  %v488 = vpack.c.bf16 %v480, %v478
  %v489 = vpack.c.bf16 %v481, %v479
  %v490 = vpack.c.bf16 %v484, %v482
  %v491 = vpack.c.bf16 %v485, %v483
  %v492 = vpack.c.bf16 %v486, %v486
  %v493 = vpack.c.bf16 %v487, %v487
  %v494 = vld [vmem:[%s6] sm:$0xff]
  %v495 = vld [vmem:[%s6 + $0x8] sm:$0xff]
  %v496 = vld [vmem:[%s6 + $0x10] sm:$0xff]
  %v497 = vld [vmem:[%s6 + $0x18] sm:$0xff]
  %v498 = vld [vmem:[%s6 + $0x20] sm:$0xff]
  %v499 = vld [vmem:[%s6 + $0x28] sm:$0xff]
  %v500 = vld [vmem:[%s6 + $0x30] sm:$0xff]
  %v501 = vld [vmem:[%s6 + $0x38] sm:$0xff]
  %v502 = vld [vmem:[%s6 + $0x40] sm:$0xff]
  %v503 = vld [vmem:[%s6 + $0x48] sm:$0xff]
  %v504 = vld [vmem:[%s6 + $0x50] sm:$0xff]
  %v505 = vld [vmem:[%s6 + $0x58] sm:$0xff]
  %v506 = vld [vmem:[%s6 + $0x60] sm:$0xff]
  %v507 = vld [vmem:[%s6 + $0x68] sm:$0xff]
  %v508 = vld [vmem:[%s6 + $0x70] sm:$0xff]
  %v509 = vld [vmem:[%s6 + $0x78] sm:$0xff]
  %v510 = vld [vmem:[%s6 + $0x80] sm:$0xff]
  %v511 = vld [vmem:[%s6 + $0x88] sm:$0xff]
  %v512 = vld [vmem:[%s6 + $0x90] sm:$0xff]
  %v513 = vld [vmem:[%s6 + $0x98] sm:$0xff]
  %v514 = vld [vmem:[%s6 + $0xa0] sm:$0xff]
  %v515 = vld [vmem:[%s6 + $0xa8] sm:$0xff]
  %v516 = vld [vmem:[%s6 + $0xb0] sm:$0xff]
  %v517 = vld [vmem:[%s6 + $0xb8] sm:$0xff]
  %v518 = vld [vmem:[%s6 + $0xc0] sm:$0xff]
  %v519 = vld [vmem:[%s6 + $0xc8] sm:$0xff]
  %v520 = vld [vmem:[%s6 + $0xd0] sm:$0xff]
  %v521 = vld [vmem:[%s6 + $0xd8] sm:$0xff]
  %v522 = vld [vmem:[%s6 + $0xe0] sm:$0xff]
  %v523 = vld [vmem:[%s6 + $0xe8] sm:$0xff]
  %v524 = vld [vmem:[%s6 + $0xf0] sm:$0xff]
  %v525 = vld [vmem:[%s6 + $0xf8] sm:$0xff]
  %v526 = vld [vmem:[%s6 + $0x100] sm:$0xff]
  %v527 = vld [vmem:[%s6 + $0x108] sm:$0xff]
  %v528 = vld [vmem:[%s6 + $0x110] sm:$0xff]
  %v529 = vld [vmem:[%s6 + $0x118] sm:$0xff]
  %v530 = vld [vmem:[%s6 + $0x120] sm:$0xff]
  %v531 = vld [vmem:[%s6 + $0x128] sm:$0xff]
  %v532 = vld [vmem:[%s6 + $0x130] sm:$0xff]
  %v533 = vld [vmem:[%s6 + $0x138] sm:$0xff]
  %v534 = vld [vmem:[%s6 + $0x140] sm:$0xff]
  %v535 = vld [vmem:[%s6 + $0x148] sm:$0xff]
  %v536 = vld [vmem:[%s6 + $0x150] sm:$0xff]
  %v537 = vld [vmem:[%s6 + $0x158] sm:$0xff]
  %v538 = vld [vmem:[%s6 + $0x160] sm:$0xff]
  %v539 = vld [vmem:[%s6 + $0x168] sm:$0xff]
  %v540 = vld [vmem:[%s6 + $0x170] sm:$0xff]
  %v541 = vld [vmem:[%s6 + $0x178] sm:$0xff]
  %v542 = vld [vmem:[%s6 + $0x180] sm:$0xff]
  %v543 = vld [vmem:[%s6 + $0x188] sm:$0xff]
  %v544 = vld [vmem:[%s6 + $0x190] sm:$0xff]
  %v545 = vld [vmem:[%s6 + $0x198] sm:$0xff]
  %v546 = vld [vmem:[%s6 + $0x1a0] sm:$0xff]
  %v547 = vld [vmem:[%s6 + $0x1a8] sm:$0xff]
  %v548 = vld [vmem:[%s6 + $0x1b0] sm:$0xff]
  %v549 = vld [vmem:[%s6 + $0x1b8] sm:$0xff]
  %v550 = vld [vmem:[%s6 + $0x1c0] sm:$0xff]
  %v551 = vld [vmem:[%s6 + $0x1c8] sm:$0xff]
  %v552 = vld [vmem:[%s6 + $0x1d0] sm:$0xff]
  %v553 = vld [vmem:[%s6 + $0x1d8] sm:$0xff]
  %v554 = vld [vmem:[%s6 + $0x1e0] sm:$0xff]
  %v555 = vld [vmem:[%s6 + $0x1e8] sm:$0xff]
  %v556 = vld [vmem:[%s6 + $0x1f0] sm:$0xff]
  %v557 = vld [vmem:[%s6 + $0x1f8] sm:$0xff]
  %v558 = vld [vmem:[%s7] sm:$0xf]
  %v560 = vlaneseq
  %v561 = vshrl.u32 %v560, 7
  %v562 = vsub.s32 0, %v561
  %v563 = vrot.slane %v558, %v562
  %v564 = vlaneseq
  %v565 = vshrl.u32 %v564, 7
  %v566 = vsub.s32 1, %v565
  %v567 = vrot.slane %v558, %v566
  %v568 = vlaneseq
  %v569 = vshrl.u32 %v568, 7
  %v570 = vsub.s32 2, %v569
  %v571 = vrot.slane %v558, %v570
  %v572 = vlaneseq
  %v573 = vshrl.u32 %v572, 7
  %v574 = vsub.s32 3, %v573
  %v575 = vrot.slane %v558, %v574
  %v644 = vunpack.c.l.b16 %v494
  %v645 = vunpack.c.h.b16 %v494
  %v646 = vunpack.c.l.b16 %v495
  %v647 = vunpack.c.h.b16 %v495
  %v648 = vunpack.c.l.b16 %v496
  %v649 = vunpack.c.h.b16 %v496
  %v650 = vunpack.c.l.b16 %v497
  %v651 = vunpack.c.h.b16 %v497
  %v652 = vunpack.c.l.b16 %v498
  %v653 = vunpack.c.h.b16 %v498
  %v654 = vunpack.c.l.b16 %v499
  %v655 = vunpack.c.h.b16 %v499
  %v656 = vunpack.c.l.b16 %v500
  %v657 = vunpack.c.h.b16 %v500
  %v658 = vunpack.c.l.b16 %v501
  %v659 = vunpack.c.h.b16 %v501
  %v660 = vunpack.c.l.b16 %v502
  %v661 = vunpack.c.h.b16 %v502
  %v662 = vunpack.c.l.b16 %v503
  %v663 = vunpack.c.h.b16 %v503
  %v664 = vunpack.c.l.b16 %v504
  %v665 = vunpack.c.h.b16 %v504
  %v666 = vunpack.c.l.b16 %v505
  %v667 = vunpack.c.h.b16 %v505
  %v668 = vunpack.c.l.b16 %v506
  %v669 = vunpack.c.h.b16 %v506
  %v670 = vunpack.c.l.b16 %v507
  %v671 = vunpack.c.h.b16 %v507
  %v672 = vunpack.c.l.b16 %v508
  %v673 = vunpack.c.h.b16 %v508
  %v674 = vunpack.c.l.b16 %v509
  %v675 = vunpack.c.h.b16 %v509
  %v676 = vunpack.c.l.b16 %v510
  %v677 = vunpack.c.h.b16 %v510
  %v678 = vunpack.c.l.b16 %v511
  %v679 = vunpack.c.h.b16 %v511
  %v680 = vunpack.c.l.b16 %v512
  %v681 = vunpack.c.h.b16 %v512
  %v682 = vunpack.c.l.b16 %v513
  %v683 = vunpack.c.h.b16 %v513
  %v684 = vunpack.c.l.b16 %v514
  %v685 = vunpack.c.h.b16 %v514
  %v686 = vunpack.c.l.b16 %v515
  %v687 = vunpack.c.h.b16 %v515
  %v688 = vunpack.c.l.b16 %v516
  %v689 = vunpack.c.h.b16 %v516
  %v690 = vunpack.c.l.b16 %v517
  %v691 = vunpack.c.h.b16 %v517
  %v692 = vunpack.c.l.b16 %v518
  %v693 = vunpack.c.h.b16 %v518
  %v694 = vunpack.c.l.b16 %v519
  %v695 = vunpack.c.h.b16 %v519
  %v696 = vunpack.c.l.b16 %v520
  %v697 = vunpack.c.h.b16 %v520
  %v698 = vunpack.c.l.b16 %v521
  %v699 = vunpack.c.h.b16 %v521
  %v700 = vunpack.c.l.b16 %v522
  %v701 = vunpack.c.h.b16 %v522
  %v702 = vunpack.c.l.b16 %v523
  %v703 = vunpack.c.h.b16 %v523
  %v704 = vunpack.c.l.b16 %v524
  %v705 = vunpack.c.h.b16 %v524
  %v706 = vunpack.c.l.b16 %v525
  %v707 = vunpack.c.h.b16 %v525
  %v708 = vunpack.c.l.b16 %v526
  %v709 = vunpack.c.h.b16 %v526
  %v710 = vunpack.c.l.b16 %v527
  %v711 = vunpack.c.h.b16 %v527
  %v712 = vunpack.c.l.b16 %v528
  %v713 = vunpack.c.h.b16 %v528
  %v714 = vunpack.c.l.b16 %v529
  %v715 = vunpack.c.h.b16 %v529
  %v716 = vunpack.c.l.b16 %v530
  %v717 = vunpack.c.h.b16 %v530
  %v718 = vunpack.c.l.b16 %v531
  %v719 = vunpack.c.h.b16 %v531
  %v720 = vunpack.c.l.b16 %v532
  %v721 = vunpack.c.h.b16 %v532
  %v722 = vunpack.c.l.b16 %v533
  %v723 = vunpack.c.h.b16 %v533
  %v724 = vunpack.c.l.b16 %v534
  %v725 = vunpack.c.h.b16 %v534
  %v726 = vunpack.c.l.b16 %v535
  %v727 = vunpack.c.h.b16 %v535
  %v728 = vunpack.c.l.b16 %v536
  %v729 = vunpack.c.h.b16 %v536
  %v730 = vunpack.c.l.b16 %v537
  %v731 = vunpack.c.h.b16 %v537
  %v732 = vunpack.c.l.b16 %v538
  %v733 = vunpack.c.h.b16 %v538
  %v734 = vunpack.c.l.b16 %v539
  %v735 = vunpack.c.h.b16 %v539
  %v736 = vunpack.c.l.b16 %v540
  %v737 = vunpack.c.h.b16 %v540
  %v738 = vunpack.c.l.b16 %v541
  %v739 = vunpack.c.h.b16 %v541
  %v740 = vunpack.c.l.b16 %v542
  %v741 = vunpack.c.h.b16 %v542
  %v742 = vunpack.c.l.b16 %v543
  %v743 = vunpack.c.h.b16 %v543
  %v744 = vunpack.c.l.b16 %v544
  %v745 = vunpack.c.h.b16 %v544
  %v746 = vunpack.c.l.b16 %v545
  %v747 = vunpack.c.h.b16 %v545
  %v748 = vunpack.c.l.b16 %v546
  %v749 = vunpack.c.h.b16 %v546
  %v750 = vunpack.c.l.b16 %v547
  %v751 = vunpack.c.h.b16 %v547
  %v752 = vunpack.c.l.b16 %v548
  %v753 = vunpack.c.h.b16 %v548
  %v754 = vunpack.c.l.b16 %v549
  %v755 = vunpack.c.h.b16 %v549
  %v756 = vunpack.c.l.b16 %v550
  %v757 = vunpack.c.h.b16 %v550
  %v758 = vunpack.c.l.b16 %v551
  %v759 = vunpack.c.h.b16 %v551
  %v760 = vunpack.c.l.b16 %v552
  %v761 = vunpack.c.h.b16 %v552
  %v762 = vunpack.c.l.b16 %v553
  %v763 = vunpack.c.h.b16 %v553
  %v764 = vunpack.c.l.b16 %v554
  %v765 = vunpack.c.h.b16 %v554
  %v766 = vunpack.c.l.b16 %v555
  %v767 = vunpack.c.h.b16 %v555
  %v768 = vunpack.c.l.b16 %v556
  %v769 = vunpack.c.h.b16 %v556
  %v770 = vunpack.c.l.b16 %v557
  %v771 = vunpack.c.h.b16 %v557
  %v772 = vpack.c.b16 %v648, %v644
  %v773 = vpack.c.b16 %v649, %v645
  %v774 = vpack.c.b16 %v650, %v646
  %v775 = vpack.c.b16 %v651, %v647
  %v776 = vpack.c.b16 %v656, %v652
  %v777 = vpack.c.b16 %v657, %v653
  %v778 = vpack.c.b16 %v658, %v654
  %v779 = vpack.c.b16 %v659, %v655
  %v780 = vpack.c.b16 %v664, %v660
  %v781 = vpack.c.b16 %v665, %v661
  %v782 = vpack.c.b16 %v666, %v662
  %v783 = vpack.c.b16 %v667, %v663
  %v784 = vpack.c.b16 %v672, %v668
  %v785 = vpack.c.b16 %v673, %v669
  %v786 = vpack.c.b16 %v674, %v670
  %v787 = vpack.c.b16 %v675, %v671
  %v788 = vpack.c.b16 %v680, %v676
  %v789 = vpack.c.b16 %v681, %v677
  %v790 = vpack.c.b16 %v682, %v678
  %v791 = vpack.c.b16 %v683, %v679
  %v792 = vpack.c.b16 %v688, %v684
  %v793 = vpack.c.b16 %v689, %v685
  %v794 = vpack.c.b16 %v690, %v686
  %v795 = vpack.c.b16 %v691, %v687
  %v796 = vpack.c.b16 %v696, %v692
  %v797 = vpack.c.b16 %v697, %v693
  %v798 = vpack.c.b16 %v698, %v694
  %v799 = vpack.c.b16 %v699, %v695
  %v800 = vpack.c.b16 %v704, %v700
  %v801 = vpack.c.b16 %v705, %v701
  %v802 = vpack.c.b16 %v706, %v702
  %v803 = vpack.c.b16 %v707, %v703
  %v804 = vpack.c.b16 %v712, %v708
  %v805 = vpack.c.b16 %v713, %v709
  %v806 = vpack.c.b16 %v714, %v710
  %v807 = vpack.c.b16 %v715, %v711
  %v808 = vpack.c.b16 %v720, %v716
  %v809 = vpack.c.b16 %v721, %v717
  %v810 = vpack.c.b16 %v722, %v718
  %v811 = vpack.c.b16 %v723, %v719
  %v812 = vpack.c.b16 %v728, %v724
  %v813 = vpack.c.b16 %v729, %v725
  %v814 = vpack.c.b16 %v730, %v726
  %v815 = vpack.c.b16 %v731, %v727
  %v816 = vpack.c.b16 %v736, %v732
  %v817 = vpack.c.b16 %v737, %v733
  %v818 = vpack.c.b16 %v738, %v734
  %v819 = vpack.c.b16 %v739, %v735
  %v820 = vpack.c.b16 %v744, %v740
  %v821 = vpack.c.b16 %v745, %v741
  %v822 = vpack.c.b16 %v746, %v742
  %v823 = vpack.c.b16 %v747, %v743
  %v824 = vpack.c.b16 %v752, %v748
  %v825 = vpack.c.b16 %v753, %v749
  %v826 = vpack.c.b16 %v754, %v750
  %v827 = vpack.c.b16 %v755, %v751
  %v828 = vpack.c.b16 %v760, %v756
  %v829 = vpack.c.b16 %v761, %v757
  %v830 = vpack.c.b16 %v762, %v758
  %v831 = vpack.c.b16 %v763, %v759
  %v832 = vpack.c.b16 %v768, %v764
  %v833 = vpack.c.b16 %v769, %v765
  %v834 = vpack.c.b16 %v770, %v766
  %v835 = vpack.c.b16 %v771, %v767
  %900 = vmatprep.subr.bf16.mxu0 %v773
  %901 = vmatpush1.bf16.msra.mxu0 %v772
  %902 = vmatprep.subr.bf16.mxu0 %v777
  %903 = vmatpush1.bf16.msra.mxu0 %v776
  %904 = vmatprep.subr.bf16.mxu0 %v781
  %905 = vmatpush1.bf16.msra.mxu0 %v780
  %906 = vmatprep.subr.bf16.mxu0 %v785
  %907 = vmatpush1.bf16.msra.mxu0 %v784
  %908 = vmatprep.subr.bf16.mxu0 %v789
  %909 = vmatpush1.bf16.msra.mxu0 %v788
  %910 = vmatprep.subr.bf16.mxu0 %v793
  %911 = vmatpush1.bf16.msra.mxu0 %v792
  %912 = vmatprep.subr.bf16.mxu0 %v797
  %913 = vmatpush1.bf16.msra.mxu0 %v796
  %914 = vmatprep.subr.bf16.mxu0 %v801
  %915 = vmatpush1.bf16.msra.mxu0 %v800
  %916 = vmatprep.subr.bf16.mxu0 %v805
  %917 = vmatpush1.bf16.msra.mxu0 %v804
  %918 = vmatprep.subr.bf16.mxu0 %v809
  %919 = vmatpush1.bf16.msra.mxu0 %v808
  %920 = vmatprep.subr.bf16.mxu0 %v813
  %921 = vmatpush1.bf16.msra.mxu0 %v812
  %922 = vmatprep.subr.bf16.mxu0 %v817
  %923 = vmatpush1.bf16.msra.mxu0 %v816
  %924 = vmatprep.subr.bf16.mxu0 %v821
  %925 = vmatpush1.bf16.msra.mxu0 %v820
  %926 = vmatprep.subr.bf16.mxu0 %v825
  %927 = vmatpush1.bf16.msra.mxu0 %v824
  %928 = vmatprep.subr.bf16.mxu0 %v829
  %929 = vmatpush1.bf16.msra.mxu0 %v828
  %930 = vmatprep.subr.bf16.mxu0 %v833
  %931 = vmatpush1.bf16.msra.mxu0 %v832
  %932 = vmatprep.mubr.bf16.mxu0 %v489
  %933 = vmatmul.mubr.bf16.gmra.mrb[0].mxu0 %v488
  %v934 = vpop.f32.mrb[0].mxu0
  %v935 = vadd.f32 %v563, %v934
  %v936 = vpop.f32.mrb[0].mxu0
  %v937 = vadd.f32 %v567, %v936
  %v938 = vpop.f32.mrb[0].mxu0
  %v939 = vadd.f32 %v563, %v938
  %v940 = vpop.f32.mrb[0].mxu0
  %v941 = vadd.f32 %v567, %v940
  %942 = vmatprep.mubr.bf16.mxu0 %v491
  %943 = vmatmul.mubr.bf16.gmra.mrb[0].mxu0 %v490
  %v944 = vpop.f32.mrb[0].mxu0
  %v945 = vadd.f32 %v563, %v944
  %v946 = vpop.f32.mrb[0].mxu0
  %v947 = vadd.f32 %v567, %v946
  %v948 = vpop.f32.mrb[0].mxu0
  %v949 = vadd.f32 %v563, %v948
  %v950 = vpop.f32.mrb[0].mxu0
  %v951 = vadd.f32 %v567, %v950
  %952 = vmatprep.mubr.bf16.mxu0 %v493
  %953 = vmatmul.mubr.bf16.gmra.mrb[0].mxu0 %v492
  %v954 = vpop.f32.mrb[0].mxu0
  %v955 = vadd.f32 %v563, %v954
  %v956 = vpop.f32.mrb[0].mxu0
  %v957 = vadd.f32 %v567, %v956
  %v958 = vpop.f32.mrb[0].mxu0
  %v959 = vpop.f32.mrb[0].mxu0
  %960 = vdwg.mxu0
  %961 = vmatprep.subr.bf16.mxu0 %v775
  %962 = vmatpush1.bf16.msra.mxu0 %v774
  %963 = vmatprep.subr.bf16.mxu0 %v779
  %964 = vmatpush1.bf16.msra.mxu0 %v778
  %965 = vmatprep.subr.bf16.mxu0 %v783
  %966 = vmatpush1.bf16.msra.mxu0 %v782
  %967 = vmatprep.subr.bf16.mxu0 %v787
  %968 = vmatpush1.bf16.msra.mxu0 %v786
  %969 = vmatprep.subr.bf16.mxu0 %v791
  %970 = vmatpush1.bf16.msra.mxu0 %v790
  %971 = vmatprep.subr.bf16.mxu0 %v795
  %972 = vmatpush1.bf16.msra.mxu0 %v794
  %973 = vmatprep.subr.bf16.mxu0 %v799
  %974 = vmatpush1.bf16.msra.mxu0 %v798
  %975 = vmatprep.subr.bf16.mxu0 %v803
  %976 = vmatpush1.bf16.msra.mxu0 %v802
  %977 = vmatprep.subr.bf16.mxu0 %v807
  %978 = vmatpush1.bf16.msra.mxu0 %v806
  %979 = vmatprep.subr.bf16.mxu0 %v811
  %980 = vmatpush1.bf16.msra.mxu0 %v810
  %981 = vmatprep.subr.bf16.mxu0 %v815
  %982 = vmatpush1.bf16.msra.mxu0 %v814
  %983 = vmatprep.subr.bf16.mxu0 %v819
  %984 = vmatpush1.bf16.msra.mxu0 %v818
  %985 = vmatprep.subr.bf16.mxu0 %v823
  %986 = vmatpush1.bf16.msra.mxu0 %v822
  %987 = vmatprep.subr.bf16.mxu0 %v827
  %988 = vmatpush1.bf16.msra.mxu0 %v826
  %989 = vmatprep.subr.bf16.mxu0 %v831
  %990 = vmatpush1.bf16.msra.mxu0 %v830
  %991 = vmatprep.subr.bf16.mxu0 %v835
  %992 = vmatpush1.bf16.msra.mxu0 %v834
  %993 = vmatprep.mubr.bf16.mxu0 %v489
  %994 = vmatmul.mubr.bf16.gmra.mrb[0].mxu0 %v488
  %v995 = vpop.f32.mrb[0].mxu0
  %v996 = vadd.f32 %v571, %v995
  %v997 = vpop.f32.mrb[0].mxu0
  %v998 = vadd.f32 %v575, %v997
  %v999 = vpop.f32.mrb[0].mxu0
  %v1000 = vadd.f32 %v571, %v999
  %v1001 = vpop.f32.mrb[0].mxu0
  %v1002 = vadd.f32 %v575, %v1001
  %1003 = vmatprep.mubr.bf16.mxu0 %v491
  %1004 = vmatmul.mubr.bf16.gmra.mrb[0].mxu0 %v490
  %v1005 = vpop.f32.mrb[0].mxu0
  %v1006 = vadd.f32 %v571, %v1005
  %v1007 = vpop.f32.mrb[0].mxu0
  %v1008 = vadd.f32 %v575, %v1007
  %v1009 = vpop.f32.mrb[0].mxu0
  %v1010 = vadd.f32 %v571, %v1009
  %v1011 = vpop.f32.mrb[0].mxu0
  %v1012 = vadd.f32 %v575, %v1011
  %1013 = vmatprep.mubr.bf16.mxu0 %v493
  %1014 = vmatmul.mubr.bf16.gmra.mrb[0].mxu0 %v492
  %v1015 = vpop.f32.mrb[0].mxu0
  %v1016 = vadd.f32 %v571, %v1015
  %v1017 = vpop.f32.mrb[0].mxu0
  %v1018 = vadd.f32 %v575, %v1017
  %v1019 = vpop.f32.mrb[0].mxu0
  %v1020 = vpop.f32.mrb[0].mxu0
  %1021 = vdwg.mxu0
  %v1022 = vmul.f32 %v935, 0.5
  %v1023 = vmul.f32 %v937, 0.5
  %v1024 = vmul.f32 %v996, 0.5
  %v1025 = vmul.f32 %v998, 0.5
  %v1026 = vmul.f32 %v939, 0.5
  %v1027 = vmul.f32 %v941, 0.5
  %v1028 = vmul.f32 %v1000, 0.5
  %v1029 = vmul.f32 %v1002, 0.5
  %v1030 = vmul.f32 %v945, 0.5
  %v1031 = vmul.f32 %v947, 0.5
  %v1032 = vmul.f32 %v1006, 0.5
  %v1033 = vmul.f32 %v1008, 0.5
  %v1034 = vmul.f32 %v949, 0.5
  %v1035 = vmul.f32 %v951, 0.5
  %v1036 = vmul.f32 %v1010, 0.5
  %v1037 = vmul.f32 %v1012, 0.5
  %v1038 = vmul.f32 %v955, 0.5
  %v1039 = vmul.f32 %v957, 0.5
  %v1040 = vmul.f32 %v1016, 0.5
  %v1041 = vmul.f32 %v1018, 0.5
  %v1042 = vmul.f32 %v935, 0.70710677
  %v1043 = vmul.f32 %v937, 0.70710677
  %v1044 = vmul.f32 %v996, 0.70710677
  %v1045 = vmul.f32 %v998, 0.70710677
  %v1046 = vmul.f32 %v939, 0.70710677
  %v1047 = vmul.f32 %v941, 0.70710677
  %v1048 = vmul.f32 %v1000, 0.70710677
  %v1049 = vmul.f32 %v1002, 0.70710677
  %v1050 = vmul.f32 %v945, 0.70710677
  %v1051 = vmul.f32 %v947, 0.70710677
  %v1052 = vmul.f32 %v1006, 0.70710677
  %v1053 = vmul.f32 %v1008, 0.70710677
  %v1054 = vmul.f32 %v949, 0.70710677
  %v1055 = vmul.f32 %v951, 0.70710677
  %v1056 = vmul.f32 %v1010, 0.70710677
  %v1057 = vmul.f32 %v1012, 0.70710677
  %v1058 = vmul.f32 %v955, 0.70710677
  %v1059 = vmul.f32 %v957, 0.70710677
  %v1060 = vmul.f32 %v1016, 0.70710677
  %v1061 = vmul.f32 %v1018, 0.70710677
  %v1062 = verf.f32.pop %v1042
  %v1063 = verf.f32.pop %v1043
  %v1064 = verf.f32.pop %v1044
  %v1065 = verf.f32.pop %v1045
  %v1066 = verf.f32.pop %v1046
  %v1067 = verf.f32.pop %v1047
  %v1068 = verf.f32.pop %v1048
  %v1069 = verf.f32.pop %v1049
  %v1070 = verf.f32.pop %v1050
  %v1071 = verf.f32.pop %v1051
  %v1072 = verf.f32.pop %v1052
  %v1073 = verf.f32.pop %v1053
  %v1074 = verf.f32.pop %v1054
  %v1075 = verf.f32.pop %v1055
  %v1076 = verf.f32.pop %v1056
  %v1077 = verf.f32.pop %v1057
  %v1078 = verf.f32.pop %v1058
  %v1079 = verf.f32.pop %v1059
  %v1080 = verf.f32.pop %v1060
  %v1081 = verf.f32.pop %v1061
  %v1082 = vadd.f32 %v1062, 1.0
  %v1083 = vadd.f32 %v1063, 1.0
  %v1084 = vadd.f32 %v1064, 1.0
  %v1085 = vadd.f32 %v1065, 1.0
  %v1086 = vadd.f32 %v1066, 1.0
  %v1087 = vadd.f32 %v1067, 1.0
  %v1088 = vadd.f32 %v1068, 1.0
  %v1089 = vadd.f32 %v1069, 1.0
  %v1090 = vadd.f32 %v1070, 1.0
  %v1091 = vadd.f32 %v1071, 1.0
  %v1092 = vadd.f32 %v1072, 1.0
  %v1093 = vadd.f32 %v1073, 1.0
  %v1094 = vadd.f32 %v1074, 1.0
  %v1095 = vadd.f32 %v1075, 1.0
  %v1096 = vadd.f32 %v1076, 1.0
  %v1097 = vadd.f32 %v1077, 1.0
  %v1098 = vadd.f32 %v1078, 1.0
  %v1099 = vadd.f32 %v1079, 1.0
  %v1100 = vadd.f32 %v1080, 1.0
  %v1101 = vadd.f32 %v1081, 1.0
  %v1102 = vmul.f32 %v1022, %v1082
  %v1103 = vmul.f32 %v1023, %v1083
  %v1104 = vmul.f32 %v1024, %v1084
  %v1105 = vmul.f32 %v1025, %v1085
  %v1106 = vmul.f32 %v1026, %v1086
  %v1107 = vmul.f32 %v1027, %v1087
  %v1108 = vmul.f32 %v1028, %v1088
  %v1109 = vmul.f32 %v1029, %v1089
  %v1110 = vmul.f32 %v1030, %v1090
  %v1111 = vmul.f32 %v1031, %v1091
  %v1112 = vmul.f32 %v1032, %v1092
  %v1113 = vmul.f32 %v1033, %v1093
  %v1114 = vmul.f32 %v1034, %v1094
  %v1115 = vmul.f32 %v1035, %v1095
  %v1116 = vmul.f32 %v1036, %v1096
  %v1117 = vmul.f32 %v1037, %v1097
  %v1118 = vmul.f32 %v1038, %v1098
  %v1119 = vmul.f32 %v1039, %v1099
  %v1120 = vmul.f32 %v1040, %v1100
  %v1121 = vmul.f32 %v1041, %v1101
  %v1122 = vpack.c.bf16 %v1106, %v1102
  %v1123 = vpack.c.bf16 %v1107, %v1103
  %v1124 = vpack.c.bf16 %v1108, %v1104
  %v1125 = vpack.c.bf16 %v1109, %v1105
  %v1126 = vpack.c.bf16 %v1114, %v1110
  %v1127 = vpack.c.bf16 %v1115, %v1111
  %v1128 = vpack.c.bf16 %v1116, %v1112
  %v1129 = vpack.c.bf16 %v1117, %v1113
  %v1130 = vpack.c.bf16 %v1118, %v1118
  %v1131 = vpack.c.bf16 %v1119, %v1119
  %v1132 = vpack.c.bf16 %v1120, %v1120
  %v1133 = vpack.c.bf16 %v1121, %v1121
  %v1134 = vld [vmem:[%s8] sm:$0xff]
  %v1135 = vld [vmem:[%s8 + $0x8] sm:$0xff]
  %v1136 = vld [vmem:[%s8 + $0x10] sm:$0xff]
  %v1137 = vld [vmem:[%s8 + $0x18] sm:$0xff]
  %v1138 = vld [vmem:[%s8 + $0x20] sm:$0xff]
  %v1139 = vld [vmem:[%s8 + $0x28] sm:$0xff]
  %v1140 = vld [vmem:[%s8 + $0x30] sm:$0xff]
  %v1141 = vld [vmem:[%s8 + $0x38] sm:$0xff]
  %v1142 = vld [vmem:[%s8 + $0x40] sm:$0xff]
  %v1143 = vld [vmem:[%s8 + $0x48] sm:$0xff]
  %v1144 = vld [vmem:[%s8 + $0x50] sm:$0xff]
  %v1145 = vld [vmem:[%s8 + $0x58] sm:$0xff]
  %v1146 = vld [vmem:[%s8 + $0x60] sm:$0xff]
  %v1147 = vld [vmem:[%s8 + $0x68] sm:$0xff]
  %v1148 = vld [vmem:[%s8 + $0x70] sm:$0xff]
  %v1149 = vld [vmem:[%s8 + $0x78] sm:$0xff]
  %v1150 = vld [vmem:[%s8 + $0x80] sm:$0xff]
  %v1151 = vld [vmem:[%s8 + $0x88] sm:$0xff]
  %v1152 = vld [vmem:[%s8 + $0x90] sm:$0xff]
  %v1153 = vld [vmem:[%s8 + $0x98] sm:$0xff]
  %v1154 = vld [vmem:[%s8 + $0xa0] sm:$0xff]
  %v1155 = vld [vmem:[%s8 + $0xa8] sm:$0xff]
  %v1156 = vld [vmem:[%s8 + $0xb0] sm:$0xff]
  %v1157 = vld [vmem:[%s8 + $0xb8] sm:$0xff]
  %v1158 = vld [vmem:[%s8 + $0xc0] sm:$0xff]
  %v1159 = vld [vmem:[%s8 + $0xc8] sm:$0xff]
  %v1160 = vld [vmem:[%s8 + $0xd0] sm:$0xff]
  %v1161 = vld [vmem:[%s8 + $0xd8] sm:$0xff]
  %v1162 = vld [vmem:[%s8 + $0xe0] sm:$0xff]
  %v1163 = vld [vmem:[%s8 + $0xe8] sm:$0xff]
  %v1164 = vld [vmem:[%s8 + $0xf0] sm:$0xff]
  %v1165 = vld [vmem:[%s8 + $0xf8] sm:$0xff]
  %v1166 = vld [vmem:[%s8 + $0x100] sm:$0xff]
  %v1167 = vld [vmem:[%s8 + $0x108] sm:$0xff]
  %v1168 = vld [vmem:[%s8 + $0x110] sm:$0xff]
  %v1169 = vld [vmem:[%s8 + $0x118] sm:$0xff]
  %v1170 = vld [vmem:[%s8 + $0x120] sm:$0xff]
  %v1171 = vld [vmem:[%s8 + $0x128] sm:$0xff]
  %v1172 = vld [vmem:[%s8 + $0x130] sm:$0xff]
  %v1173 = vld [vmem:[%s8 + $0x138] sm:$0xff]
  %v1174 = vld [vmem:[%s8 + $0x140] sm:$0xff]
  %v1175 = vld [vmem:[%s8 + $0x148] sm:$0xff]
  %v1176 = vld [vmem:[%s8 + $0x150] sm:$0xff]
  %v1177 = vld [vmem:[%s8 + $0x158] sm:$0xff]
  %v1178 = vld [vmem:[%s8 + $0x160] sm:$0xff]
  %v1179 = vld [vmem:[%s8 + $0x168] sm:$0xff]
  %v1180 = vld [vmem:[%s8 + $0x170] sm:$0xff]
  %v1181 = vld [vmem:[%s8 + $0x178] sm:$0xff]
  %v1182 = vld [vmem:[%s8 + $0x180] sm:$0xff]
  %v1183 = vld [vmem:[%s8 + $0x188] sm:$0xff]
  %v1184 = vld [vmem:[%s8 + $0x190] sm:$0xff]
  %v1185 = vld [vmem:[%s8 + $0x198] sm:$0xff]
  %v1186 = vld [vmem:[%s8 + $0x1a0] sm:$0xff]
  %v1187 = vld [vmem:[%s8 + $0x1a8] sm:$0xff]
  %v1188 = vld [vmem:[%s8 + $0x1b0] sm:$0xff]
  %v1189 = vld [vmem:[%s8 + $0x1b8] sm:$0xff]
  %v1190 = vld [vmem:[%s8 + $0x1c0] sm:$0xff]
  %v1191 = vld [vmem:[%s8 + $0x1c8] sm:$0xff]
  %v1192 = vld [vmem:[%s8 + $0x1d0] sm:$0xff]
  %v1193 = vld [vmem:[%s8 + $0x1d8] sm:$0xff]
  %v1194 = vld [vmem:[%s8 + $0x1e0] sm:$0xff]
  %v1195 = vld [vmem:[%s8 + $0x1e8] sm:$0xff]
  %v1196 = vld [vmem:[%s8 + $0x1f0] sm:$0xff]
  %v1197 = vld [vmem:[%s8 + $0x1f8] sm:$0xff]
  %v1198 = vld [vmem:[%s9] sm:$0x3]
  %v1200 = vlaneseq
  %v1201 = vshrl.u32 %v1200, 7
  %v1202 = vsub.s32 0, %v1201
  %v1203 = vrot.slane %v1198, %v1202
  %v1204 = vlaneseq
  %v1205 = vshrl.u32 %v1204, 7
  %v1206 = vsub.s32 1, %v1205
  %v1207 = vrot.slane %v1198, %v1206
  %v1274 = vunpack.c.l.b16 %v1134
  %v1275 = vunpack.c.h.b16 %v1134
  %v1276 = vunpack.c.l.b16 %v1135
  %v1277 = vunpack.c.h.b16 %v1135
  %v1278 = vunpack.c.l.b16 %v1136
  %v1279 = vunpack.c.h.b16 %v1136
  %v1280 = vunpack.c.l.b16 %v1137
  %v1281 = vunpack.c.h.b16 %v1137
  %v1282 = vunpack.c.l.b16 %v1138
  %v1283 = vunpack.c.h.b16 %v1138
  %v1284 = vunpack.c.l.b16 %v1139
  %v1285 = vunpack.c.h.b16 %v1139
  %v1286 = vunpack.c.l.b16 %v1140
  %v1287 = vunpack.c.h.b16 %v1140
  %v1288 = vunpack.c.l.b16 %v1141
  %v1289 = vunpack.c.h.b16 %v1141
  %v1290 = vunpack.c.l.b16 %v1142
  %v1291 = vunpack.c.h.b16 %v1142
  %v1292 = vunpack.c.l.b16 %v1143
  %v1293 = vunpack.c.h.b16 %v1143
  %v1294 = vunpack.c.l.b16 %v1144
  %v1295 = vunpack.c.h.b16 %v1144
  %v1296 = vunpack.c.l.b16 %v1145
  %v1297 = vunpack.c.h.b16 %v1145
  %v1298 = vunpack.c.l.b16 %v1146
  %v1299 = vunpack.c.h.b16 %v1146
  %v1300 = vunpack.c.l.b16 %v1147
  %v1301 = vunpack.c.h.b16 %v1147
  %v1302 = vunpack.c.l.b16 %v1148
  %v1303 = vunpack.c.h.b16 %v1148
  %v1304 = vunpack.c.l.b16 %v1149
  %v1305 = vunpack.c.h.b16 %v1149
  %v1306 = vunpack.c.l.b16 %v1150
  %v1307 = vunpack.c.h.b16 %v1150
  %v1308 = vunpack.c.l.b16 %v1151
  %v1309 = vunpack.c.h.b16 %v1151
  %v1310 = vunpack.c.l.b16 %v1152
  %v1311 = vunpack.c.h.b16 %v1152
  %v1312 = vunpack.c.l.b16 %v1153
  %v1313 = vunpack.c.h.b16 %v1153
  %v1314 = vunpack.c.l.b16 %v1154
  %v1315 = vunpack.c.h.b16 %v1154
  %v1316 = vunpack.c.l.b16 %v1155
  %v1317 = vunpack.c.h.b16 %v1155
  %v1318 = vunpack.c.l.b16 %v1156
  %v1319 = vunpack.c.h.b16 %v1156
  %v1320 = vunpack.c.l.b16 %v1157
  %v1321 = vunpack.c.h.b16 %v1157
  %v1322 = vunpack.c.l.b16 %v1158
  %v1323 = vunpack.c.h.b16 %v1158
  %v1324 = vunpack.c.l.b16 %v1159
  %v1325 = vunpack.c.h.b16 %v1159
  %v1326 = vunpack.c.l.b16 %v1160
  %v1327 = vunpack.c.h.b16 %v1160
  %v1328 = vunpack.c.l.b16 %v1161
  %v1329 = vunpack.c.h.b16 %v1161
  %v1330 = vunpack.c.l.b16 %v1162
  %v1331 = vunpack.c.h.b16 %v1162
  %v1332 = vunpack.c.l.b16 %v1163
  %v1333 = vunpack.c.h.b16 %v1163
  %v1334 = vunpack.c.l.b16 %v1164
  %v1335 = vunpack.c.h.b16 %v1164
  %v1336 = vunpack.c.l.b16 %v1165
  %v1337 = vunpack.c.h.b16 %v1165
  %v1338 = vunpack.c.l.b16 %v1166
  %v1339 = vunpack.c.h.b16 %v1166
  %v1340 = vunpack.c.l.b16 %v1167
  %v1341 = vunpack.c.h.b16 %v1167
  %v1342 = vunpack.c.l.b16 %v1168
  %v1343 = vunpack.c.h.b16 %v1168
  %v1344 = vunpack.c.l.b16 %v1169
  %v1345 = vunpack.c.h.b16 %v1169
  %v1346 = vunpack.c.l.b16 %v1170
  %v1347 = vunpack.c.h.b16 %v1170
  %v1348 = vunpack.c.l.b16 %v1171
  %v1349 = vunpack.c.h.b16 %v1171
  %v1350 = vunpack.c.l.b16 %v1172
  %v1351 = vunpack.c.h.b16 %v1172
  %v1352 = vunpack.c.l.b16 %v1173
  %v1353 = vunpack.c.h.b16 %v1173
  %v1354 = vunpack.c.l.b16 %v1174
  %v1355 = vunpack.c.h.b16 %v1174
  %v1356 = vunpack.c.l.b16 %v1175
  %v1357 = vunpack.c.h.b16 %v1175
  %v1358 = vunpack.c.l.b16 %v1176
  %v1359 = vunpack.c.h.b16 %v1176
  %v1360 = vunpack.c.l.b16 %v1177
  %v1361 = vunpack.c.h.b16 %v1177
  %v1362 = vunpack.c.l.b16 %v1178
  %v1363 = vunpack.c.h.b16 %v1178
  %v1364 = vunpack.c.l.b16 %v1179
  %v1365 = vunpack.c.h.b16 %v1179
  %v1366 = vunpack.c.l.b16 %v1180
  %v1367 = vunpack.c.h.b16 %v1180
  %v1368 = vunpack.c.l.b16 %v1181
  %v1369 = vunpack.c.h.b16 %v1181
  %v1370 = vunpack.c.l.b16 %v1182
  %v1371 = vunpack.c.h.b16 %v1182
  %v1372 = vunpack.c.l.b16 %v1183
  %v1373 = vunpack.c.h.b16 %v1183
  %v1374 = vunpack.c.l.b16 %v1184
  %v1375 = vunpack.c.h.b16 %v1184
  %v1376 = vunpack.c.l.b16 %v1185
  %v1377 = vunpack.c.h.b16 %v1185
  %v1378 = vunpack.c.l.b16 %v1186
  %v1379 = vunpack.c.h.b16 %v1186
  %v1380 = vunpack.c.l.b16 %v1187
  %v1381 = vunpack.c.h.b16 %v1187
  %v1382 = vunpack.c.l.b16 %v1188
  %v1383 = vunpack.c.h.b16 %v1188
  %v1384 = vunpack.c.l.b16 %v1189
  %v1385 = vunpack.c.h.b16 %v1189
  %v1386 = vunpack.c.l.b16 %v1190
  %v1387 = vunpack.c.h.b16 %v1190
  %v1388 = vunpack.c.l.b16 %v1191
  %v1389 = vunpack.c.h.b16 %v1191
  %v1390 = vunpack.c.l.b16 %v1192
  %v1391 = vunpack.c.h.b16 %v1192
  %v1392 = vunpack.c.l.b16 %v1193
  %v1393 = vunpack.c.h.b16 %v1193
  %v1394 = vunpack.c.l.b16 %v1194
  %v1395 = vunpack.c.h.b16 %v1194
  %v1396 = vunpack.c.l.b16 %v1195
  %v1397 = vunpack.c.h.b16 %v1195
  %v1398 = vunpack.c.l.b16 %v1196
  %v1399 = vunpack.c.h.b16 %v1196
  %v1400 = vunpack.c.l.b16 %v1197
  %v1401 = vunpack.c.h.b16 %v1197
  %v1402 = vpack.c.b16 %v1276, %v1274
  %v1403 = vpack.c.b16 %v1277, %v1275
  %v1404 = vpack.c.b16 %v1280, %v1278
  %v1405 = vpack.c.b16 %v1281, %v1279
  %v1406 = vpack.c.b16 %v1284, %v1282
  %v1407 = vpack.c.b16 %v1285, %v1283
  %v1408 = vpack.c.b16 %v1288, %v1286
  %v1409 = vpack.c.b16 %v1289, %v1287
  %v1410 = vpack.c.b16 %v1292, %v1290
  %v1411 = vpack.c.b16 %v1293, %v1291
  %v1412 = vpack.c.b16 %v1296, %v1294
  %v1413 = vpack.c.b16 %v1297, %v1295
  %v1414 = vpack.c.b16 %v1300, %v1298
  %v1415 = vpack.c.b16 %v1301, %v1299
  %v1416 = vpack.c.b16 %v1304, %v1302
  %v1417 = vpack.c.b16 %v1305, %v1303
  %v1418 = vpack.c.b16 %v1308, %v1306
  %v1419 = vpack.c.b16 %v1309, %v1307
  %v1420 = vpack.c.b16 %v1312, %v1310
  %v1421 = vpack.c.b16 %v1313, %v1311
  %v1422 = vpack.c.b16 %v1316, %v1314
  %v1423 = vpack.c.b16 %v1317, %v1315
  %v1424 = vpack.c.b16 %v1320, %v1318
  %v1425 = vpack.c.b16 %v1321, %v1319
  %v1426 = vpack.c.b16 %v1324, %v1322
  %v1427 = vpack.c.b16 %v1325, %v1323
  %v1428 = vpack.c.b16 %v1328, %v1326
  %v1429 = vpack.c.b16 %v1329, %v1327
  %v1430 = vpack.c.b16 %v1332, %v1330
  %v1431 = vpack.c.b16 %v1333, %v1331
  %v1432 = vpack.c.b16 %v1336, %v1334
  %v1433 = vpack.c.b16 %v1337, %v1335
  %v1434 = vpack.c.b16 %v1340, %v1338
  %v1435 = vpack.c.b16 %v1341, %v1339
  %v1436 = vpack.c.b16 %v1344, %v1342
  %v1437 = vpack.c.b16 %v1345, %v1343
  %v1438 = vpack.c.b16 %v1348, %v1346
  %v1439 = vpack.c.b16 %v1349, %v1347
  %v1440 = vpack.c.b16 %v1352, %v1350
  %v1441 = vpack.c.b16 %v1353, %v1351
  %v1442 = vpack.c.b16 %v1356, %v1354
  %v1443 = vpack.c.b16 %v1357, %v1355
  %v1444 = vpack.c.b16 %v1360, %v1358
  %v1445 = vpack.c.b16 %v1361, %v1359
  %v1446 = vpack.c.b16 %v1364, %v1362
  %v1447 = vpack.c.b16 %v1365, %v1363
  %v1448 = vpack.c.b16 %v1368, %v1366
  %v1449 = vpack.c.b16 %v1369, %v1367
  %v1450 = vpack.c.b16 %v1372, %v1370
  %v1451 = vpack.c.b16 %v1373, %v1371
  %v1452 = vpack.c.b16 %v1376, %v1374
  %v1453 = vpack.c.b16 %v1377, %v1375
  %v1454 = vpack.c.b16 %v1380, %v1378
  %v1455 = vpack.c.b16 %v1381, %v1379
  %v1456 = vpack.c.b16 %v1384, %v1382
  %v1457 = vpack.c.b16 %v1385, %v1383
  %v1458 = vpack.c.b16 %v1388, %v1386
  %v1459 = vpack.c.b16 %v1389, %v1387
  %v1460 = vpack.c.b16 %v1392, %v1390
  %v1461 = vpack.c.b16 %v1393, %v1391
  %v1462 = vpack.c.b16 %v1396, %v1394
  %v1463 = vpack.c.b16 %v1397, %v1395
  %v1464 = vpack.c.b16 %v1400, %v1398
  %v1465 = vpack.c.b16 %v1401, %v1399
  %1530 = vmatprep.subr.bf16.mxu0 %v1403
  %1531 = vmatpush1.bf16.msra.mxu0 %v1402
  %1532 = vmatprep.subr.bf16.mxu0 %v1405
  %1533 = vmatpush1.bf16.msra.mxu0 %v1404
  %1534 = vmatprep.subr.bf16.mxu0 %v1407
  %1535 = vmatpush1.bf16.msra.mxu0 %v1406
  %1536 = vmatprep.subr.bf16.mxu0 %v1409
  %1537 = vmatpush1.bf16.msra.mxu0 %v1408
  %1538 = vmatprep.subr.bf16.mxu0 %v1411
  %1539 = vmatpush1.bf16.msra.mxu0 %v1410
  %1540 = vmatprep.subr.bf16.mxu0 %v1413
  %1541 = vmatpush1.bf16.msra.mxu0 %v1412
  %1542 = vmatprep.subr.bf16.mxu0 %v1415
  %1543 = vmatpush1.bf16.msra.mxu0 %v1414
  %1544 = vmatprep.subr.bf16.mxu0 %v1417
  %1545 = vmatpush1.bf16.msra.mxu0 %v1416
  %1546 = vmatprep.subr.bf16.mxu0 %v1419
  %1547 = vmatpush1.bf16.msra.mxu0 %v1418
  %1548 = vmatprep.subr.bf16.mxu0 %v1421
  %1549 = vmatpush1.bf16.msra.mxu0 %v1420
  %1550 = vmatprep.subr.bf16.mxu0 %v1423
  %1551 = vmatpush1.bf16.msra.mxu0 %v1422
  %1552 = vmatprep.subr.bf16.mxu0 %v1425
  %1553 = vmatpush1.bf16.msra.mxu0 %v1424
  %1554 = vmatprep.subr.bf16.mxu0 %v1427
  %1555 = vmatpush1.bf16.msra.mxu0 %v1426
  %1556 = vmatprep.subr.bf16.mxu0 %v1429
  %1557 = vmatpush1.bf16.msra.mxu0 %v1428
  %1558 = vmatprep.subr.bf16.mxu0 %v1431
  %1559 = vmatpush1.bf16.msra.mxu0 %v1430
  %1560 = vmatprep.subr.bf16.mxu0 %v1433
  %1561 = vmatpush1.bf16.msra.mxu0 %v1432
  %1562 = vmatprep.mubr.bf16.mxu0 %v1123
  %1563 = vmatmul.mubr.bf16.gmra.mrb[0].mxu0 %v1122
  %v1564 = vpop.f32.mrb[0].mxu0
  %v1565 = vadd.f32 %v1203, %v1564
  %v1566 = vpop.f32.mrb[0].mxu0
  %v1567 = vadd.f32 %v1207, %v1566
  %v1568 = vpop.f32.mrb[0].mxu0
  %v1569 = vadd.f32 %v1203, %v1568
  %v1570 = vpop.f32.mrb[0].mxu0
  %v1571 = vadd.f32 %v1207, %v1570
  %1572 = vmatprep.mubr.bf16.mxu0 %v1127
  %1573 = vmatmul.mubr.bf16.gmra.mrb[0].mxu0 %v1126
  %v1574 = vpop.f32.mrb[0].mxu0
  %v1575 = vadd.f32 %v1203, %v1574
  %v1576 = vpop.f32.mrb[0].mxu0
  %v1577 = vadd.f32 %v1207, %v1576
  %v1578 = vpop.f32.mrb[0].mxu0
  %v1579 = vadd.f32 %v1203, %v1578
  %v1580 = vpop.f32.mrb[0].mxu0
  %v1581 = vadd.f32 %v1207, %v1580
  %1582 = vmatprep.mubr.bf16.mxu0 %v1131
  %1583 = vmatmul.mubr.bf16.gmra.mrb[0].mxu0 %v1130
  %v1584 = vpop.f32.mrb[0].mxu0
  %v1585 = vadd.f32 %v1203, %v1584
  %v1586 = vpop.f32.mrb[0].mxu0
  %v1587 = vadd.f32 %v1207, %v1586
  %v1588 = vpop.f32.mrb[0].mxu0
  %v1589 = vpop.f32.mrb[0].mxu0
  %1590 = vdwg.mxu0
  %1591 = vmatprep.subr.bf16.mxu0 %v1435
  %1592 = vmatpush1.bf16.msra.mxu0 %v1434
  %1593 = vmatprep.subr.bf16.mxu0 %v1437
  %1594 = vmatpush1.bf16.msra.mxu0 %v1436
  %1595 = vmatprep.subr.bf16.mxu0 %v1439
  %1596 = vmatpush1.bf16.msra.mxu0 %v1438
  %1597 = vmatprep.subr.bf16.mxu0 %v1441
  %1598 = vmatpush1.bf16.msra.mxu0 %v1440
  %1599 = vmatprep.subr.bf16.mxu0 %v1443
  %1600 = vmatpush1.bf16.msra.mxu0 %v1442
  %1601 = vmatprep.subr.bf16.mxu0 %v1445
  %1602 = vmatpush1.bf16.msra.mxu0 %v1444
  %1603 = vmatprep.subr.bf16.mxu0 %v1447
  %1604 = vmatpush1.bf16.msra.mxu0 %v1446
  %1605 = vmatprep.subr.bf16.mxu0 %v1449
  %1606 = vmatpush1.bf16.msra.mxu0 %v1448
  %1607 = vmatprep.subr.bf16.mxu0 %v1451
  %1608 = vmatpush1.bf16.msra.mxu0 %v1450
  %1609 = vmatprep.subr.bf16.mxu0 %v1453
  %1610 = vmatpush1.bf16.msra.mxu0 %v1452
  %1611 = vmatprep.subr.bf16.mxu0 %v1455
  %1612 = vmatpush1.bf16.msra.mxu0 %v1454
  %1613 = vmatprep.subr.bf16.mxu0 %v1457
  %1614 = vmatpush1.bf16.msra.mxu0 %v1456
  %1615 = vmatprep.subr.bf16.mxu0 %v1459
  %1616 = vmatpush1.bf16.msra.mxu0 %v1458
  %1617 = vmatprep.subr.bf16.mxu0 %v1461
  %1618 = vmatpush1.bf16.msra.mxu0 %v1460
  %1619 = vmatprep.subr.bf16.mxu0 %v1463
  %1620 = vmatpush1.bf16.msra.mxu0 %v1462
  %1621 = vmatprep.subr.bf16.mxu0 %v1465
  %1622 = vmatpush1.bf16.msra.mxu0 %v1464
  %1623 = vmatprep.mubr.bf16.mxu0 %v1125
  %1624 = vmatmul.mubr.bf16.gmra.mrb[0].mxu0 %v1124
  %v1625 = vpop.f32.mrb[0].mxu0
  %v1626 = vadd.f32 %v1565, %v1625
  %v1627 = vpop.f32.mrb[0].mxu0
  %v1628 = vadd.f32 %v1567, %v1627
  %v1629 = vpop.f32.mrb[0].mxu0
  %v1630 = vadd.f32 %v1569, %v1629
  %v1631 = vpop.f32.mrb[0].mxu0
  %v1632 = vadd.f32 %v1571, %v1631
  %1633 = vmatprep.mubr.bf16.mxu0 %v1129
  %1634 = vmatmul.mubr.bf16.gmra.mrb[0].mxu0 %v1128
  %v1635 = vpop.f32.mrb[0].mxu0
  %v1636 = vadd.f32 %v1575, %v1635
  %v1637 = vpop.f32.mrb[0].mxu0
  %v1638 = vadd.f32 %v1577, %v1637
  %v1639 = vpop.f32.mrb[0].mxu0
  %v1640 = vadd.f32 %v1579, %v1639
  %v1641 = vpop.f32.mrb[0].mxu0
  %v1642 = vadd.f32 %v1581, %v1641
  %1643 = vmatprep.mubr.bf16.mxu0 %v1133
  %1644 = vmatmul.mubr.bf16.gmra.mrb[0].mxu0 %v1132
  %v1645 = vpop.f32.mrb[0].mxu0
  %v1646 = vadd.f32 %v1585, %v1645
  %v1647 = vpop.f32.mrb[0].mxu0
  %v1648 = vadd.f32 %v1587, %v1647
  %v1649 = vpop.f32.mrb[0].mxu0
  %v1650 = vpop.f32.mrb[0].mxu0
  %1651 = vdwg.mxu0
  %v1652 = vadd.f32 %v478, %v1626
  %v1653 = vadd.f32 %v479, %v1628
  %v1654 = vadd.f32 %v480, %v1630
  %v1655 = vadd.f32 %v481, %v1632
  %v1656 = vadd.f32 %v482, %v1636
  %v1657 = vadd.f32 %v483, %v1638
  %v1658 = vadd.f32 %v484, %v1640
  %v1659 = vadd.f32 %v485, %v1642
  %v1660 = vadd.f32 %v486, %v1646
  %v1661 = vadd.f32 %v487, %v1648
  %v1662 = vadd.f32 %v1652, %v1653
  %1663 = vadd.xlane.f32.xlu0 %v1662
  %v1664 = vpop.xlane.xlu0 %1663
  %v1665 = vadd.f32 %v1654, %v1655
  %1666 = vadd.xlane.f32.xlu0 %v1665
  %v1667 = vpop.xlane.xlu0 %1666
  %v1668 = vadd.f32 %v1656, %v1657
  %1669 = vadd.xlane.f32.xlu0 %v1668
  %v1670 = vpop.xlane.xlu0 %1669
  %v1671 = vadd.f32 %v1658, %v1659
  %1672 = vadd.xlane.f32.xlu0 %v1671
  %v1673 = vpop.xlane.xlu0 %1672
  %v1674 = vsel %vm370, %v1660, 0.0
  %v1675 = vsel %vm370, %v1661, 0.0
  %v1676 = vadd.f32 %v1674, %v1675
  %1677 = vadd.xlane.f32.xlu0 %v1676
  %v1678 = vpop.xlane.xlu0 %1677
  %v1679 = vmul.f32 %v1664, %v376
  %v1680 = vmul.f32 %v1667, %v376
  %v1681 = vmul.f32 %v1670, %v376
  %v1682 = vmul.f32 %v1673, %v376
  %v1683 = vmul.f32 %v1678, %v376
  %v1684 = vsub.f32 %v1652, %v1679
  %v1685 = vsub.f32 %v1653, %v1679
  %v1686 = vsub.f32 %v1654, %v1680
  %v1687 = vsub.f32 %v1655, %v1680
  %v1688 = vsub.f32 %v1656, %v1681
  %v1689 = vsub.f32 %v1657, %v1681
  %v1690 = vsub.f32 %v1658, %v1682
  %v1691 = vsub.f32 %v1659, %v1682
  %v1692 = vsub.f32 %v1660, %v1683
  %v1693 = vsub.f32 %v1661, %v1683
  %v1694 = vmul.f32 %v1684, %v1684
  %v1695 = vmul.f32 %v1685, %v1685
  %v1696 = vmul.f32 %v1686, %v1686
  %v1697 = vmul.f32 %v1687, %v1687
  %v1698 = vmul.f32 %v1688, %v1688
  %v1699 = vmul.f32 %v1689, %v1689
  %v1700 = vmul.f32 %v1690, %v1690
  %v1701 = vmul.f32 %v1691, %v1691
  %v1702 = vmul.f32 %v1692, %v1692
  %v1703 = vmul.f32 %v1693, %v1693
  %v1704 = vadd.f32 %v1694, %v1695
  %1705 = vadd.xlane.f32.xlu0 %v1704
  %v1706 = vpop.xlane.xlu0 %1705
  %v1707 = vadd.f32 %v1696, %v1697
  %1708 = vadd.xlane.f32.xlu0 %v1707
  %v1709 = vpop.xlane.xlu0 %1708
  %v1710 = vadd.f32 %v1698, %v1699
  %1711 = vadd.xlane.f32.xlu0 %v1710
  %v1712 = vpop.xlane.xlu0 %1711
  %v1713 = vadd.f32 %v1700, %v1701
  %1714 = vadd.xlane.f32.xlu0 %v1713
  %v1715 = vpop.xlane.xlu0 %1714
  %v1716 = vsel %vm370, %v1702, 0.0
  %v1717 = vsel %vm370, %v1703, 0.0
  %v1718 = vadd.f32 %v1716, %v1717
  %1719 = vadd.xlane.f32.xlu0 %v1718
  %v1720 = vpop.xlane.xlu0 %1719
  %v1721 = vmul.f32 %v1706, %v376
  %v1722 = vmul.f32 %v1709, %v376
  %v1723 = vmul.f32 %v1712, %v376
  %v1724 = vmul.f32 %v1715, %v376
  %v1725 = vmul.f32 %v1720, %v376
  %v1726 = vadd.f32 %v1721, 1e-05
  %v1727 = vadd.f32 %v1722, 1e-05
  %v1728 = vadd.f32 %v1723, 1e-05
  %v1729 = vadd.f32 %v1724, 1e-05
  %v1730 = vadd.f32 %v1725, 1e-05
  %v1731 = vrsqrt.pop %v1726
  %v1732 = vrsqrt.pop %v1727
  %v1733 = vrsqrt.pop %v1728
  %v1734 = vrsqrt.pop %v1729
  %v1735 = vrsqrt.pop %v1730
  %v1736 = vmul.f32 %v1684, %v1731
  %v1737 = vmul.f32 %v1685, %v1731
  %v1738 = vmul.f32 %v1686, %v1732
  %v1739 = vmul.f32 %v1687, %v1732
  %v1740 = vmul.f32 %v1688, %v1733
  %v1741 = vmul.f32 %v1689, %v1733
  %v1742 = vmul.f32 %v1690, %v1734
  %v1743 = vmul.f32 %v1691, %v1734
  %v1744 = vmul.f32 %v1692, %v1735
  %v1745 = vmul.f32 %v1693, %v1735
  %v1746 = vld [vmem:[%s10] sm:$0x3]
  %v1748 = vlaneseq
  %v1749 = vshrl.u32 %v1748, 7
  %v1750 = vsub.s32 0, %v1749
  %v1751 = vrot.slane %v1746, %v1750
  %v1752 = vlaneseq
  %v1753 = vshrl.u32 %v1752, 7
  %v1754 = vsub.s32 1, %v1753
  %v1755 = vrot.slane %v1746, %v1754
  %v1758 = vmul.f32 %v1736, %v1751
  %v1759 = vmul.f32 %v1737, %v1755
  %v1760 = vmul.f32 %v1738, %v1751
  %v1761 = vmul.f32 %v1739, %v1755
  %v1762 = vmul.f32 %v1740, %v1751
  %v1763 = vmul.f32 %v1741, %v1755
  %v1764 = vmul.f32 %v1742, %v1751
  %v1765 = vmul.f32 %v1743, %v1755
  %v1766 = vmul.f32 %v1744, %v1751
  %v1767 = vmul.f32 %v1745, %v1755
  %v1768 = vld [vmem:[%s11] sm:$0x3]
  %v1770 = vlaneseq
  %v1771 = vshrl.u32 %v1770, 7
  %v1772 = vsub.s32 0, %v1771
  %v1773 = vrot.slane %v1768, %v1772
  %v1774 = vlaneseq
  %v1775 = vshrl.u32 %v1774, 7
  %v1776 = vsub.s32 1, %v1775
  %v1777 = vrot.slane %v1768, %v1776
  %v1780 = vadd.f32 %v1758, %v1773
  %v1781 = vadd.f32 %v1759, %v1777
  %v1782 = vadd.f32 %v1760, %v1773
  %v1783 = vadd.f32 %v1761, %v1777
  %v1784 = vadd.f32 %v1762, %v1773
  %v1785 = vadd.f32 %v1763, %v1777
  %v1786 = vadd.f32 %v1764, %v1773
  %v1787 = vadd.f32 %v1765, %v1777
  %v1788 = vadd.f32 %v1766, %v1773
  %v1789 = vadd.f32 %v1767, %v1777
  %1790 = vst [vmem:[%s12] sm:$0xff] %v1780
  %1791 = vst [vmem:[%s12 + $0x8] sm:$0xff] %v1781
  %1792 = vst [vmem:[%s12 + $0x10] sm:$0xff] %v1782
  %1793 = vst [vmem:[%s12 + $0x18] sm:$0xff] %v1783
  %1794 = vst [vmem:[%s12 + $0x20] sm:$0xff] %v1784
  %1795 = vst [vmem:[%s12 + $0x28] sm:$0xff] %v1785
  %1796 = vst [vmem:[%s12 + $0x30] sm:$0xff] %v1786
  %1797 = vst [vmem:[%s12 + $0x38] sm:$0xff] %v1787
  %1798 = vst [vmem:[%s12 + $0x40] sm:$0x3] %v1788
  %1799 = vst [vmem:[%s12 + $0x48] sm:$0x3] %v1789
  // Predicated region
  $region50: #{_lambda_.11} parent=0 // pred_check
    _
  $region51: #{_lambda_.11} parent=0 // pred_check_branch
    %1801 = sbr.rel (0) target = $region53
  $region52: #{_lambda_.11} parent=0 // pred_region
    _
  $region53: #{_lambda_.11} parent=0 // pred_fallthru
    _
  // Predicated region
  $region54: #{_lambda_.11} parent=0 // pred_check
    _
  $region55: #{_lambda_.11} parent=0 // pred_check_branch
    %1803 = sbr.rel (0) target = $region57
  $region56: #{_lambda_.11} parent=0 // pred_region
    _
  $region57: #{_lambda_.11} parent=0 // pred_fallthru
    _

</llo_original>
